<compile_context>
chip_gen: v6e
topology: v6e:2x2x1
jax: 0.10.0
libtpu: 0.0.40
codegen_flags: <defaults>
</compile_context>

<pallas_src>
import functools

import jax
import jax.numpy as jnp
from jax import lax
from jax.experimental import pallas as pl
from jax.experimental.pallas import tpu as pltpu


def _round_up(x, m):
    return ((x + m - 1) // m) * m


# ---------------------------------------------------------------------------
# Kernel A: conv stack + running max over the point dimension N.
# ---------------------------------------------------------------------------
def _conv_max_kernel(x_ref,
                     w1_ref, b1_ref,
                     w2_ref, b2_ref,
                     w3_ref, b3_ref,
                     pooled_ref,
                     *, n_points, tile_n, mask_tail):
    # x_ref block: (1, k, TN) f32 -> cast to bf16 in-kernel (hidden under MXU).
    x = x_ref[0].astype(jnp.bfloat16)                       # (k, TN)

    # conv1 + bn1 + relu (k -> 128, zero-padded from 64): contract the k axis of
    # the (k, TN) block directly on the MXU -> (TN, 128).  Lane-dense along N.
    h = lax.dot_general(x, w1_ref[...],
                        dimension_numbers=(((0,), (0,)), ((), ())),
                        preferred_element_type=jnp.float32)
    h = jnp.maximum(h + b1_ref[...], 0.0)

    # conv2 + bn2 + relu  (128 -> 128)
    h = jnp.dot(h.astype(jnp.bfloat16), w2_ref[...],
                preferred_element_type=jnp.float32)
    h = jnp.maximum(h + b2_ref[...], 0.0)

    # conv3 + bn3 + relu  (128 -> 512), then cast to bf16 before the reduce
    # (exact w.r.t. the downstream bf16 consumer; halves VALU/VMEM for the max).
    h = jnp.dot(h.astype(jnp.bfloat16), w3_ref[...],
                preferred_element_type=jnp.float32)
    h = jnp.maximum(h + b3_ref[...], 0.0).astype(jnp.bfloat16)   # (TN, 512)

    n = pl.program_id(1)

    if mask_tail:
        # Zero the rows past the true N (exact: all valid ReLU outputs are >= 0,
        # so including zeros cannot change the per-channel max).
        valid = n_points - n * tile_n
        row = lax.broadcasted_iota(jnp.int32, h.shape, 0)
        h = jnp.where(row < valid, h, jnp.zeros_like(h))

    tile_max = jnp.max(h, axis=0, keepdims=True)                 # (1, 512) bf16

    @pl.when(n == 0)
    def _():
        pooled_ref[0] = tile_max

    @pl.when(n > 0)
    def _():
        pooled_ref[0] = jnp.maximum(pooled_ref[0], tile_max)


# ---------------------------------------------------------------------------
# Kernel B: FC head over the whole pooled batch (M = B), lane-dense output.
# ---------------------------------------------------------------------------
def _fc_kernel(g_ref,
               wf1_ref, bf1_ref,
               wf2_ref, bf2_ref,
               wf3_ref, bf3_ref,
               o_ref):
    g = g_ref[...]                                               # (B, 512) bf16

    # fc1 + bn4 + relu  (512 -> 256)
    f = jnp.dot(g, wf1_ref[...], preferred_element_type=jnp.float32) + bf1_ref[...]
    f = jnp.maximum(f, 0.0)
    # fc2 + bn5 + relu  (256 -> 128)
    f = jnp.dot(f.astype(jnp.bfloat16), wf2_ref[...],
                preferred_element_type=jnp.float32) + bf2_ref[...]
    f = jnp.maximum(f, 0.0)
    # fc3 (identity folded into bias), output padded to a multiple of 128 lanes
    o_ref[...] = jnp.dot(f.astype(jnp.bfloat16), wf3_ref[...],
                         preferred_element_type=jnp.float32) + bf3_ref[...]


# ---------------------------------------------------------------------------
# Parameter prep: pad conv1 64->128 channels (exact), pad fc3 output columns to
# a multiple of 128 lanes (exact, sliced off later), cast weights to bf16.
# ---------------------------------------------------------------------------
def _prep_params(params, k):
    (w1, b1, w2, b2, w3, b3, wf1, bf1, wf2, bf2, wf3, bf3) = params

    pad = 128 - w1.shape[1]                      # 64 -> 128 lane-dense h1
    if pad > 0:
        w1 = jnp.pad(w1, ((0, 0), (0, pad)))
        b1 = jnp.pad(b1, ((0, 0), (0, pad)))
        w2 = jnp.pad(w2, ((0, pad), (0, 0)))     # zero rows keep h2 exact

    kk = k * k
    out_cols = _round_up(kk, 128)                # lane-dense fc3 output
    if out_cols != kk:
        wf3 = jnp.pad(wf3, ((0, 0), (0, out_cols - kk)))
        bf3 = jnp.pad(bf3, ((0, 0), (0, out_cols - kk)))

    def bf16(a):
        return a.astype(jnp.bfloat16)

    conv_params = (bf16(w1), b1, bf16(w2), b2, bf16(w3), b3)
    fc_params = (bf16(wf1), bf1, bf16(wf2), bf2, bf16(wf3), bf3)
    return conv_params, fc_params, out_cols


def stnkd_forward(x_bkn, params, k, tn=1024):
    """x_bkn: (B, k, N) float32 (native PyTorch Conv1d layout). Returns (B, k, k).

    tn: N tile size, multiple of 256.  1024-2048 keeps the grid-step overhead
    amortized while fitting VMEM scoped defaults on v5e/v6e/v7x; budget against
    v7x's 64 MiB physical VMEM before pushing past 2048.
    """
    B, kk, N = x_bkn.shape
    assert kk == k
    assert tn % 256 == 0
    tn = min(tn, _round_up(N, 256))              # never much larger than N
    n_tiles = pl.cdiv(N, tn)                     # masked tail handles N % tn != 0
    mask_tail = (N % tn) != 0

    conv_params, fc_params, out_cols = _prep_params(params, k)

    def _w_spec(a):
        return pl.BlockSpec(a.shape, lambda b, n: (0, 0))

    kernel_a = functools.partial(_conv_max_kernel,
                                 n_points=N, tile_n=tn, mask_tail=mask_tail)

    # ---- Kernel A: conv stack + max over N ------------------------------------
    pooled = pl.pallas_call(
        kernel_a,
        out_shape=jax.ShapeDtypeStruct((B, 1, 512), jnp.bfloat16),
        grid_spec=pltpu.PrefetchScalarGridSpec(
            num_scalar_prefetch=0,
            grid=(B, n_tiles),                   # reduction axis (N tiles) last
            in_specs=[pl.BlockSpec((1, k, tn), lambda b, n: (b, 0, n))]
                     + [_w_spec(a) for a in conv_params],
            out_specs=pl.BlockSpec((1, 1, 512), lambda b, n: (b, 0, 0)),
        ),
        compiler_params=pltpu.CompilerParams(
            dimension_semantics=("parallel", "arbitrary")),
    )(x_bkn, *conv_params)

    g = pooled.reshape(B, 512)                   # bf16, tiny reshape between calls

    # ---- Kernel B: FC head at M = B (whole arrays in VMEM, no grid) -----------
    out_pad = pl.pallas_call(
        _fc_kernel,
        out_shape=jax.ShapeDtypeStruct((B, out_cols), jnp.float32),
        in_specs=[pl.BlockSpec(memory_space=pltpu.MemorySpace.VMEM)] * 7,
        out_specs=pl.BlockSpec(memory_space=pltpu.MemorySpace.VMEM),
    )(g, *fc_params)

    out = out_pad[:, :k * k]
    return out.reshape(B, k, k)


# ---------------------------------------------------------------------------
# BN folding + synthetic parameters (eval-mode BatchNorm).
# ---------------------------------------------------------------------------
def _fold_bn(w, b, gamma, beta, mean, var, eps=1e-5):
    """Fold eval-mode BatchNorm into a matmul weight (Cin, Cout) + bias (1, Cout)."""
    s = gamma / jnp.sqrt(var + eps)
    w_f = w * s[None, :]
    b_f = (b - mean) * s + beta
    return w_f, b_f.reshape(1, -1)


def make_params(key, k):
    """Deterministic synthetic parameters matching STNkd(k) shapes (BN folded)."""
    dims_conv = [(k, 64), (64, 128), (128, 512)]
    dims_fc = [(512, 256), (256, 128), (128, k * k)]
    keys = jax.random.split(key, 32)
    ki = iter(range(32))

    def lin(cin, cout):
        w = 0.1 * jax.random.normal(keys[next(ki)], (cin, cout), jnp.float32)
        b = 0.1 * jax.random.normal(keys[next(ki)], (cout,), jnp.float32)
        return w, b

    def bn(c):
        gamma = 1.0 + 0.1 * jax.random.normal(keys[next(ki)], (c,), jnp.float32)
        beta = 0.1 * jax.random.normal(keys[next(ki)], (c,), jnp.float32)
        mean = 0.1 * jax.random.normal(keys[next(ki)], (c,), jnp.float32)
        var = jax.random.uniform(keys[next(ki)], (c,), jnp.float32, 0.5, 1.5)
        return gamma, beta, mean, var

    folded = []
    for cin, cout in dims_conv:               # conv1/bn1, conv2/bn2, conv3/bn3
        w, b = lin(cin, cout)
        folded.extend(_fold_bn(w, b, *bn(cout)))
    for cin, cout in dims_fc[:2]:             # fc1/bn4, fc2/bn5
        w, b = lin(cin, cout)
        folded.extend(_fold_bn(w, b, *bn(cout)))
    w, b = lin(*dims_fc[2])                   # fc3 (+ flattened identity in bias)
    eye_flat = jnp.eye(k, dtype=jnp.float32).reshape(-1)
    folded.extend([w, (b + eye_flat).reshape(1, -1)])
    return tuple(folded)


def stnkd_reference(x_bkn, params):
    """Pure-JAX f32 reference of the same (BN-folded) math, for verification."""
    (w1, b1, w2, b2, w3, b3, wf1, bf1, wf2, bf2, wf3, bf3) = params
    x = jnp.transpose(x_bkn, (0, 2, 1)).astype(jnp.float32)   # (B, N, k)
    h = jax.nn.relu(x @ w1 + b1)
    h = jax.nn.relu(h @ w2 + b2)
    h = jax.nn.relu(h @ w3 + b3)
    g = jnp.max(h, axis=1)                                    # (B, 512)
    f = jax.nn.relu(g @ wf1 + bf1[0])
    f = jax.nn.relu(f @ wf2 + bf2[0])
    out = f @ wf3 + bf3[0]
    B = x.shape[0]
    k = w1.shape[0]
    return out.reshape(B, k, k)


if __name__ == "__main__":
    # Small shapes: batch=4, k=16 channels, 1280 points with tn=512
    # -> 3 N-tiles with a masked 256-row tail (exercises cdiv + mask path).
    B, K, N = 4, 16, 1280
    key = jax.random.PRNGKey(0)
    kx, kp = jax.random.split(key)
    x = jax.random.normal(kx, (B, K, N), jnp.float32)   # PyTorch Conv1d layout (B, k, N)
    params = make_params(kp, K)

    fwd = jax.jit(functools.partial(stnkd_forward, k=K, tn=512))
    y = fwd(x, params)
    jax.block_until_ready(y)

    y_ref = stnkd_reference(x, params)
    assert y.shape == (B, K, K)
    # bf16 matmuls -> looser tolerance than the f32 reference.
    assert jnp.allclose(y, y_ref, atol=5e-2, rtol=5e-2), (
        f"mismatch vs reference, max abs err={jnp.max(jnp.abs(y - y_ref))}")

    print("KERNEL_OK")
</pallas_src>

<mosaic_0001>
module attributes {stable_mosaic.version = 11 : i64} {
  func.func @_conv_max_kernel(%arg0: i32, %arg1: i32, %arg2: memref<1x16x512xf32, #tpu.memory_space<vmem>>, %arg3: memref<16x128xbf16, #tpu.memory_space<vmem>>, %arg4: memref<1x128xf32, #tpu.memory_space<vmem>>, %arg5: memref<128x128xbf16, #tpu.memory_space<vmem>>, %arg6: memref<1x128xf32, #tpu.memory_space<vmem>>, %arg7: memref<128x512xbf16, #tpu.memory_space<vmem>>, %arg8: memref<1x512xf32, #tpu.memory_space<vmem>>, %arg9: memref<1x1x512xbf16, #tpu.memory_space<vmem>>) attributes {dimension_semantics = [#tpu.dimension_semantics<parallel>, #tpu.dimension_semantics<arbitrary>], iteration_bounds = array<i64: 4, 3>, scalar_prefetch = 0 : i64, scratch_operands = 0 : i64, tpu.core_type = #tpu.core_type<tc>, window_params = [{transform_indices = @transform_0, window_bounds = array<i64: 1, 16, 512>}, {pipeline_mode = #tpu.pipeline_mode<synchronous>, transform_indices = @transform_1, window_bounds = array<i64: 16, 128>}, {pipeline_mode = #tpu.pipeline_mode<synchronous>, transform_indices = @transform_2, window_bounds = array<i64: 1, 128>}, {pipeline_mode = #tpu.pipeline_mode<synchronous>, transform_indices = @transform_3, window_bounds = array<i64: 128, 128>}, {pipeline_mode = #tpu.pipeline_mode<synchronous>, transform_indices = @transform_4, window_bounds = array<i64: 1, 128>}, {pipeline_mode = #tpu.pipeline_mode<synchronous>, transform_indices = @transform_5, window_bounds = array<i64: 128, 512>}, {pipeline_mode = #tpu.pipeline_mode<synchronous>, transform_indices = @transform_6, window_bounds = array<i64: 1, 512>}, {transform_indices = @transform_7, window_bounds = array<i64: 1, 1, 512>}]} {
    %c0 = arith.constant 0 : index
    %c0_0 = arith.constant 0 : index
    %c0_1 = arith.constant 0 : index
    %0 = vector.load %arg2[%c0, %c0_0, %c0_1] : memref<1x16x512xf32, #tpu.memory_space<vmem>>, vector<1x16x512xf32>
    %1 = vector.shape_cast %0 : vector<1x16x512xf32> to vector<16x512xf32>
    %2 = arith.truncf %1 : vector<16x512xf32> to vector<16x512xbf16>
    %c0_2 = arith.constant 0 : index
    %c0_3 = arith.constant 0 : index
    %3 = vector.load %arg3[%c0_2, %c0_3] : memref<16x128xbf16, #tpu.memory_space<vmem>>, vector<16x128xbf16>
    %cst = arith.constant dense<0.000000e+00> : vector<512x128xf32>
    %4 = tpu.matmul %2, %3, %cst {dimension_numbers = #tpu.dot_dimension_numbers<[0], [0], [1], [1], [0, 1, 1, 1], [], []>} : vector<16x512xbf16>, vector<16x128xbf16>, vector<512x128xf32> -> vector<512x128xf32>
    %c0_4 = arith.constant 0 : index
    %c0_5 = arith.constant 0 : index
    %5 = vector.load %arg4[%c0_4, %c0_5] : memref<1x128xf32, #tpu.memory_space<vmem>>, vector<1x128xf32>
    %6 = vector.broadcast %5 : vector<1x128xf32> to vector<512x128xf32>
    %7 = arith.addf %4, %6 : vector<512x128xf32>
    %cst_6 = arith.constant 0.000000e+00 : f32
    %8 = vector.broadcast %cst_6 : f32 to vector<512x128xf32>
    %9 = arith.maximumf %7, %8 : vector<512x128xf32>
    %10 = arith.truncf %9 : vector<512x128xf32> to vector<512x128xbf16>
    %c0_7 = arith.constant 0 : index
    %c0_8 = arith.constant 0 : index
    %11 = vector.load %arg5[%c0_7, %c0_8] : memref<128x128xbf16, #tpu.memory_space<vmem>>, vector<128x128xbf16>
    %cst_9 = arith.constant dense<0.000000e+00> : vector<512x128xf32>
    %12 = tpu.matmul %10, %11, %cst_9 {dimension_numbers = #tpu.dot_dimension_numbers<[1], [0], [0], [1], [0, 0, 1, 1], [], []>} : vector<512x128xbf16>, vector<128x128xbf16>, vector<512x128xf32> -> vector<512x128xf32>
    %c0_10 = arith.constant 0 : index
    %c0_11 = arith.constant 0 : index
    %13 = vector.load %arg6[%c0_10, %c0_11] : memref<1x128xf32, #tpu.memory_space<vmem>>, vector<1x128xf32>
    %14 = vector.broadcast %13 : vector<1x128xf32> to vector<512x128xf32>
    %15 = arith.addf %12, %14 : vector<512x128xf32>
    %cst_12 = arith.constant 0.000000e+00 : f32
    %16 = vector.broadcast %cst_12 : f32 to vector<512x128xf32>
    %17 = arith.maximumf %15, %16 : vector<512x128xf32>
    %18 = arith.truncf %17 : vector<512x128xf32> to vector<512x128xbf16>
    %c0_13 = arith.constant 0 : index
    %c0_14 = arith.constant 0 : index
    %19 = vector.load %arg7[%c0_13, %c0_14] : memref<128x512xbf16, #tpu.memory_space<vmem>>, vector<128x512xbf16>
    %cst_15 = arith.constant dense<0.000000e+00> : vector<512x512xf32>
    %20 = tpu.matmul %18, %19, %cst_15 {dimension_numbers = #tpu.dot_dimension_numbers<[1], [0], [0], [1], [0, 0, 1, 1], [], []>} : vector<512x128xbf16>, vector<128x512xbf16>, vector<512x512xf32> -> vector<512x512xf32>
    %c0_16 = arith.constant 0 : index
    %c0_17 = arith.constant 0 : index
    %21 = vector.load %arg8[%c0_16, %c0_17] : memref<1x512xf32, #tpu.memory_space<vmem>>, vector<1x512xf32>
    %22 = vector.broadcast %21 : vector<1x512xf32> to vector<512x512xf32>
    %23 = arith.addf %20, %22 : vector<512x512xf32>
    %cst_18 = arith.constant 0.000000e+00 : f32
    %24 = vector.broadcast %cst_18 : f32 to vector<512x512xf32>
    %25 = arith.maximumf %23, %24 : vector<512x512xf32>
    %26 = arith.truncf %25 : vector<512x512xf32> to vector<512x512xbf16>
    %c512_i32 = arith.constant 512 : i32
    %27 = arith.muli %arg1, %c512_i32 : i32
    %c1280_i32 = arith.constant 1280 : i32
    %28 = arith.subi %c1280_i32, %27 : i32
    %29 = tpu.iota {dimensions = array<i32: 0>} : vector<512x512xi32>
    %30 = vector.broadcast %28 : i32 to vector<512x512xi32>
    %31 = arith.cmpi slt, %29, %30 : vector<512x512xi32>
    %cst_19 = arith.constant 0.000000e+00 : bf16
    %32 = vector.broadcast %cst_19 : bf16 to vector<512x512xbf16>
    %33 = arith.select %31, %26, %32 : vector<512x512xi1>, vector<512x512xbf16>
    %cst_20 = arith.constant dense<0xFF80> : vector<512xbf16>
    %34 = vector.multi_reduction <maximumf>, %33, %cst_20 [0] : vector<512x512xbf16> to vector<512xbf16>
    %35 = vector.shape_cast %34 : vector<512xbf16> to vector<1x512xbf16>
    %c0_i32 = arith.constant 0 : i32
    %36 = arith.cmpi eq, %arg1, %c0_i32 : i32
    %37 = arith.extui %36 : i1 to i32
    %c0_i32_21 = arith.constant 0 : i32
    %38 = arith.cmpi ne, %37, %c0_i32_21 : i32
    scf.if %38 {
      %c0_24 = arith.constant 0 : index
      %c0_25 = arith.constant 0 : index
      %c0_26 = arith.constant 0 : index
      %42 = vector.load %arg9[%c0_24, %c0_25, %c0_26] : memref<1x1x512xbf16, #tpu.memory_space<vmem>>, vector<1x1x512xbf16>
      %43 = vector.shape_cast %42 : vector<1x1x512xbf16> to vector<1x512xbf16>
      %44 = vector.shape_cast %35 : vector<1x512xbf16> to vector<1x1x512xbf16>
      tpu.vector_store %arg9[%c0_24, %c0_25, %c0_26], %44 {strides = array<i32>} : memref<1x1x512xbf16, #tpu.memory_space<vmem>>, vector<1x1x512xbf16>,
    } else {
    }
    %c0_i32_22 = arith.constant 0 : i32
    %39 = arith.cmpi sgt, %arg1, %c0_i32_22 : i32
    %40 = arith.extui %39 : i1 to i32
    %c0_i32_23 = arith.constant 0 : i32
    %41 = arith.cmpi ne, %40, %c0_i32_23 : i32
    scf.if %41 {
      %c0_24 = arith.constant 0 : index
      %c0_25 = arith.constant 0 : index
      %c0_26 = arith.constant 0 : index
      %42 = vector.load %arg9[%c0_24, %c0_25, %c0_26] : memref<1x1x512xbf16, #tpu.memory_space<vmem>>, vector<1x1x512xbf16>
      %43 = vector.shape_cast %42 : vector<1x1x512xbf16> to vector<1x512xbf16>
      %44 = arith.maximumf %43, %35 : vector<1x512xbf16>
      %c0_27 = arith.constant 0 : index
      %c0_28 = arith.constant 0 : index
      %c0_29 = arith.constant 0 : index
      %45 = vector.load %arg9[%c0_27, %c0_28, %c0_29] : memref<1x1x512xbf16, #tpu.memory_space<vmem>>, vector<1x1x512xbf16>
      %46 = vector.shape_cast %45 : vector<1x1x512xbf16> to vector<1x512xbf16>
      %47 = vector.shape_cast %44 : vector<1x512xbf16> to vector<1x1x512xbf16>
      tpu.vector_store %arg9[%c0_27, %c0_28, %c0_29], %47 {strides = array<i32>} : memref<1x1x512xbf16, #tpu.memory_space<vmem>>, vector<1x1x512xbf16>,
    } else {
    }
    return
  }
  func.func @transform_0(%arg0: i32, %arg1: i32) -> (i32, i32, i32) {
    %c0_i32 = arith.constant 0 : i32
    %c0_i32_0 = arith.constant 0 : i32
    return %arg0, %c0_i32, %arg1 : i32, i32, i32
  }
  func.func @transform_1(%arg0: i32, %arg1: i32) -> (i32, i32) {
    %c0_i32 = arith.constant 0 : i32
    %c0_i32_0 = arith.constant 0 : i32
    %c0_i32_1 = arith.constant 0 : i32
    return %c0_i32, %c0_i32_0 : i32, i32
  }
  func.func @transform_2(%arg0: i32, %arg1: i32) -> (i32, i32) {
    %c0_i32 = arith.constant 0 : i32
    %c0_i32_0 = arith.constant 0 : i32
    %c0_i32_1 = arith.constant 0 : i32
    return %c0_i32, %c0_i32_0 : i32, i32
  }
  func.func @transform_3(%arg0: i32, %arg1: i32) -> (i32, i32) {
    %c0_i32 = arith.constant 0 : i32
    %c0_i32_0 = arith.constant 0 : i32
    %c0_i32_1 = arith.constant 0 : i32
    return %c0_i32, %c0_i32_0 : i32, i32
  }
  func.func @transform_4(%arg0: i32, %arg1: i32) -> (i32, i32) {
    %c0_i32 = arith.constant 0 : i32
    %c0_i32_0 = arith.constant 0 : i32
    %c0_i32_1 = arith.constant 0 : i32
    return %c0_i32, %c0_i32_0 : i32, i32
  }
  func.func @transform_5(%arg0: i32, %arg1: i32) -> (i32, i32) {
    %c0_i32 = arith.constant 0 : i32
    %c0_i32_0 = arith.constant 0 : i32
    %c0_i32_1 = arith.constant 0 : i32
    return %c0_i32, %c0_i32_0 : i32, i32
  }
  func.func @transform_6(%arg0: i32, %arg1: i32) -> (i32, i32) {
    %c0_i32 = arith.constant 0 : i32
    %c0_i32_0 = arith.constant 0 : i32
    %c0_i32_1 = arith.constant 0 : i32
    return %c0_i32, %c0_i32_0 : i32, i32
  }
  func.func @transform_7(%arg0: i32, %arg1: i32) -> (i32, i32, i32) {
    %c0_i32 = arith.constant 0 : i32
    %c0_i32_0 = arith.constant 0 : i32
    %c0_i32_1 = arith.constant 0 : i32
    return %arg0, %c0_i32, %c0_i32_0 : i32, i32, i32
  }
}

module attributes {stable_mosaic.version = 11 : i64} {
  func.func @_fc_kernel(%arg0: memref<4x512xbf16, #tpu.memory_space<vmem>>, %arg1: memref<512x256xbf16, #tpu.memory_space<vmem>>, %arg2: memref<1x256xf32, #tpu.memory_space<vmem>>, %arg3: memref<256x128xbf16, #tpu.memory_space<vmem>>, %arg4: memref<1x128xf32, #tpu.memory_space<vmem>>, %arg5: memref<128x256xbf16, #tpu.memory_space<vmem>>, %arg6: memref<1x256xf32, #tpu.memory_space<vmem>>, %arg7: memref<4x256xf32, #tpu.memory_space<vmem>>) attributes {dimension_semantics = [], scalar_prefetch = 0 : i64, scratch_operands = 0 : i64, tpu.core_type = #tpu.core_type<tc>} {
    %c0 = arith.constant 0 : index
    %c0_0 = arith.constant 0 : index
    %0 = vector.load %arg0[%c0, %c0_0] : memref<4x512xbf16, #tpu.memory_space<vmem>>, vector<4x512xbf16>
    %c0_1 = arith.constant 0 : index
    %c0_2 = arith.constant 0 : index
    %1 = vector.load %arg1[%c0_1, %c0_2] : memref<512x256xbf16, #tpu.memory_space<vmem>>, vector<512x256xbf16>
    %cst = arith.constant dense<0.000000e+00> : vector<4x256xf32>
    %2 = tpu.matmul %0, %1, %cst {dimension_numbers = #tpu.dot_dimension_numbers<[1], [0], [0], [1], [0, 0, 1, 1], [], []>} : vector<4x512xbf16>, vector<512x256xbf16>, vector<4x256xf32> -> vector<4x256xf32>
    %c0_3 = arith.constant 0 : index
    %c0_4 = arith.constant 0 : index
    %3 = vector.load %arg2[%c0_3, %c0_4] : memref<1x256xf32, #tpu.memory_space<vmem>>, vector<1x256xf32>
    %4 = vector.broadcast %3 : vector<1x256xf32> to vector<4x256xf32>
    %5 = arith.addf %2, %4 : vector<4x256xf32>
    %cst_5 = arith.constant 0.000000e+00 : f32
    %6 = vector.broadcast %cst_5 : f32 to vector<4x256xf32>
    %7 = arith.maximumf %5, %6 : vector<4x256xf32>
    %8 = arith.truncf %7 : vector<4x256xf32> to vector<4x256xbf16>
    %c0_6 = arith.constant 0 : index
    %c0_7 = arith.constant 0 : index
    %9 = vector.load %arg3[%c0_6, %c0_7] : memref<256x128xbf16, #tpu.memory_space<vmem>>, vector<256x128xbf16>
    %cst_8 = arith.constant dense<0.000000e+00> : vector<4x128xf32>
    %10 = tpu.matmul %8, %9, %cst_8 {dimension_numbers = #tpu.dot_dimension_numbers<[1], [0], [0], [1], [0, 0, 1, 1], [], []>} : vector<4x256xbf16>, vector<256x128xbf16>, vector<4x128xf32> -> vector<4x128xf32>
    %c0_9 = arith.constant 0 : index
    %c0_10 = arith.constant 0 : index
    %11 = vector.load %arg4[%c0_9, %c0_10] : memref<1x128xf32, #tpu.memory_space<vmem>>, vector<1x128xf32>
    %12 = vector.broadcast %11 : vector<1x128xf32> to vector<4x128xf32>
    %13 = arith.addf %10, %12 : vector<4x128xf32>
    %cst_11 = arith.constant 0.000000e+00 : f32
    %14 = vector.broadcast %cst_11 : f32 to vector<4x128xf32>
    %15 = arith.maximumf %13, %14 : vector<4x128xf32>
    %16 = arith.truncf %15 : vector<4x128xf32> to vector<4x128xbf16>
    %c0_12 = arith.constant 0 : index
    %c0_13 = arith.constant 0 : index
    %17 = vector.load %arg5[%c0_12, %c0_13] : memref<128x256xbf16, #tpu.memory_space<vmem>>, vector<128x256xbf16>
    %cst_14 = arith.constant dense<0.000000e+00> : vector<4x256xf32>
    %18 = tpu.matmul %16, %17, %cst_14 {dimension_numbers = #tpu.dot_dimension_numbers<[1], [0], [0], [1], [0, 0, 1, 1], [], []>} : vector<4x128xbf16>, vector<128x256xbf16>, vector<4x256xf32> -> vector<4x256xf32>
    %c0_15 = arith.constant 0 : index
    %c0_16 = arith.constant 0 : index
    %19 = vector.load %arg6[%c0_15, %c0_16] : memref<1x256xf32, #tpu.memory_space<vmem>>, vector<1x256xf32>
    %20 = vector.broadcast %19 : vector<1x256xf32> to vector<4x256xf32>
    %21 = arith.addf %18, %20 : vector<4x256xf32>
    %c0_17 = arith.constant 0 : index
    %c0_18 = arith.constant 0 : index
    %22 = vector.load %arg7[%c0_17, %c0_18] : memref<4x256xf32, #tpu.memory_space<vmem>>, vector<4x256xf32>
    tpu.vector_store %arg7[%c0_17, %c0_18], %21 {strides = array<i32>} : memref<4x256xf32, #tpu.memory_space<vmem>>, vector<4x256xf32>,
    return
  }
}

</mosaic_0001>

<llo_original>
// kernel: stnkd_forward.3
$region0: #{stnkd_forward.3}
  #allocation0 [shape = 'u32[]', space=smem, size = 0x4, offset = 0x4, fixed_abs, tag = 'smem constant byte address 0x4 - core index']
  #allocation1 [shape = 'u32[144,128]{1,0:T(1,128)}', space=vmem, size = 0x12000, scoped, tag = 'internal scratch']
  %s0 = inlined_call_operand.vmem [shape: bf16[4,512], index: 0, kind: input, shape index: {}]
  %s1 = inlined_call_operand.vmem [shape: bf16[512,256], index: 1, kind: input, shape index: {}]
  %s2 = inlined_call_operand.vmem [shape: f32[1,256], index: 2, kind: input, shape index: {}]
  %s3 = inlined_call_operand.vmem [shape: bf16[256,128], index: 3, kind: input, shape index: {}]
  %s4 = inlined_call_operand.vmem [shape: f32[1,128], index: 4, kind: input, shape index: {}]
  %s5 = inlined_call_operand.vmem [shape: bf16[128,256], index: 5, kind: input, shape index: {}]
  %s6 = inlined_call_operand.vmem [shape: f32[1,256], index: 6, kind: input, shape index: {}]
  %s7 = inlined_call_operand.vmem [shape: f32[4,256], index: 7, kind: output, shape index: {}]
  %s8 = sld [smem:[#allocation0]]
  $region38: #{stnkd_forward.3} parent=0
    _
  %s10 = ssub.s32 1, %s8
  %s11 = scalar_select 0, %s10, %s8
  // Predicated region
  $region2: #{stnkd_forward.3} parent=0 // pred_check
    _
  $region3: #{stnkd_forward.3} parent=0 // pred_check_branch
    %13 = sbr.rel (0) target = $region5
  $region4: #{stnkd_forward.3} parent=0 // pred_region
    _
  $region5: #{stnkd_forward.3} parent=0 // pred_fallthru
    _
  // Predicated region
  $region6: #{stnkd_forward.3} parent=0 // pred_check
    _
  $region7: #{stnkd_forward.3} parent=0 // pred_check_branch
    %15 = sbr.rel (0) target = $region9
  $region8: #{stnkd_forward.3} parent=0 // pred_region
    _
  $region9: #{stnkd_forward.3} parent=0 // pred_fallthru
    _
  // Predicated region
  $region10: #{stnkd_forward.3} parent=0 // pred_check
    _
  $region11: #{stnkd_forward.3} parent=0 // pred_check_branch
    %17 = sbr.rel (0) target = $region13
  $region12: #{stnkd_forward.3} parent=0 // pred_region
    _
  $region13: #{stnkd_forward.3} parent=0 // pred_fallthru
    _
  // Predicated region
  $region14: #{stnkd_forward.3} parent=0 // pred_check
    _
  $region15: #{stnkd_forward.3} parent=0 // pred_check_branch
    %19 = sbr.rel (0) target = $region17
  $region16: #{stnkd_forward.3} parent=0 // pred_region
    _
  $region17: #{stnkd_forward.3} parent=0 // pred_fallthru
    _
  // Predicated region
  $region18: #{stnkd_forward.3} parent=0 // pred_check
    _
  $region19: #{stnkd_forward.3} parent=0 // pred_check_branch
    %21 = sbr.rel (0) target = $region21
  $region20: #{stnkd_forward.3} parent=0 // pred_region
    _
  $region21: #{stnkd_forward.3} parent=0 // pred_fallthru
    _
  // Predicated region
  $region22: #{stnkd_forward.3} parent=0 // pred_check
    _
  $region23: #{stnkd_forward.3} parent=0 // pred_check_branch
    %23 = sbr.rel (0) target = $region25
  $region24: #{stnkd_forward.3} parent=0 // pred_region
    _
  $region25: #{stnkd_forward.3} parent=0 // pred_fallthru
    _
  // Predicated region
  $region26: #{stnkd_forward.3} parent=0 // pred_check
    _
  $region27: #{stnkd_forward.3} parent=0 // pred_check_branch
    %25 = sbr.rel (0) target = $region29
  $region28: #{stnkd_forward.3} parent=0 // pred_region
    _
  $region29: #{stnkd_forward.3} parent=0 // pred_fallthru
    _
  %v27 = vld [vmem:[%s0] sm:$0xff]
  %v28 = vld [vmem:[%s1] sm:$0xff]
  %v29 = vld [vmem:[%s1 + $0x8] sm:$0xff]
  %v30 = vld [vmem:[%s1 + $0x10] sm:$0xff]
  %v31 = vld [vmem:[%s1 + $0x18] sm:$0xff]
  %v32 = vld [vmem:[%s1 + $0x20] sm:$0xff]
  %v33 = vld [vmem:[%s1 + $0x28] sm:$0xff]
  %v34 = vld [vmem:[%s1 + $0x30] sm:$0xff]
  %v35 = vld [vmem:[%s1 + $0x38] sm:$0xff]
  %v36 = vld [vmem:[%s1 + $0x40] sm:$0xff]
  %v37 = vld [vmem:[%s1 + $0x48] sm:$0xff]
  %v38 = vld [vmem:[%s1 + $0x50] sm:$0xff]
  %v39 = vld [vmem:[%s1 + $0x58] sm:$0xff]
  %v40 = vld [vmem:[%s1 + $0x60] sm:$0xff]
  %v41 = vld [vmem:[%s1 + $0x68] sm:$0xff]
  %v42 = vld [vmem:[%s1 + $0x70] sm:$0xff]
  %v43 = vld [vmem:[%s1 + $0x78] sm:$0xff]
  %v44 = vld [vmem:[%s1 + $0x80] sm:$0xff]
  %v45 = vld [vmem:[%s1 + $0x88] sm:$0xff]
  %v46 = vld [vmem:[%s1 + $0x90] sm:$0xff]
  %v47 = vld [vmem:[%s1 + $0x98] sm:$0xff]
  %v48 = vld [vmem:[%s1 + $0xa0] sm:$0xff]
  %v49 = vld [vmem:[%s1 + $0xa8] sm:$0xff]
  %v50 = vld [vmem:[%s1 + $0xb0] sm:$0xff]
  %v51 = vld [vmem:[%s1 + $0xb8] sm:$0xff]
  %v52 = vld [vmem:[%s1 + $0xc0] sm:$0xff]
  %v53 = vld [vmem:[%s1 + $0xc8] sm:$0xff]
  %v54 = vld [vmem:[%s1 + $0xd0] sm:$0xff]
  %v55 = vld [vmem:[%s1 + $0xd8] sm:$0xff]
  %v56 = vld [vmem:[%s1 + $0xe0] sm:$0xff]
  %v57 = vld [vmem:[%s1 + $0xe8] sm:$0xff]
  %v58 = vld [vmem:[%s1 + $0xf0] sm:$0xff]
  %v59 = vld [vmem:[%s1 + $0xf8] sm:$0xff]
  %v60 = vld [vmem:[%s1 + $0x100] sm:$0xff]
  %v61 = vld [vmem:[%s1 + $0x108] sm:$0xff]
  %v62 = vld [vmem:[%s1 + $0x110] sm:$0xff]
  %v63 = vld [vmem:[%s1 + $0x118] sm:$0xff]
  %v64 = vld [vmem:[%s1 + $0x120] sm:$0xff]
  %v65 = vld [vmem:[%s1 + $0x128] sm:$0xff]
  %v66 = vld [vmem:[%s1 + $0x130] sm:$0xff]
  %v67 = vld [vmem:[%s1 + $0x138] sm:$0xff]
  %v68 = vld [vmem:[%s1 + $0x140] sm:$0xff]
  %v69 = vld [vmem:[%s1 + $0x148] sm:$0xff]
  %v70 = vld [vmem:[%s1 + $0x150] sm:$0xff]
  %v71 = vld [vmem:[%s1 + $0x158] sm:$0xff]
  %v72 = vld [vmem:[%s1 + $0x160] sm:$0xff]
  %v73 = vld [vmem:[%s1 + $0x168] sm:$0xff]
  %v74 = vld [vmem:[%s1 + $0x170] sm:$0xff]
  %v75 = vld [vmem:[%s1 + $0x178] sm:$0xff]
  %v76 = vld [vmem:[%s1 + $0x180] sm:$0xff]
  %v77 = vld [vmem:[%s1 + $0x188] sm:$0xff]
  %v78 = vld [vmem:[%s1 + $0x190] sm:$0xff]
  %v79 = vld [vmem:[%s1 + $0x198] sm:$0xff]
  %v80 = vld [vmem:[%s1 + $0x1a0] sm:$0xff]
  %v81 = vld [vmem:[%s1 + $0x1a8] sm:$0xff]
  %v82 = vld [vmem:[%s1 + $0x1b0] sm:$0xff]
  %v83 = vld [vmem:[%s1 + $0x1b8] sm:$0xff]
  %v84 = vld [vmem:[%s1 + $0x1c0] sm:$0xff]
  %v85 = vld [vmem:[%s1 + $0x1c8] sm:$0xff]
  %v86 = vld [vmem:[%s1 + $0x1d0] sm:$0xff]
  %v87 = vld [vmem:[%s1 + $0x1d8] sm:$0xff]
  %v88 = vld [vmem:[%s1 + $0x1e0] sm:$0xff]
  %v89 = vld [vmem:[%s1 + $0x1e8] sm:$0xff]
  %v90 = vld [vmem:[%s1 + $0x1f0] sm:$0xff]
  %v91 = vld [vmem:[%s1 + $0x1f8] sm:$0xff]
  %v92 = vld [vmem:[%s2] sm:$0x3]
  %v94 = vlaneseq
  %v95 = vshrl.u32 %v94, 7
  %v96 = vsub.s32 0, %v95
  %v97 = vrot.slane %v92, %v96
  %v98 = vlaneseq
  %v99 = vshrl.u32 %v98, 7
  %v100 = vsub.s32 1, %v99
  %v101 = vrot.slane %v92, %v100
  %v105 = vcombine.high %v27, %v27
  %v107 = vunpack.c.l.s4 1983009808
  %v108 = vunpack.c.0.s8 %v107
  %v109 = vlaneseq
  %v110 = vshrl.u32 %v109, 7
  %v111 = vsub.s32 %v108, %v110
  %v112 = vrot.slane %v27, %v111
  %v114 = vunpack.c.l.s4 1983009808
  %v115 = vunpack.c.0.s8 %v114
  %v116 = vlaneseq
  %v117 = vshrl.u32 %v116, 7
  %v118 = vsub.s32 %v115, %v117
  %v119 = vrot.slane %v105, %v118
  %v120 = vcombine.high %v112, %v112
  %v121 = vcombine.high %v119, %v119
  %v190 = vunpack.c.l.b16 %v28
  %v191 = vunpack.c.h.b16 %v28
  %v192 = vunpack.c.l.b16 %v29
  %v193 = vunpack.c.h.b16 %v29
  %v194 = vunpack.c.l.b16 %v30
  %v195 = vunpack.c.h.b16 %v30
  %v196 = vunpack.c.l.b16 %v31
  %v197 = vunpack.c.h.b16 %v31
  %v198 = vunpack.c.l.b16 %v32
  %v199 = vunpack.c.h.b16 %v32
  %v200 = vunpack.c.l.b16 %v33
  %v201 = vunpack.c.h.b16 %v33
  %v202 = vunpack.c.l.b16 %v34
  %v203 = vunpack.c.h.b16 %v34
  %v204 = vunpack.c.l.b16 %v35
  %v205 = vunpack.c.h.b16 %v35
  %v206 = vunpack.c.l.b16 %v36
  %v207 = vunpack.c.h.b16 %v36
  %v208 = vunpack.c.l.b16 %v37
  %v209 = vunpack.c.h.b16 %v37
  %v210 = vunpack.c.l.b16 %v38
  %v211 = vunpack.c.h.b16 %v38
  %v212 = vunpack.c.l.b16 %v39
  %v213 = vunpack.c.h.b16 %v39
  %v214 = vunpack.c.l.b16 %v40
  %v215 = vunpack.c.h.b16 %v40
  %v216 = vunpack.c.l.b16 %v41
  %v217 = vunpack.c.h.b16 %v41
  %v218 = vunpack.c.l.b16 %v42
  %v219 = vunpack.c.h.b16 %v42
  %v220 = vunpack.c.l.b16 %v43
  %v221 = vunpack.c.h.b16 %v43
  %v222 = vunpack.c.l.b16 %v44
  %v223 = vunpack.c.h.b16 %v44
  %v224 = vunpack.c.l.b16 %v45
  %v225 = vunpack.c.h.b16 %v45
  %v226 = vunpack.c.l.b16 %v46
  %v227 = vunpack.c.h.b16 %v46
  %v228 = vunpack.c.l.b16 %v47
  %v229 = vunpack.c.h.b16 %v47
  %v230 = vunpack.c.l.b16 %v48
  %v231 = vunpack.c.h.b16 %v48
  %v232 = vunpack.c.l.b16 %v49
  %v233 = vunpack.c.h.b16 %v49
  %v234 = vunpack.c.l.b16 %v50
  %v235 = vunpack.c.h.b16 %v50
  %v236 = vunpack.c.l.b16 %v51
  %v237 = vunpack.c.h.b16 %v51
  %v238 = vunpack.c.l.b16 %v52
  %v239 = vunpack.c.h.b16 %v52
  %v240 = vunpack.c.l.b16 %v53
  %v241 = vunpack.c.h.b16 %v53
  %v242 = vunpack.c.l.b16 %v54
  %v243 = vunpack.c.h.b16 %v54
  %v244 = vunpack.c.l.b16 %v55
  %v245 = vunpack.c.h.b16 %v55
  %v246 = vunpack.c.l.b16 %v56
  %v247 = vunpack.c.h.b16 %v56
  %v248 = vunpack.c.l.b16 %v57
  %v249 = vunpack.c.h.b16 %v57
  %v250 = vunpack.c.l.b16 %v58
  %v251 = vunpack.c.h.b16 %v58
  %v252 = vunpack.c.l.b16 %v59
  %v253 = vunpack.c.h.b16 %v59
  %v254 = vunpack.c.l.b16 %v60
  %v255 = vunpack.c.h.b16 %v60
  %v256 = vunpack.c.l.b16 %v61
  %v257 = vunpack.c.h.b16 %v61
  %v258 = vunpack.c.l.b16 %v62
  %v259 = vunpack.c.h.b16 %v62
  %v260 = vunpack.c.l.b16 %v63
  %v261 = vunpack.c.h.b16 %v63
  %v262 = vunpack.c.l.b16 %v64
  %v263 = vunpack.c.h.b16 %v64
  %v264 = vunpack.c.l.b16 %v65
  %v265 = vunpack.c.h.b16 %v65
  %v266 = vunpack.c.l.b16 %v66
  %v267 = vunpack.c.h.b16 %v66
  %v268 = vunpack.c.l.b16 %v67
  %v269 = vunpack.c.h.b16 %v67
  %v270 = vunpack.c.l.b16 %v68
  %v271 = vunpack.c.h.b16 %v68
  %v272 = vunpack.c.l.b16 %v69
  %v273 = vunpack.c.h.b16 %v69
  %v274 = vunpack.c.l.b16 %v70
  %v275 = vunpack.c.h.b16 %v70
  %v276 = vunpack.c.l.b16 %v71
  %v277 = vunpack.c.h.b16 %v71
  %v278 = vunpack.c.l.b16 %v72
  %v279 = vunpack.c.h.b16 %v72
  %v280 = vunpack.c.l.b16 %v73
  %v281 = vunpack.c.h.b16 %v73
  %v282 = vunpack.c.l.b16 %v74
  %v283 = vunpack.c.h.b16 %v74
  %v284 = vunpack.c.l.b16 %v75
  %v285 = vunpack.c.h.b16 %v75
  %v286 = vunpack.c.l.b16 %v76
  %v287 = vunpack.c.h.b16 %v76
  %v288 = vunpack.c.l.b16 %v77
  %v289 = vunpack.c.h.b16 %v77
  %v290 = vunpack.c.l.b16 %v78
  %v291 = vunpack.c.h.b16 %v78
  %v292 = vunpack.c.l.b16 %v79
  %v293 = vunpack.c.h.b16 %v79
  %v294 = vunpack.c.l.b16 %v80
  %v295 = vunpack.c.h.b16 %v80
  %v296 = vunpack.c.l.b16 %v81
  %v297 = vunpack.c.h.b16 %v81
  %v298 = vunpack.c.l.b16 %v82
  %v299 = vunpack.c.h.b16 %v82
  %v300 = vunpack.c.l.b16 %v83
  %v301 = vunpack.c.h.b16 %v83
  %v302 = vunpack.c.l.b16 %v84
  %v303 = vunpack.c.h.b16 %v84
  %v304 = vunpack.c.l.b16 %v85
  %v305 = vunpack.c.h.b16 %v85
  %v306 = vunpack.c.l.b16 %v86
  %v307 = vunpack.c.h.b16 %v86
  %v308 = vunpack.c.l.b16 %v87
  %v309 = vunpack.c.h.b16 %v87
  %v310 = vunpack.c.l.b16 %v88
  %v311 = vunpack.c.h.b16 %v88
  %v312 = vunpack.c.l.b16 %v89
  %v313 = vunpack.c.h.b16 %v89
  %v314 = vunpack.c.l.b16 %v90
  %v315 = vunpack.c.h.b16 %v90
  %v316 = vunpack.c.l.b16 %v91
  %v317 = vunpack.c.h.b16 %v91
  %v318 = vpack.c.b16 %v192, %v190
  %v319 = vpack.c.b16 %v193, %v191
  %v320 = vpack.c.b16 %v196, %v194
  %v321 = vpack.c.b16 %v197, %v195
  %v322 = vpack.c.b16 %v200, %v198
  %v323 = vpack.c.b16 %v201, %v199
  %v324 = vpack.c.b16 %v204, %v202
  %v325 = vpack.c.b16 %v205, %v203
  %v326 = vpack.c.b16 %v208, %v206
  %v327 = vpack.c.b16 %v209, %v207
  %v328 = vpack.c.b16 %v212, %v210
  %v329 = vpack.c.b16 %v213, %v211
  %v330 = vpack.c.b16 %v216, %v214
  %v331 = vpack.c.b16 %v217, %v215
  %v332 = vpack.c.b16 %v220, %v218
  %v333 = vpack.c.b16 %v221, %v219
  %v334 = vpack.c.b16 %v224, %v222
  %v335 = vpack.c.b16 %v225, %v223
  %v336 = vpack.c.b16 %v228, %v226
  %v337 = vpack.c.b16 %v229, %v227
  %v338 = vpack.c.b16 %v232, %v230
  %v339 = vpack.c.b16 %v233, %v231
  %v340 = vpack.c.b16 %v236, %v234
  %v341 = vpack.c.b16 %v237, %v235
  %v342 = vpack.c.b16 %v240, %v238
  %v343 = vpack.c.b16 %v241, %v239
  %v344 = vpack.c.b16 %v244, %v242
  %v345 = vpack.c.b16 %v245, %v243
  %v346 = vpack.c.b16 %v248, %v246
  %v347 = vpack.c.b16 %v249, %v247
  %v348 = vpack.c.b16 %v252, %v250
  %v349 = vpack.c.b16 %v253, %v251
  %v350 = vpack.c.b16 %v256, %v254
  %v351 = vpack.c.b16 %v257, %v255
  %v352 = vpack.c.b16 %v260, %v258
  %v353 = vpack.c.b16 %v261, %v259
  %v354 = vpack.c.b16 %v264, %v262
  %v355 = vpack.c.b16 %v265, %v263
  %v356 = vpack.c.b16 %v268, %v266
  %v357 = vpack.c.b16 %v269, %v267
  %v358 = vpack.c.b16 %v272, %v270
  %v359 = vpack.c.b16 %v273, %v271
  %v360 = vpack.c.b16 %v276, %v274
  %v361 = vpack.c.b16 %v277, %v275
  %v362 = vpack.c.b16 %v280, %v278
  %v363 = vpack.c.b16 %v281, %v279
  %v364 = vpack.c.b16 %v284, %v282
  %v365 = vpack.c.b16 %v285, %v283
  %v366 = vpack.c.b16 %v288, %v286
  %v367 = vpack.c.b16 %v289, %v287
  %v368 = vpack.c.b16 %v292, %v290
  %v369 = vpack.c.b16 %v293, %v291
  %v370 = vpack.c.b16 %v296, %v294
  %v371 = vpack.c.b16 %v297, %v295
  %v372 = vpack.c.b16 %v300, %v298
  %v373 = vpack.c.b16 %v301, %v299
  %v374 = vpack.c.b16 %v304, %v302
  %v375 = vpack.c.b16 %v305, %v303
  %v376 = vpack.c.b16 %v308, %v306
  %v377 = vpack.c.b16 %v309, %v307
  %v378 = vpack.c.b16 %v312, %v310
  %v379 = vpack.c.b16 %v313, %v311
  %v380 = vpack.c.b16 %v316, %v314
  %v381 = vpack.c.b16 %v317, %v315
  %446 = vmatprep.subr.bf16.mxu0 %v333
  %447 = vmatpush1.bf16.msra.mxu0 %v332
  %448 = vmatprep.subr.bf16.mxu0 %v331
  %449 = vmatpush1.bf16.msra.mxu0 %v330
  %450 = vmatprep.subr.bf16.mxu0 %v329
  %451 = vmatpush1.bf16.msra.mxu0 %v328
  %452 = vmatprep.subr.bf16.mxu0 %v327
  %453 = vmatpush1.bf16.msra.mxu0 %v326
  %454 = vmatprep.subr.bf16.mxu0 %v325
  %455 = vmatpush1.bf16.msra.mxu0 %v324
  %456 = vmatprep.subr.bf16.mxu0 %v323
  %457 = vmatpush1.bf16.msra.mxu0 %v322
  %458 = vmatprep.subr.bf16.mxu0 %v321
  %459 = vmatpush1.bf16.msra.mxu0 %v320
  %460 = vmatprep.subr.bf16.mxu0 %v319
  %461 = vmatpush1.bf16.msra.mxu0 %v318
  %462 = vmatprep.subr.bf16.mxu0 %v349
  %463 = vmatpush2.bf16.msra.mxu0 %v348
  %464 = vmatprep.subr.bf16.mxu0 %v347
  %465 = vmatpush2.bf16.msra.mxu0 %v346
  %466 = vmatprep.subr.bf16.mxu0 %v345
  %467 = vmatpush2.bf16.msra.mxu0 %v344
  %468 = vmatprep.subr.bf16.mxu0 %v343
  %469 = vmatpush2.bf16.msra.mxu0 %v342
  %470 = vmatprep.subr.bf16.mxu0 %v341
  %471 = vmatpush2.bf16.msra.mxu0 %v340
  %472 = vmatprep.subr.bf16.mxu0 %v339
  %473 = vmatpush2.bf16.msra.mxu0 %v338
  %474 = vmatprep.subr.bf16.mxu0 %v337
  %475 = vmatpush2.bf16.msra.mxu0 %v336
  %476 = vmatprep.subr.bf16.mxu0 %v335
  %477 = vmatpush2.bf16.msra.mxu0 %v334
  %478 = vmatprep.mubr.bf16.mxu0 %v120
  %479 = vmatmul.mubr.bf16.gmra.mxu0 %v112
  %v480 = vpop.f32.mrf.mxu0
  %v481 = vadd.f32 %v97, %v480
  %v482 = vpop.f32.mrf.mxu0
  %v483 = vadd.f32 %v101, %v482
  %v484 = vpop.f32.mrf.mxu0
  %v485 = vpop.f32.mrf.mxu0
  %486 = vdwg.mxu0
  %487 = vmatprep.subr.bf16.mxu0 %v365
  %488 = vmatpush1.bf16.msra.mxu0 %v364
  %489 = vmatprep.subr.bf16.mxu0 %v363
  %490 = vmatpush1.bf16.msra.mxu0 %v362
  %491 = vmatprep.subr.bf16.mxu0 %v361
  %492 = vmatpush1.bf16.msra.mxu0 %v360
  %493 = vmatprep.subr.bf16.mxu0 %v359
  %494 = vmatpush1.bf16.msra.mxu0 %v358
  %495 = vmatprep.subr.bf16.mxu0 %v357
  %496 = vmatpush1.bf16.msra.mxu0 %v356
  %497 = vmatprep.subr.bf16.mxu0 %v355
  %498 = vmatpush1.bf16.msra.mxu0 %v354
  %499 = vmatprep.subr.bf16.mxu0 %v353
  %500 = vmatpush1.bf16.msra.mxu0 %v352
  %501 = vmatprep.subr.bf16.mxu0 %v351
  %502 = vmatpush1.bf16.msra.mxu0 %v350
  %503 = vmatprep.subr.bf16.mxu0 %v381
  %504 = vmatpush2.bf16.msra.mxu0 %v380
  %505 = vmatprep.subr.bf16.mxu0 %v379
  %506 = vmatpush2.bf16.msra.mxu0 %v378
  %507 = vmatprep.subr.bf16.mxu0 %v377
  %508 = vmatpush2.bf16.msra.mxu0 %v376
  %509 = vmatprep.subr.bf16.mxu0 %v375
  %510 = vmatpush2.bf16.msra.mxu0 %v374
  %511 = vmatprep.subr.bf16.mxu0 %v373
  %512 = vmatpush2.bf16.msra.mxu0 %v372
  %513 = vmatprep.subr.bf16.mxu0 %v371
  %514 = vmatpush2.bf16.msra.mxu0 %v370
  %515 = vmatprep.subr.bf16.mxu0 %v369
  %516 = vmatpush2.bf16.msra.mxu0 %v368
  %517 = vmatprep.subr.bf16.mxu0 %v367
  %518 = vmatpush2.bf16.msra.mxu0 %v366
  %519 = vmatprep.mubr.bf16.mxu0 %v121
  %520 = vmatmul.mubr.bf16.gmra.mxu0 %v119
  %v521 = vpop.f32.mrf.mxu0
  %v522 = vadd.f32 %v481, %v521
  %v523 = vpop.f32.mrf.mxu0
  %v524 = vadd.f32 %v483, %v523
  %v525 = vpop.f32.mrf.mxu0
  %v526 = vpop.f32.mrf.mxu0
  %527 = vdwg.mxu0
  %v528 = vmax.f32 %v522, 0.0
  %v529 = vmax.f32 %v524, 0.0
  %v530 = vpack.c.bf16 %v528, %v528
  %v531 = vpack.c.bf16 %v529, %v529
  %v532 = vld [vmem:[%s3] sm:$0xf]
  %v533 = vld [vmem:[%s3 + $0x4] sm:$0xf]
  %v534 = vld [vmem:[%s3 + $0x8] sm:$0xf]
  %v535 = vld [vmem:[%s3 + $0xc] sm:$0xf]
  %v536 = vld [vmem:[%s3 + $0x10] sm:$0xf]
  %v537 = vld [vmem:[%s3 + $0x14] sm:$0xf]
  %v538 = vld [vmem:[%s3 + $0x18] sm:$0xf]
  %v539 = vld [vmem:[%s3 + $0x1c] sm:$0xf]
  %v540 = vld [vmem:[%s3 + $0x20] sm:$0xf]
  %v541 = vld [vmem:[%s3 + $0x24] sm:$0xf]
  %v542 = vld [vmem:[%s3 + $0x28] sm:$0xf]
  %v543 = vld [vmem:[%s3 + $0x2c] sm:$0xf]
  %v544 = vld [vmem:[%s3 + $0x30] sm:$0xf]
  %v545 = vld [vmem:[%s3 + $0x34] sm:$0xf]
  %v546 = vld [vmem:[%s3 + $0x38] sm:$0xf]
  %v547 = vld [vmem:[%s3 + $0x3c] sm:$0xf]
  %v548 = vld [vmem:[%s3 + $0x40] sm:$0xf]
  %v549 = vld [vmem:[%s3 + $0x44] sm:$0xf]
  %v550 = vld [vmem:[%s3 + $0x48] sm:$0xf]
  %v551 = vld [vmem:[%s3 + $0x4c] sm:$0xf]
  %v552 = vld [vmem:[%s3 + $0x50] sm:$0xf]
  %v553 = vld [vmem:[%s3 + $0x54] sm:$0xf]
  %v554 = vld [vmem:[%s3 + $0x58] sm:$0xf]
  %v555 = vld [vmem:[%s3 + $0x5c] sm:$0xf]
  %v556 = vld [vmem:[%s3 + $0x60] sm:$0xf]
  %v557 = vld [vmem:[%s3 + $0x64] sm:$0xf]
  %v558 = vld [vmem:[%s3 + $0x68] sm:$0xf]
  %v559 = vld [vmem:[%s3 + $0x6c] sm:$0xf]
  %v560 = vld [vmem:[%s3 + $0x70] sm:$0xf]
  %v561 = vld [vmem:[%s3 + $0x74] sm:$0xf]
  %v562 = vld [vmem:[%s3 + $0x78] sm:$0xf]
  %v563 = vld [vmem:[%s3 + $0x7c] sm:$0xf]
  %v564 = vld [vmem:[%s4] sm:$0x1]
  %v566 = vlaneseq
  %v567 = vshrl.u32 %v566, 7
  %v568 = vsub.s32 0, %v567
  %v569 = vrot.slane %v564, %v568
  %v603 = vunpack.c.l.b16 %v532
  %v604 = vunpack.c.l.b16 %v533
  %v605 = vunpack.c.l.b16 %v534
  %v606 = vunpack.c.l.b16 %v535
  %v607 = vunpack.c.l.b16 %v536
  %v608 = vunpack.c.l.b16 %v537
  %v609 = vunpack.c.l.b16 %v538
  %v610 = vunpack.c.l.b16 %v539
  %v611 = vunpack.c.l.b16 %v540
  %v612 = vunpack.c.l.b16 %v541
  %v613 = vunpack.c.l.b16 %v542
  %v614 = vunpack.c.l.b16 %v543
  %v615 = vunpack.c.l.b16 %v544
  %v616 = vunpack.c.l.b16 %v545
  %v617 = vunpack.c.l.b16 %v546
  %v618 = vunpack.c.l.b16 %v547
  %v619 = vunpack.c.l.b16 %v548
  %v620 = vunpack.c.l.b16 %v549
  %v621 = vunpack.c.l.b16 %v550
  %v622 = vunpack.c.l.b16 %v551
  %v623 = vunpack.c.l.b16 %v552
  %v624 = vunpack.c.l.b16 %v553
  %v625 = vunpack.c.l.b16 %v554
  %v626 = vunpack.c.l.b16 %v555
  %v627 = vunpack.c.l.b16 %v556
  %v628 = vunpack.c.l.b16 %v557
  %v629 = vunpack.c.l.b16 %v558
  %v630 = vunpack.c.l.b16 %v559
  %v631 = vunpack.c.l.b16 %v560
  %v632 = vunpack.c.l.b16 %v561
  %v633 = vunpack.c.l.b16 %v562
  %v634 = vunpack.c.l.b16 %v563
  %v635 = vpack.c.b16 %v604, %v603
  %v636 = vpack.c.b16 %v606, %v605
  %v637 = vpack.c.b16 %v608, %v607
  %v638 = vpack.c.b16 %v610, %v609
  %v639 = vpack.c.b16 %v612, %v611
  %v640 = vpack.c.b16 %v614, %v613
  %v641 = vpack.c.b16 %v616, %v615
  %v642 = vpack.c.b16 %v618, %v617
  %v643 = vpack.c.b16 %v620, %v619
  %v644 = vpack.c.b16 %v622, %v621
  %v645 = vpack.c.b16 %v624, %v623
  %v646 = vpack.c.b16 %v626, %v625
  %v647 = vpack.c.b16 %v628, %v627
  %v648 = vpack.c.b16 %v630, %v629
  %v649 = vpack.c.b16 %v632, %v631
  %v650 = vpack.c.b16 %v634, %v633
  %667 = vmatprep.subr.bf16.mxu0 0
  %668 = vmatpush1.bf16.msra.mxu0 %v642
  %669 = vmatprep.subr.bf16.mxu0 0
  %670 = vmatpush1.bf16.msra.mxu0 %v641
  %671 = vmatprep.subr.bf16.mxu0 0
  %672 = vmatpush1.bf16.msra.mxu0 %v640
  %673 = vmatprep.subr.bf16.mxu0 0
  %674 = vmatpush1.bf16.msra.mxu0 %v639
  %675 = vmatprep.subr.bf16.mxu0 0
  %676 = vmatpush1.bf16.msra.mxu0 %v638
  %677 = vmatprep.subr.bf16.mxu0 0
  %678 = vmatpush1.bf16.msra.mxu0 %v637
  %679 = vmatprep.subr.bf16.mxu0 0
  %680 = vmatpush1.bf16.msra.mxu0 %v636
  %681 = vmatprep.subr.bf16.mxu0 0
  %682 = vmatpush1.bf16.msra.mxu0 %v635
  %683 = vmatprep.subr.bf16.mxu0 0
  %684 = vmatpush2.bf16.msra.mxu0 %v650
  %685 = vmatprep.subr.bf16.mxu0 0
  %686 = vmatpush2.bf16.msra.mxu0 %v649
  %687 = vmatprep.subr.bf16.mxu0 0
  %688 = vmatpush2.bf16.msra.mxu0 %v648
  %689 = vmatprep.subr.bf16.mxu0 0
  %690 = vmatpush2.bf16.msra.mxu0 %v647
  %691 = vmatprep.subr.bf16.mxu0 0
  %692 = vmatpush2.bf16.msra.mxu0 %v646
  %693 = vmatprep.subr.bf16.mxu0 0
  %694 = vmatpush2.bf16.msra.mxu0 %v645
  %695 = vmatprep.subr.bf16.mxu0 0
  %696 = vmatpush2.bf16.msra.mxu0 %v644
  %697 = vmatprep.subr.bf16.mxu0 0
  %698 = vmatpush2.bf16.msra.mxu0 %v643
  %699 = vmatprep.mubr.bf16.mxu0 %v531
  %700 = vmatmul.mubr.bf16.gmra.mxu0 %v530
  %v701 = vpop.f32.mrf.mxu0
  %v702 = vadd.f32 %v569, %v701
  %v703 = vpop.f32.mrf.mxu0
  %v704 = vpop.f32.mrf.mxu0
  %v705 = vpop.f32.mrf.mxu0
  %706 = vdwg.mxu0
  %v707 = vmax.f32 %v702, 0.0
  %v708 = vpack.c.bf16 %v707, %v707
  %v709 = vld [vmem:[%s5] sm:$0xff]
  %v710 = vld [vmem:[%s5 + $0x8] sm:$0xff]
  %v711 = vld [vmem:[%s5 + $0x10] sm:$0xff]
  %v712 = vld [vmem:[%s5 + $0x18] sm:$0xff]
  %v713 = vld [vmem:[%s5 + $0x20] sm:$0xff]
  %v714 = vld [vmem:[%s5 + $0x28] sm:$0xff]
  %v715 = vld [vmem:[%s5 + $0x30] sm:$0xff]
  %v716 = vld [vmem:[%s5 + $0x38] sm:$0xff]
  %v717 = vld [vmem:[%s5 + $0x40] sm:$0xff]
  %v718 = vld [vmem:[%s5 + $0x48] sm:$0xff]
  %v719 = vld [vmem:[%s5 + $0x50] sm:$0xff]
  %v720 = vld [vmem:[%s5 + $0x58] sm:$0xff]
  %v721 = vld [vmem:[%s5 + $0x60] sm:$0xff]
  %v722 = vld [vmem:[%s5 + $0x68] sm:$0xff]
  %v723 = vld [vmem:[%s5 + $0x70] sm:$0xff]
  %v724 = vld [vmem:[%s5 + $0x78] sm:$0xff]
  %v725 = vld [vmem:[%s6] sm:$0x3]
  %v727 = vlaneseq
  %v728 = vshrl.u32 %v727, 7
  %v729 = vsub.s32 0, %v728
  %v730 = vrot.slane %v725, %v729
  %v731 = vlaneseq
  %v732 = vshrl.u32 %v731, 7
  %v733 = vsub.s32 1, %v732
  %v734 = vrot.slane %v725, %v733
  %v753 = vunpack.c.l.b16 %v709
  %v754 = vunpack.c.h.b16 %v709
  %v755 = vunpack.c.l.b16 %v710
  %v756 = vunpack.c.h.b16 %v710
  %v757 = vunpack.c.l.b16 %v711
  %v758 = vunpack.c.h.b16 %v711
  %v759 = vunpack.c.l.b16 %v712
  %v760 = vunpack.c.h.b16 %v712
  %v761 = vunpack.c.l.b16 %v713
  %v762 = vunpack.c.h.b16 %v713
  %v763 = vunpack.c.l.b16 %v714
  %v764 = vunpack.c.h.b16 %v714
  %v765 = vunpack.c.l.b16 %v715
  %v766 = vunpack.c.h.b16 %v715
  %v767 = vunpack.c.l.b16 %v716
  %v768 = vunpack.c.h.b16 %v716
  %v769 = vunpack.c.l.b16 %v717
  %v770 = vunpack.c.h.b16 %v717
  %v771 = vunpack.c.l.b16 %v718
  %v772 = vunpack.c.h.b16 %v718
  %v773 = vunpack.c.l.b16 %v719
  %v774 = vunpack.c.h.b16 %v719
  %v775 = vunpack.c.l.b16 %v720
  %v776 = vunpack.c.h.b16 %v720
  %v777 = vunpack.c.l.b16 %v721
  %v778 = vunpack.c.h.b16 %v721
  %v779 = vunpack.c.l.b16 %v722
  %v780 = vunpack.c.h.b16 %v722
  %v781 = vunpack.c.l.b16 %v723
  %v782 = vunpack.c.h.b16 %v723
  %v783 = vunpack.c.l.b16 %v724
  %v784 = vunpack.c.h.b16 %v724
  %v785 = vpack.c.b16 %v755, %v753
  %v786 = vpack.c.b16 %v756, %v754
  %v787 = vpack.c.b16 %v759, %v757
  %v788 = vpack.c.b16 %v760, %v758
  %v789 = vpack.c.b16 %v763, %v761
  %v790 = vpack.c.b16 %v764, %v762
  %v791 = vpack.c.b16 %v767, %v765
  %v792 = vpack.c.b16 %v768, %v766
  %v793 = vpack.c.b16 %v771, %v769
  %v794 = vpack.c.b16 %v772, %v770
  %v795 = vpack.c.b16 %v775, %v773
  %v796 = vpack.c.b16 %v776, %v774
  %v797 = vpack.c.b16 %v779, %v777
  %v798 = vpack.c.b16 %v780, %v778
  %v799 = vpack.c.b16 %v783, %v781
  %v800 = vpack.c.b16 %v784, %v782
  %817 = vmatprep.subr.bf16.mxu0 %v800
  %818 = vmatpush1.bf16.msra.mxu0 %v799
  %819 = vmatprep.subr.bf16.mxu0 %v798
  %820 = vmatpush1.bf16.msra.mxu0 %v797
  %821 = vmatprep.subr.bf16.mxu0 %v796
  %822 = vmatpush1.bf16.msra.mxu0 %v795
  %823 = vmatprep.subr.bf16.mxu0 %v794
  %824 = vmatpush1.bf16.msra.mxu0 %v793
  %825 = vmatprep.subr.bf16.mxu0 %v792
  %826 = vmatpush1.bf16.msra.mxu0 %v791
  %827 = vmatprep.subr.bf16.mxu0 %v790
  %828 = vmatpush1.bf16.msra.mxu0 %v789
  %829 = vmatprep.subr.bf16.mxu0 %v788
  %830 = vmatpush1.bf16.msra.mxu0 %v787
  %831 = vmatprep.subr.bf16.mxu0 %v786
  %832 = vmatpush1.bf16.msra.mxu0 %v785
  %833 = vmatprep.subr.bf16.mxu0 0
  %834 = vmatpush2.bf16.msra.mxu0 0
  %835 = vmatprep.subr.bf16.mxu0 0
  %836 = vmatpush2.bf16.msra.mxu0 0
  %837 = vmatprep.subr.bf16.mxu0 0
  %838 = vmatpush2.bf16.msra.mxu0 0
  %839 = vmatprep.subr.bf16.mxu0 0
  %840 = vmatpush2.bf16.msra.mxu0 0
  %841 = vmatprep.subr.bf16.mxu0 0
  %842 = vmatpush2.bf16.msra.mxu0 0
  %843 = vmatprep.subr.bf16.mxu0 0
  %844 = vmatpush2.bf16.msra.mxu0 0
  %845 = vmatprep.subr.bf16.mxu0 0
  %846 = vmatpush2.bf16.msra.mxu0 0
  %847 = vmatprep.subr.bf16.mxu0 0
  %848 = vmatpush2.bf16.msra.mxu0 0
  %849 = vmatprep.mubr.bf16.mxu0 0
  %850 = vmatmul.mubr.bf16.gmra.mxu0 %v708
  %v851 = vpop.f32.mrf.mxu0
  %v852 = vadd.f32 %v730, %v851
  %v853 = vpop.f32.mrf.mxu0
  %v854 = vadd.f32 %v734, %v853
  %v855 = vpop.f32.mrf.mxu0
  %v856 = vpop.f32.mrf.mxu0
  %857 = vdwg.mxu0
  %v860 = vcombine.low %v852, %v854
  %862 = vst [vmem:[%s7] sm:$0xff] %v860
  // Predicated region
  $region30: #{stnkd_forward.3} parent=0 // pred_check
    _
  $region31: #{stnkd_forward.3} parent=0 // pred_check_branch
    %864 = sbr.rel (0) target = $region33
  $region32: #{stnkd_forward.3} parent=0 // pred_region
    _
  $region33: #{stnkd_forward.3} parent=0 // pred_fallthru
    _
  // Predicated region
  $region34: #{stnkd_forward.3} parent=0 // pred_check
    _
  $region35: #{stnkd_forward.3} parent=0 // pred_check_branch
    %866 = sbr.rel (0) target = $region37
  $region36: #{stnkd_forward.3} parent=0 // pred_region
    _
  $region37: #{stnkd_forward.3} parent=0 // pred_fallthru
    _

// kernel: stnkd_forward.2
$region0: #{stnkd_forward.2}
  #allocation0 [shape = 'u32[]', space=smem, size = 0x4, offset = 0x4, fixed_abs, tag = 'smem constant byte address 0x4 - core index']
  #allocation1 [shape = 'u32[144,128]{1,0:T(1,128)}', space=vmem, size = 0x12000, scoped, tag = 'internal scratch']
  %s0 = inlined_call_operand.vmem [shape: f32[4,16,1280], index: 0, kind: input, shape index: {}]
  %s1 = inlined_call_operand.vmem [shape: bf16[16,128], index: 1, kind: input, shape index: {}]
  %s2 = inlined_call_operand.vmem [shape: f32[1,128], index: 2, kind: input, shape index: {}]
  %s3 = inlined_call_operand.vmem [shape: bf16[128,128], index: 3, kind: input, shape index: {}]
  %s4 = inlined_call_operand.vmem [shape: f32[1,128], index: 4, kind: input, shape index: {}]
  %s5 = inlined_call_operand.vmem [shape: bf16[128,512], index: 5, kind: input, shape index: {}]
  %s6 = inlined_call_operand.vmem [shape: f32[1,512], index: 6, kind: input, shape index: {}]
  %s7 = inlined_call_operand.vmem [shape: bf16[4,1,512], index: 7, kind: output, shape index: {}]
  %s8 = sld [smem:[#allocation0]]
  $region135: #{stnkd_forward.2} parent=0
    _
  %s10 = ssub.s32 1, %s8
  %s11 = scalar_select 0, %s10, %s8
  $region1: #{stnkd_forward.2} parent=0
    #allocation2 [shape = 'u8[65536]{0}', space=vmem, size = 0x10000, scoped, tag = 'input window, operand 0']
    loop: start=0, step=1, limit=14
    $region2: #{stnkd_forward.2} parent=1 // loop_pre_header
      _
    $region3: #{stnkd_forward.2} parent=1 // loop_header
      %s13 = sphi 0, %s17
      %p14 = scmp.ge.s32.totalorder %s13, 14
      %s20 = sphi 0, %s32
      %s21 = sphi 0, %s28
      %s22 = sphi 0, %s20
      %s23 = sphi 0, %s21
      %s24 = sphi 0, %s22
      %s25 = sphi 0, %s23
      %s37 = sphi 0, %s39
      %s40 = sphi 0, %s37
      %s41 = sphi 0, %s40
      %s57 = sphi 0, %s41
      %s61 = sphi 0, %s61
      %s63 = sphi 0, %s61
      %s64 = sphi 0, %s63
      %s78 = sphi 0, %s64
      %s82 = sphi 0, %s82
      %s84 = sphi 0, %s82
      %s85 = sphi 0, %s84
      %s99 = sphi 0, %s85
      %s103 = sphi 0, %s103
      %s105 = sphi 0, %s103
      %s106 = sphi 0, %s105
      %s120 = sphi 0, %s106
      %s124 = sphi 0, %s124
      %s126 = sphi 0, %s124
      %s127 = sphi 0, %s126
      %s141 = sphi 0, %s127
      %s145 = sphi 0, %s145
      %s147 = sphi 0, %s145
      %s148 = sphi 0, %s147
      %s162 = sphi 0, %s148
      %s166 = sphi 0, %s166
      %s168 = sphi 0, %s166
      %s169 = sphi 0, %s168
      %s183 = sphi 0, %s169
      %s189 = sphi 0, %s191
      %s192 = sphi 0, %s189
      %s193 = sphi 0, %s192
      %s209 = sphi 0, %s193
    $region4: #{stnkd_forward.2} parent=1 // loop_header_branch
      %16 = sbr.rel (%p14) target = $region8
    $region5: #{stnkd_forward.2} parent=1 // loop_body
      %s18 = ssub.s32 %s13, 1
      %s19 = ssub.s32 %s13, 2
      %s26 = sadd.s32 1, %s21
      %p27 = scmp.ge.s32.totalorder %s26, 3
      %s28 = scalar_select %p27, 0, %s26
      %s29 = sadd.s32 1, %s20
      %s30 = scalar_select %p27, %s29, %s20
      %p31 = scmp.ge.s32.totalorder %s30, 4
      %s32 = scalar_select %p31, 0, %s30
      %s33 = ssub.s32 %s20, %s32
      %s34 = ssub.s32 %s21, %s28
      %s35 = sor.u32 %s33, %s34
      %p36 = scmp.eq.s32.totalorder %s35, 0
      %s38 = sadd.s32 %s37, 1
      %s39 = scalar_select %p36, %s37, %s38
      %p42 = pneg %p36
      %p43 = scmp.eq.s32.totalorder %s13, 11
      %p44 = por %p42, %p43
      %p45 = scmp.ne.s32.totalorder %s37, %s40
      %p46 = scmp.eq.s32.totalorder %s13, 0
      %p47 = por %p45, %p46
      %p48 = scmp.ne.s32.totalorder %s37, %s40
      %p49 = scmp.eq.s32.totalorder %s18, 11
      %p50 = por %p48, %p49
      %p51 = scmp.ne.s32.totalorder %s40, %s41
      %p52 = scmp.eq.s32.totalorder %s18, 0
      %p53 = por %p51, %p52
      %p54 = scmp.ne.s32.totalorder %s40, %s41
      %p55 = scmp.eq.s32.totalorder %s19, 11
      %p56 = por %p54, %p55
      %p58 = scmp.ne.s32.totalorder %s41, %s57
      %p59 = scmp.eq.s32.totalorder %s19, 0
      %p60 = por %p58, %p59
      %s62 = sadd.s32 %s61, 1
      %p65 = scmp.eq.s32.totalorder %s13, 11
      %p66 = scmp.ne.s32.totalorder %s61, %s63
      %p67 = scmp.eq.s32.totalorder %s13, 0
      %p68 = por %p66, %p67
      %p69 = scmp.ne.s32.totalorder %s61, %s63
      %p70 = scmp.eq.s32.totalorder %s18, 11
      %p71 = por %p69, %p70
      %p72 = scmp.ne.s32.totalorder %s63, %s64
      %p73 = scmp.eq.s32.totalorder %s18, 0
      %p74 = por %p72, %p73
      %p75 = scmp.ne.s32.totalorder %s63, %s64
      %p76 = scmp.eq.s32.totalorder %s19, 11
      %p77 = por %p75, %p76
      %p79 = scmp.ne.s32.totalorder %s64, %s78
      %p80 = scmp.eq.s32.totalorder %s19, 0
      %p81 = por %p79, %p80
      %s83 = sadd.s32 %s82, 1
      %p86 = scmp.eq.s32.totalorder %s13, 11
      %p87 = scmp.ne.s32.totalorder %s82, %s84
      %p88 = scmp.eq.s32.totalorder %s13, 0
      %p89 = por %p87, %p88
      %p90 = scmp.ne.s32.totalorder %s82, %s84
      %p91 = scmp.eq.s32.totalorder %s18, 11
      %p92 = por %p90, %p91
      %p93 = scmp.ne.s32.totalorder %s84, %s85
      %p94 = scmp.eq.s32.totalorder %s18, 0
      %p95 = por %p93, %p94
      %p96 = scmp.ne.s32.totalorder %s84, %s85
      %p97 = scmp.eq.s32.totalorder %s19, 11
      %p98 = por %p96, %p97
      %p100 = scmp.ne.s32.totalorder %s85, %s99
      %p101 = scmp.eq.s32.totalorder %s19, 0
      %p102 = por %p100, %p101
      %s104 = sadd.s32 %s103, 1
      %p107 = scmp.eq.s32.totalorder %s13, 11
      %p108 = scmp.ne.s32.totalorder %s103, %s105
      %p109 = scmp.eq.s32.totalorder %s13, 0
      %p110 = por %p108, %p109
      %p111 = scmp.ne.s32.totalorder %s103, %s105
      %p112 = scmp.eq.s32.totalorder %s18, 11
      %p113 = por %p111, %p112
      %p114 = scmp.ne.s32.totalorder %s105, %s106
      %p115 = scmp.eq.s32.totalorder %s18, 0
      %p116 = por %p114, %p115
      %p117 = scmp.ne.s32.totalorder %s105, %s106
      %p118 = scmp.eq.s32.totalorder %s19, 11
      %p119 = por %p117, %p118
      %p121 = scmp.ne.s32.totalorder %s106, %s120
      %p122 = scmp.eq.s32.totalorder %s19, 0
      %p123 = por %p121, %p122
      %s125 = sadd.s32 %s124, 1
      %p128 = scmp.eq.s32.totalorder %s13, 11
      %p129 = scmp.ne.s32.totalorder %s124, %s126
      %p130 = scmp.eq.s32.totalorder %s13, 0
      %p131 = por %p129, %p130
      %p132 = scmp.ne.s32.totalorder %s124, %s126
      %p133 = scmp.eq.s32.totalorder %s18, 11
      %p134 = por %p132, %p133
      %p135 = scmp.ne.s32.totalorder %s126, %s127
      %p136 = scmp.eq.s32.totalorder %s18, 0
      %p137 = por %p135, %p136
      %p138 = scmp.ne.s32.totalorder %s126, %s127
      %p139 = scmp.eq.s32.totalorder %s19, 11
      %p140 = por %p138, %p139
      %p142 = scmp.ne.s32.totalorder %s127, %s141
      %p143 = scmp.eq.s32.totalorder %s19, 0
      %p144 = por %p142, %p143
      %s146 = sadd.s32 %s145, 1
      %p149 = scmp.eq.s32.totalorder %s13, 11
      %p150 = scmp.ne.s32.totalorder %s145, %s147
      %p151 = scmp.eq.s32.totalorder %s13, 0
      %p152 = por %p150, %p151
      %p153 = scmp.ne.s32.totalorder %s145, %s147
      %p154 = scmp.eq.s32.totalorder %s18, 11
      %p155 = por %p153, %p154
      %p156 = scmp.ne.s32.totalorder %s147, %s148
      %p157 = scmp.eq.s32.totalorder %s18, 0
      %p158 = por %p156, %p157
      %p159 = scmp.ne.s32.totalorder %s147, %s148
      %p160 = scmp.eq.s32.totalorder %s19, 11
      %p161 = por %p159, %p160
      %p163 = scmp.ne.s32.totalorder %s148, %s162
      %p164 = scmp.eq.s32.totalorder %s19, 0
      %p165 = por %p163, %p164
      %s167 = sadd.s32 %s166, 1
      %p170 = scmp.eq.s32.totalorder %s13, 11
      %p171 = scmp.ne.s32.totalorder %s166, %s168
      %p172 = scmp.eq.s32.totalorder %s13, 0
      %p173 = por %p171, %p172
      %p174 = scmp.ne.s32.totalorder %s166, %s168
      %p175 = scmp.eq.s32.totalorder %s18, 11
      %p176 = por %p174, %p175
      %p177 = scmp.ne.s32.totalorder %s168, %s169
      %p178 = scmp.eq.s32.totalorder %s18, 0
      %p179 = por %p177, %p178
      %p180 = scmp.ne.s32.totalorder %s168, %s169
      %p181 = scmp.eq.s32.totalorder %s19, 11
      %p182 = por %p180, %p181
      %p184 = scmp.ne.s32.totalorder %s169, %s183
      %p185 = scmp.eq.s32.totalorder %s19, 0
      %p186 = por %p184, %p185
      %s187 = ssub.s32 %s20, %s32
      %p188 = scmp.eq.s32.totalorder %s187, 0
      %s190 = sadd.s32 %s189, 1
      %s191 = scalar_select %p188, %s189, %s190
      %p194 = pneg %p188
      %p195 = scmp.eq.s32.totalorder %s13, 11
      %p196 = por %p194, %p195
      %p197 = scmp.ne.s32.totalorder %s189, %s192
      %p198 = scmp.eq.s32.totalorder %s13, 0
      %p199 = por %p197, %p198
      %p200 = scmp.ne.s32.totalorder %s189, %s192
      %p201 = scmp.eq.s32.totalorder %s18, 11
      %p202 = por %p200, %p201
      %p203 = scmp.ne.s32.totalorder %s192, %s193
      %p204 = scmp.eq.s32.totalorder %s18, 0
      %p205 = por %p203, %p204
      %p206 = scmp.ne.s32.totalorder %s192, %s193
      %p207 = scmp.eq.s32.totalorder %s19, 11
      %p208 = por %p206, %p207
      %p210 = scmp.ne.s32.totalorder %s193, %s209
      %p211 = scmp.eq.s32.totalorder %s19, 0
      %p212 = por %p210, %p211
      %p213 = scmp.le.s32.totalorder 1, %s13
      %p214 = scmp.lt.s32.totalorder %s13, 13
      %p215 = pnand %p213, %p214
      %p216 = pneg %p215
      // Predicated region
      $region9: #{stnkd_forward.2} parent=5 // pred_check
        _
      $region10: #{stnkd_forward.2} parent=5 // pred_check_branch
        %218 = sbr.rel (%p215) target = $region12
      $region11: #{stnkd_forward.2} parent=5 // pred_region
        %s219 = ssub.s32 %s13, 1
        // Predicated region
        $region13: #{stnkd_forward.2} parent=11 // pred_check
          %p220 = pneg %p74
        $region14: #{stnkd_forward.2} parent=11 // pred_check_branch
          %222 = sbr.rel (%p220) target = $region16
        $region15: #{stnkd_forward.2} parent=11 // pred_region
          _
        $region16: #{stnkd_forward.2} parent=11 // pred_fallthru
          _
        // Predicated region
        $region17: #{stnkd_forward.2} parent=11 // pred_check
          %p223 = pneg %p95
        $region18: #{stnkd_forward.2} parent=11 // pred_check_branch
          %225 = sbr.rel (%p223) target = $region20
        $region19: #{stnkd_forward.2} parent=11 // pred_region
          _
        $region20: #{stnkd_forward.2} parent=11 // pred_fallthru
          _
        // Predicated region
        $region21: #{stnkd_forward.2} parent=11 // pred_check
          %p226 = pneg %p116
        $region22: #{stnkd_forward.2} parent=11 // pred_check_branch
          %228 = sbr.rel (%p226) target = $region24
        $region23: #{stnkd_forward.2} parent=11 // pred_region
          _
        $region24: #{stnkd_forward.2} parent=11 // pred_fallthru
          _
        // Predicated region
        $region25: #{stnkd_forward.2} parent=11 // pred_check
          %p229 = pneg %p137
        $region26: #{stnkd_forward.2} parent=11 // pred_check_branch
          %231 = sbr.rel (%p229) target = $region28
        $region27: #{stnkd_forward.2} parent=11 // pred_region
          _
        $region28: #{stnkd_forward.2} parent=11 // pred_fallthru
          _
        // Predicated region
        $region29: #{stnkd_forward.2} parent=11 // pred_check
          %p232 = pneg %p158
        $region30: #{stnkd_forward.2} parent=11 // pred_check_branch
          %234 = sbr.rel (%p232) target = $region32
        $region31: #{stnkd_forward.2} parent=11 // pred_region
          _
        $region32: #{stnkd_forward.2} parent=11 // pred_fallthru
          _
        // Predicated region
        $region33: #{stnkd_forward.2} parent=11 // pred_check
          %p235 = pneg %p179
        $region34: #{stnkd_forward.2} parent=11 // pred_check_branch
          %237 = sbr.rel (%p235) target = $region36
        $region35: #{stnkd_forward.2} parent=11 // pred_region
          _
        $region36: #{stnkd_forward.2} parent=11 // pred_fallthru
          _
      $region12: #{stnkd_forward.2} parent=5 // pred_fallthru
        _
      %p238 = scmp.lt.s32.totalorder %s13, 12
      // Predicated region
      $region37: #{stnkd_forward.2} parent=5 // pred_check
        %p239 = pneg %p238
      $region38: #{stnkd_forward.2} parent=5 // pred_check_branch
        %241 = sbr.rel (%p239) target = $region40
      $region39: #{stnkd_forward.2} parent=5 // pred_region
        // Predicated region
        $region41: #{stnkd_forward.2} parent=39 // pred_check
          %p242 = pneg %p47
        $region42: #{stnkd_forward.2} parent=39 // pred_check_branch
          %244 = sbr.rel (%p242) target = $region44
        $region43: #{stnkd_forward.2} parent=39 // pred_region
          %s245 = sand.u32 %s37, 1
          %s246 = sand.u32 %s37, 1
          %s247 = smul.addr %s246, 64
          %s248 = scalar_lea.vmem [#allocation2], %s247
          %s249 = smul.u32 4, %s21
          %s250 = ssub.s32 10, %s249
          %p251 = scmp.lt.s32.totalorder %s250, 4
          %s252 = scalar_select %p251, %s250, 4
          %s253 = smul.u32 256, %s252
          %p254 = scmp.ne.s32.totalorder 0, %s253
          %s255 = smul.addr %s20, 20
          %s256 = sadd.s32 %s249, %s255
          %s257 = smul.addr %s256, 8
          %s258 = scalar_lea.vmem %s0, %s257
          %s259 = smul.u32 %s252, 8
          // Predicated region
          $region45: #{stnkd_forward.2} parent=43 // pred_check
            %p260 = pneg %p254
          $region46: #{stnkd_forward.2} parent=43 // pred_check_branch
            %262 = sbr.rel (%p260) target = $region48
          $region47: #{stnkd_forward.2} parent=43 // pred_region
            %p263 = scmp.lt.u32.totalorder %s259, 8
            %p264 = pneg %p263
            // Predicated region
            $region49: #{stnkd_forward.2} parent=47 // pred_check
              _
            $region50: #{stnkd_forward.2} parent=47 // pred_check_branch
              %266 = sbr.rel (%p263) target = $region52
            $region51: #{stnkd_forward.2} parent=47 // pred_region
              %s284 = sand.u32 %s259, 7
              %p285 = scmp.eq.s32.totalorder %s284, 0
              // Predicated region
              $region64: #{stnkd_forward.2} parent=51 // pred_check
                %p286 = pneg %p285
              $region65: #{stnkd_forward.2} parent=51 // pred_check_branch
                %288 = sbr.rel (%p286) target = $region67
              $region66: #{stnkd_forward.2} parent=51 // pred_region
                %s289 = sshrl.u32 %s259, 3
                %s290 = sshrl.u32 %s289, 5
                // While loop
                $region68: #{stnkd_forward.2} parent=66 // loop_pre_header
                  _
                $region69: #{stnkd_forward.2} parent=66 // loop_header
                  %s294 = sphi 0, %s296
                  %p295 = scmp.ge.s32.totalorder %s294, %s290
                  %s299 = sphi 0, %s432
                  %s300 = sphi %s258, %s435
                  %s301 = sphi %s248, %s436
                $region70: #{stnkd_forward.2} parent=66 // loop_header_branch
                  %298 = sbr.rel (%p295) target = $region74
                $region71: #{stnkd_forward.2} parent=66 // loop_body
                  %v302 = vld [vmem:[%s300] sm:$0xff]
                  %303 = vst [vmem:[%s301] sm:$0xff] %v302
                  %v304 = vld [vmem:[%s300 + $0x8] sm:$0xff]
                  %305 = vst [vmem:[%s301 + $0x8] sm:$0xff] %v304
                  %v306 = vld [vmem:[%s300 + $0x10] sm:$0xff]
                  %307 = vst [vmem:[%s301 + $0x10] sm:$0xff] %v306
                  %v308 = vld [vmem:[%s300 + $0x18] sm:$0xff]
                  %309 = vst [vmem:[%s301 + $0x18] sm:$0xff] %v308
                  %v310 = vld [vmem:[%s300 + $0x20] sm:$0xff]
                  %311 = vst [vmem:[%s301 + $0x20] sm:$0xff] %v310
                  %v312 = vld [vmem:[%s300 + $0x28] sm:$0xff]
                  %313 = vst [vmem:[%s301 + $0x28] sm:$0xff] %v312
                  %v314 = vld [vmem:[%s300 + $0x30] sm:$0xff]
                  %315 = vst [vmem:[%s301 + $0x30] sm:$0xff] %v314
                  %v316 = vld [vmem:[%s300 + $0x38] sm:$0xff]
                  %317 = vst [vmem:[%s301 + $0x38] sm:$0xff] %v316
                  %v318 = vld [vmem:[%s300 + $0x40] sm:$0xff]
                  %319 = vst [vmem:[%s301 + $0x40] sm:$0xff] %v318
                  %v320 = vld [vmem:[%s300 + $0x48] sm:$0xff]
                  %321 = vst [vmem:[%s301 + $0x48] sm:$0xff] %v320
                  %v322 = vld [vmem:[%s300 + $0x50] sm:$0xff]
                  %323 = vst [vmem:[%s301 + $0x50] sm:$0xff] %v322
                  %v324 = vld [vmem:[%s300 + $0x58] sm:$0xff]
                  %325 = vst [vmem:[%s301 + $0x58] sm:$0xff] %v324
                  %v326 = vld [vmem:[%s300 + $0x60] sm:$0xff]
                  %327 = vst [vmem:[%s301 + $0x60] sm:$0xff] %v326
                  %v328 = vld [vmem:[%s300 + $0x68] sm:$0xff]
                  %329 = vst [vmem:[%s301 + $0x68] sm:$0xff] %v328
                  %v330 = vld [vmem:[%s300 + $0x70] sm:$0xff]
                  %331 = vst [vmem:[%s301 + $0x70] sm:$0xff] %v330
                  %v332 = vld [vmem:[%s300 + $0x78] sm:$0xff]
                  %333 = vst [vmem:[%s301 + $0x78] sm:$0xff] %v332
                  %v334 = vld [vmem:[%s300 + $0x80] sm:$0xff]
                  %335 = vst [vmem:[%s301 + $0x80] sm:$0xff] %v334
                  %v336 = vld [vmem:[%s300 + $0x88] sm:$0xff]
                  %337 = vst [vmem:[%s301 + $0x88] sm:$0xff] %v336
                  %v338 = vld [vmem:[%s300 + $0x90] sm:$0xff]
                  %339 = vst [vmem:[%s301 + $0x90] sm:$0xff] %v338
                  %v340 = vld [vmem:[%s300 + $0x98] sm:$0xff]
                  %341 = vst [vmem:[%s301 + $0x98] sm:$0xff] %v340
                  %v342 = vld [vmem:[%s300 + $0xa0] sm:$0xff]
                  %343 = vst [vmem:[%s301 + $0xa0] sm:$0xff] %v342
                  %v344 = vld [vmem:[%s300 + $0xa8] sm:$0xff]
                  %345 = vst [vmem:[%s301 + $0xa8] sm:$0xff] %v344
                  %v346 = vld [vmem:[%s300 + $0xb0] sm:$0xff]
                  %347 = vst [vmem:[%s301 + $0xb0] sm:$0xff] %v346
                  %v348 = vld [vmem:[%s300 + $0xb8] sm:$0xff]
                  %349 = vst [vmem:[%s301 + $0xb8] sm:$0xff] %v348
                  %v350 = vld [vmem:[%s300 + $0xc0] sm:$0xff]
                  %351 = vst [vmem:[%s301 + $0xc0] sm:$0xff] %v350
                  %v352 = vld [vmem:[%s300 + $0xc8] sm:$0xff]
                  %353 = vst [vmem:[%s301 + $0xc8] sm:$0xff] %v352
                  %v354 = vld [vmem:[%s300 + $0xd0] sm:$0xff]
                  %355 = vst [vmem:[%s301 + $0xd0] sm:$0xff] %v354
                  %v356 = vld [vmem:[%s300 + $0xd8] sm:$0xff]
                  %357 = vst [vmem:[%s301 + $0xd8] sm:$0xff] %v356
                  %v358 = vld [vmem:[%s300 + $0xe0] sm:$0xff]
                  %359 = vst [vmem:[%s301 + $0xe0] sm:$0xff] %v358
                  %v360 = vld [vmem:[%s300 + $0xe8] sm:$0xff]
                  %361 = vst [vmem:[%s301 + $0xe8] sm:$0xff] %v360
                  %v362 = vld [vmem:[%s300 + $0xf0] sm:$0xff]
                  %363 = vst [vmem:[%s301 + $0xf0] sm:$0xff] %v362
                  %v364 = vld [vmem:[%s300 + $0xf8] sm:$0xff]
                  %365 = vst [vmem:[%s301 + $0xf8] sm:$0xff] %v364
                  %v366 = vld [vmem:[%s300 + $0x50] sm:$0xff]
                  %367 = vst [vmem:[%s301 + $0x20] sm:$0xff] %v366
                  %v368 = vld [vmem:[%s300 + $0x58] sm:$0xff]
                  %369 = vst [vmem:[%s301 + $0x28] sm:$0xff] %v368
                  %v370 = vld [vmem:[%s300 + $0x60] sm:$0xff]
                  %371 = vst [vmem:[%s301 + $0x30] sm:$0xff] %v370
                  %v372 = vld [vmem:[%s300 + $0x68] sm:$0xff]
                  %373 = vst [vmem:[%s301 + $0x38] sm:$0xff] %v372
                  %v374 = vld [vmem:[%s300 + $0x70] sm:$0xff]
                  %375 = vst [vmem:[%s301 + $0x40] sm:$0xff] %v374
                  %v376 = vld [vmem:[%s300 + $0x78] sm:$0xff]
                  %377 = vst [vmem:[%s301 + $0x48] sm:$0xff] %v376
                  %v378 = vld [vmem:[%s300 + $0x80] sm:$0xff]
                  %379 = vst [vmem:[%s301 + $0x50] sm:$0xff] %v378
                  %v380 = vld [vmem:[%s300 + $0x88] sm:$0xff]
                  %381 = vst [vmem:[%s301 + $0x58] sm:$0xff] %v380
                  %v382 = vld [vmem:[%s300 + $0x90] sm:$0xff]
                  %383 = vst [vmem:[%s301 + $0x60] sm:$0xff] %v382
                  %v384 = vld [vmem:[%s300 + $0x98] sm:$0xff]
                  %385 = vst [vmem:[%s301 + $0x68] sm:$0xff] %v384
                  %v386 = vld [vmem:[%s300 + $0xa0] sm:$0xff]
                  %387 = vst [vmem:[%s301 + $0x70] sm:$0xff] %v386
                  %v388 = vld [vmem:[%s300 + $0xa8] sm:$0xff]
                  %389 = vst [vmem:[%s301 + $0x78] sm:$0xff] %v388
                  %v390 = vld [vmem:[%s300 + $0xb0] sm:$0xff]
                  %391 = vst [vmem:[%s301 + $0x80] sm:$0xff] %v390
                  %v392 = vld [vmem:[%s300 + $0xb8] sm:$0xff]
                  %393 = vst [vmem:[%s301 + $0x88] sm:$0xff] %v392
                  %v394 = vld [vmem:[%s300 + $0xc0] sm:$0xff]
                  %395 = vst [vmem:[%s301 + $0x90] sm:$0xff] %v394
                  %v396 = vld [vmem:[%s300 + $0xc8] sm:$0xff]
                  %397 = vst [vmem:[%s301 + $0x98] sm:$0xff] %v396
                  %v398 = vld [vmem:[%s300 + $0xd0] sm:$0xff]
                  %399 = vst [vmem:[%s301 + $0xa0] sm:$0xff] %v398
                  %v400 = vld [vmem:[%s300 + $0xd8] sm:$0xff]
                  %401 = vst [vmem:[%s301 + $0xa8] sm:$0xff] %v400
                  %v402 = vld [vmem:[%s300 + $0xe0] sm:$0xff]
                  %403 = vst [vmem:[%s301 + $0xb0] sm:$0xff] %v402
                  %v404 = vld [vmem:[%s300 + $0xe8] sm:$0xff]
                  %405 = vst [vmem:[%s301 + $0xb8] sm:$0xff] %v404
                  %v406 = vld [vmem:[%s300 + $0xf0] sm:$0xff]
                  %407 = vst [vmem:[%s301 + $0xc0] sm:$0xff] %v406
                  %v408 = vld [vmem:[%s300 + $0xf8] sm:$0xff]
                  %409 = vst [vmem:[%s301 + $0xc8] sm:$0xff] %v408
                  %v410 = vld [vmem:[%s300 + $0x100] sm:$0xff]
                  %411 = vst [vmem:[%s301 + $0xd0] sm:$0xff] %v410
                  %v412 = vld [vmem:[%s300 + $0x108] sm:$0xff]
                  %413 = vst [vmem:[%s301 + $0xd8] sm:$0xff] %v412
                  %v414 = vld [vmem:[%s300 + $0x110] sm:$0xff]
                  %415 = vst [vmem:[%s301 + $0xe0] sm:$0xff] %v414
                  %v416 = vld [vmem:[%s300 + $0x118] sm:$0xff]
                  %417 = vst [vmem:[%s301 + $0xe8] sm:$0xff] %v416
                  %v418 = vld [vmem:[%s300 + $0x120] sm:$0xff]
                  %419 = vst [vmem:[%s301 + $0xf0] sm:$0xff] %v418
                  %v420 = vld [vmem:[%s300 + $0x128] sm:$0xff]
                  %421 = vst [vmem:[%s301 + $0xf8] sm:$0xff] %v420
                  %v422 = vld [vmem:[%s300 + $0x130] sm:$0xff]
                  %423 = vst [vmem:[%s301 + $0x100] sm:$0xff] %v422
                  %v424 = vld [vmem:[%s300 + $0x138] sm:$0xff]
                  %425 = vst [vmem:[%s301 + $0x108] sm:$0xff] %v424
                  %v426 = vld [vmem:[%s300 + $0x140] sm:$0xff]
                  %427 = vst [vmem:[%s301 + $0x110] sm:$0xff] %v426
                  %v428 = vld [vmem:[%s300 + $0x148] sm:$0xff]
                  %429 = vst [vmem:[%s301 + $0x118] sm:$0xff] %v428
                  %s430 = sadd.s32 1, %s299
                  %p431 = scmp.ge.s32.totalorder %s430, %s290
                  %s432 = scalar_select %p431, 0, %s430
                  %s433 = smul.u32 %s432, 256
                  %s434 = smul.u32 %s432, 256
                  %s435 = scalar_lea.vmem %s258, %s433
                  %s436 = scalar_lea.vmem %s248, %s434 [#allocation2]
                $region72: #{stnkd_forward.2} parent=66 // loop_footer
                  %s296 = sadd.s32 %s294, 1
                $region73: #{stnkd_forward.2} parent=66 // loop_footer_branch
                  %293 = sbr.rel target = $region69
                $region74: #{stnkd_forward.2} parent=66 // loop_exit
                  _
                %s437 = sshrl.u32 %s289, 5
                %s438 = sand.u32 %s289, 31
                %s439 = smul.u32 %s437, 32
                %s440 = smul.u32 128, %s439
                %s441 = sshra.s32 %s440, 4
                %s442 = scalar_lea.vmem %s258, %s441
                %s443 = smul.u32 128, %s439
                %s444 = sshra.s32 %s443, 4
                %s445 = scalar_lea.vmem %s248, %s444 [#allocation2]
                // While loop
                $region75: #{stnkd_forward.2} parent=66 // loop_pre_header
                  _
                $region76: #{stnkd_forward.2} parent=66 // loop_header
                  %s449 = sphi 0, %s451
                  %p450 = scmp.ge.s32.totalorder %s449, %s438
                  %s454 = sphi 0, %s463
                  %s455 = sphi %s442, %s466
                  %s456 = sphi %s445, %s467
                $region77: #{stnkd_forward.2} parent=66 // loop_header_branch
                  %453 = sbr.rel (%p450) target = $region81
                $region78: #{stnkd_forward.2} parent=66 // loop_body
                  %v457 = vld [vmem:[%s455] sm:$0xff]
                  %458 = vst [vmem:[%s456] sm:$0xff] %v457
                  %v459 = vld [vmem:[%s455 + $0x50] sm:$0xff]
                  %460 = vst [vmem:[%s456 + $0x20] sm:$0xff] %v459
                  %s461 = sadd.s32 1, %s454
                  %p462 = scmp.ge.s32.totalorder %s461, %s438
                  %s463 = scalar_select %p462, 0, %s461
                  %s464 = smul.u32 %s463, 8
                  %s465 = smul.u32 %s463, 8
                  %s466 = scalar_lea.vmem %s442, %s464
                  %s467 = scalar_lea.vmem %s445, %s465 [#allocation2]
                $region79: #{stnkd_forward.2} parent=66 // loop_footer
                  %s451 = sadd.s32 %s449, 1
                $region80: #{stnkd_forward.2} parent=66 // loop_footer_branch
                  %448 = sbr.rel target = $region76
                $region81: #{stnkd_forward.2} parent=66 // loop_exit
                  _
              $region67: #{stnkd_forward.2} parent=51 // pred_fallthru
                _
              %p468 = pneg %p285
              // Predicated region
              $region82: #{stnkd_forward.2} parent=51 // pred_check
                _
              $region83: #{stnkd_forward.2} parent=51 // pred_check_branch
                %470 = sbr.rel (%p285) target = $region85
              $region84: #{stnkd_forward.2} parent=51 // pred_region
                %s471 = sand.u32 %s259, 7
                %s472 = ssub.s32 %s259, %s471
                %s473 = scalar_lea.vmem %s258, %s472
                %s474 = ssub.s32 %s259, %s471
                %s475 = scalar_lea.vmem %s248, %s474 [#allocation2]
                %s476 = sshrl.u32 %s259, 3
                %s477 = sshrl.u32 %s476, 5
                // While loop
                $region86: #{stnkd_forward.2} parent=84 // loop_pre_header
                  _
                $region87: #{stnkd_forward.2} parent=84 // loop_header
                  %s481 = sphi 0, %s483
                  %p482 = scmp.ge.s32.totalorder %s481, %s477
                  %s486 = sphi 0, %s619
                  %s487 = sphi %s258, %s622
                  %s488 = sphi %s248, %s623
                $region88: #{stnkd_forward.2} parent=84 // loop_header_branch
                  %485 = sbr.rel (%p482) target = $region92
                $region89: #{stnkd_forward.2} parent=84 // loop_body
                  %v489 = vld [vmem:[%s487] sm:$0xff]
                  %490 = vst [vmem:[%s488] sm:$0xff] %v489
                  %v491 = vld [vmem:[%s487 + $0x8] sm:$0xff]
                  %492 = vst [vmem:[%s488 + $0x8] sm:$0xff] %v491
                  %v493 = vld [vmem:[%s487 + $0x10] sm:$0xff]
                  %494 = vst [vmem:[%s488 + $0x10] sm:$0xff] %v493
                  %v495 = vld [vmem:[%s487 + $0x18] sm:$0xff]
                  %496 = vst [vmem:[%s488 + $0x18] sm:$0xff] %v495
                  %v497 = vld [vmem:[%s487 + $0x20] sm:$0xff]
                  %498 = vst [vmem:[%s488 + $0x20] sm:$0xff] %v497
                  %v499 = vld [vmem:[%s487 + $0x28] sm:$0xff]
                  %500 = vst [vmem:[%s488 + $0x28] sm:$0xff] %v499
                  %v501 = vld [vmem:[%s487 + $0x30] sm:$0xff]
                  %502 = vst [vmem:[%s488 + $0x30] sm:$0xff] %v501
                  %v503 = vld [vmem:[%s487 + $0x38] sm:$0xff]
                  %504 = vst [vmem:[%s488 + $0x38] sm:$0xff] %v503
                  %v505 = vld [vmem:[%s487 + $0x40] sm:$0xff]
                  %506 = vst [vmem:[%s488 + $0x40] sm:$0xff] %v505
                  %v507 = vld [vmem:[%s487 + $0x48] sm:$0xff]
                  %508 = vst [vmem:[%s488 + $0x48] sm:$0xff] %v507
                  %v509 = vld [vmem:[%s487 + $0x50] sm:$0xff]
                  %510 = vst [vmem:[%s488 + $0x50] sm:$0xff] %v509
                  %v511 = vld [vmem:[%s487 + $0x58] sm:$0xff]
                  %512 = vst [vmem:[%s488 + $0x58] sm:$0xff] %v511
                  %v513 = vld [vmem:[%s487 + $0x60] sm:$0xff]
                  %514 = vst [vmem:[%s488 + $0x60] sm:$0xff] %v513
                  %v515 = vld [vmem:[%s487 + $0x68] sm:$0xff]
                  %516 = vst [vmem:[%s488 + $0x68] sm:$0xff] %v515
                  %v517 = vld [vmem:[%s487 + $0x70] sm:$0xff]
                  %518 = vst [vmem:[%s488 + $0x70] sm:$0xff] %v517
                  %v519 = vld [vmem:[%s487 + $0x78] sm:$0xff]
                  %520 = vst [vmem:[%s488 + $0x78] sm:$0xff] %v519
                  %v521 = vld [vmem:[%s487 + $0x80] sm:$0xff]
                  %522 = vst [vmem:[%s488 + $0x80] sm:$0xff] %v521
                  %v523 = vld [vmem:[%s487 + $0x88] sm:$0xff]
                  %524 = vst [vmem:[%s488 + $0x88] sm:$0xff] %v523
                  %v525 = vld [vmem:[%s487 + $0x90] sm:$0xff]
                  %526 = vst [vmem:[%s488 + $0x90] sm:$0xff] %v525
                  %v527 = vld [vmem:[%s487 + $0x98] sm:$0xff]
                  %528 = vst [vmem:[%s488 + $0x98] sm:$0xff] %v527
                  %v529 = vld [vmem:[%s487 + $0xa0] sm:$0xff]
                  %530 = vst [vmem:[%s488 + $0xa0] sm:$0xff] %v529
                  %v531 = vld [vmem:[%s487 + $0xa8] sm:$0xff]
                  %532 = vst [vmem:[%s488 + $0xa8] sm:$0xff] %v531
                  %v533 = vld [vmem:[%s487 + $0xb0] sm:$0xff]
                  %534 = vst [vmem:[%s488 + $0xb0] sm:$0xff] %v533
                  %v535 = vld [vmem:[%s487 + $0xb8] sm:$0xff]
                  %536 = vst [vmem:[%s488 + $0xb8] sm:$0xff] %v535
                  %v537 = vld [vmem:[%s487 + $0xc0] sm:$0xff]
                  %538 = vst [vmem:[%s488 + $0xc0] sm:$0xff] %v537
                  %v539 = vld [vmem:[%s487 + $0xc8] sm:$0xff]
                  %540 = vst [vmem:[%s488 + $0xc8] sm:$0xff] %v539
                  %v541 = vld [vmem:[%s487 + $0xd0] sm:$0xff]
                  %542 = vst [vmem:[%s488 + $0xd0] sm:$0xff] %v541
                  %v543 = vld [vmem:[%s487 + $0xd8] sm:$0xff]
                  %544 = vst [vmem:[%s488 + $0xd8] sm:$0xff] %v543
                  %v545 = vld [vmem:[%s487 + $0xe0] sm:$0xff]
                  %546 = vst [vmem:[%s488 + $0xe0] sm:$0xff] %v545
                  %v547 = vld [vmem:[%s487 + $0xe8] sm:$0xff]
                  %548 = vst [vmem:[%s488 + $0xe8] sm:$0xff] %v547
                  %v549 = vld [vmem:[%s487 + $0xf0] sm:$0xff]
                  %550 = vst [vmem:[%s488 + $0xf0] sm:$0xff] %v549
                  %v551 = vld [vmem:[%s487 + $0xf8] sm:$0xff]
                  %552 = vst [vmem:[%s488 + $0xf8] sm:$0xff] %v551
                  %v553 = vld [vmem:[%s487 + $0x50] sm:$0xff]
                  %554 = vst [vmem:[%s488 + $0x20] sm:$0xff] %v553
                  %v555 = vld [vmem:[%s487 + $0x58] sm:$0xff]
                  %556 = vst [vmem:[%s488 + $0x28] sm:$0xff] %v555
                  %v557 = vld [vmem:[%s487 + $0x60] sm:$0xff]
                  %558 = vst [vmem:[%s488 + $0x30] sm:$0xff] %v557
                  %v559 = vld [vmem:[%s487 + $0x68] sm:$0xff]
                  %560 = vst [vmem:[%s488 + $0x38] sm:$0xff] %v559
                  %v561 = vld [vmem:[%s487 + $0x70] sm:$0xff]
                  %562 = vst [vmem:[%s488 + $0x40] sm:$0xff] %v561
                  %v563 = vld [vmem:[%s487 + $0x78] sm:$0xff]
                  %564 = vst [vmem:[%s488 + $0x48] sm:$0xff] %v563
                  %v565 = vld [vmem:[%s487 + $0x80] sm:$0xff]
                  %566 = vst [vmem:[%s488 + $0x50] sm:$0xff] %v565
                  %v567 = vld [vmem:[%s487 + $0x88] sm:$0xff]
                  %568 = vst [vmem:[%s488 + $0x58] sm:$0xff] %v567
                  %v569 = vld [vmem:[%s487 + $0x90] sm:$0xff]
                  %570 = vst [vmem:[%s488 + $0x60] sm:$0xff] %v569
                  %v571 = vld [vmem:[%s487 + $0x98] sm:$0xff]
                  %572 = vst [vmem:[%s488 + $0x68] sm:$0xff] %v571
                  %v573 = vld [vmem:[%s487 + $0xa0] sm:$0xff]
                  %574 = vst [vmem:[%s488 + $0x70] sm:$0xff] %v573
                  %v575 = vld [vmem:[%s487 + $0xa8] sm:$0xff]
                  %576 = vst [vmem:[%s488 + $0x78] sm:$0xff] %v575
                  %v577 = vld [vmem:[%s487 + $0xb0] sm:$0xff]
                  %578 = vst [vmem:[%s488 + $0x80] sm:$0xff] %v577
                  %v579 = vld [vmem:[%s487 + $0xb8] sm:$0xff]
                  %580 = vst [vmem:[%s488 + $0x88] sm:$0xff] %v579
                  %v581 = vld [vmem:[%s487 + $0xc0] sm:$0xff]
                  %582 = vst [vmem:[%s488 + $0x90] sm:$0xff] %v581
                  %v583 = vld [vmem:[%s487 + $0xc8] sm:$0xff]
                  %584 = vst [vmem:[%s488 + $0x98] sm:$0xff] %v583
                  %v585 = vld [vmem:[%s487 + $0xd0] sm:$0xff]
                  %586 = vst [vmem:[%s488 + $0xa0] sm:$0xff] %v585
                  %v587 = vld [vmem:[%s487 + $0xd8] sm:$0xff]
                  %588 = vst [vmem:[%s488 + $0xa8] sm:$0xff] %v587
                  %v589 = vld [vmem:[%s487 + $0xe0] sm:$0xff]
                  %590 = vst [vmem:[%s488 + $0xb0] sm:$0xff] %v589
                  %v591 = vld [vmem:[%s487 + $0xe8] sm:$0xff]
                  %592 = vst [vmem:[%s488 + $0xb8] sm:$0xff] %v591
                  %v593 = vld [vmem:[%s487 + $0xf0] sm:$0xff]
                  %594 = vst [vmem:[%s488 + $0xc0] sm:$0xff] %v593
                  %v595 = vld [vmem:[%s487 + $0xf8] sm:$0xff]
                  %596 = vst [vmem:[%s488 + $0xc8] sm:$0xff] %v595
                  %v597 = vld [vmem:[%s487 + $0x100] sm:$0xff]
                  %598 = vst [vmem:[%s488 + $0xd0] sm:$0xff] %v597
                  %v599 = vld [vmem:[%s487 + $0x108] sm:$0xff]
                  %600 = vst [vmem:[%s488 + $0xd8] sm:$0xff] %v599
                  %v601 = vld [vmem:[%s487 + $0x110] sm:$0xff]
                  %602 = vst [vmem:[%s488 + $0xe0] sm:$0xff] %v601
                  %v603 = vld [vmem:[%s487 + $0x118] sm:$0xff]
                  %604 = vst [vmem:[%s488 + $0xe8] sm:$0xff] %v603
                  %v605 = vld [vmem:[%s487 + $0x120] sm:$0xff]
                  %606 = vst [vmem:[%s488 + $0xf0] sm:$0xff] %v605
                  %v607 = vld [vmem:[%s487 + $0x128] sm:$0xff]
                  %608 = vst [vmem:[%s488 + $0xf8] sm:$0xff] %v607
                  %v609 = vld [vmem:[%s487 + $0x130] sm:$0xff]
                  %610 = vst [vmem:[%s488 + $0x100] sm:$0xff] %v609
                  %v611 = vld [vmem:[%s487 + $0x138] sm:$0xff]
                  %612 = vst [vmem:[%s488 + $0x108] sm:$0xff] %v611
                  %v613 = vld [vmem:[%s487 + $0x140] sm:$0xff]
                  %614 = vst [vmem:[%s488 + $0x110] sm:$0xff] %v613
                  %v615 = vld [vmem:[%s487 + $0x148] sm:$0xff]
                  %616 = vst [vmem:[%s488 + $0x118] sm:$0xff] %v615
                  %s617 = sadd.s32 1, %s486
                  %p618 = scmp.ge.s32.totalorder %s617, %s477
                  %s619 = scalar_select %p618, 0, %s617
                  %s620 = smul.u32 %s619, 256
                  %s621 = smul.u32 %s619, 256
                  %s622 = scalar_lea.vmem %s258, %s620
                  %s623 = scalar_lea.vmem %s248, %s621 [#allocation2]
                $region90: #{stnkd_forward.2} parent=84 // loop_footer
                  %s483 = sadd.s32 %s481, 1
                $region91: #{stnkd_forward.2} parent=84 // loop_footer_branch
                  %480 = sbr.rel target = $region87
                $region92: #{stnkd_forward.2} parent=84 // loop_exit
                  _
                %s624 = sshrl.u32 %s476, 5
                %s625 = sand.u32 %s476, 31
                %s626 = smul.u32 %s624, 32
                %s627 = smul.u32 128, %s626
                %s628 = sshra.s32 %s627, 4
                %s629 = scalar_lea.vmem %s258, %s628
                %s630 = smul.u32 128, %s626
                %s631 = sshra.s32 %s630, 4
                %s632 = scalar_lea.vmem %s248, %s631 [#allocation2]
                // While loop
                $region93: #{stnkd_forward.2} parent=84 // loop_pre_header
                  _
                $region94: #{stnkd_forward.2} parent=84 // loop_header
                  %s636 = sphi 0, %s638
                  %p637 = scmp.ge.s32.totalorder %s636, %s625
                  %s641 = sphi 0, %s650
                  %s642 = sphi %s629, %s653
                  %s643 = sphi %s632, %s654
                $region95: #{stnkd_forward.2} parent=84 // loop_header_branch
                  %640 = sbr.rel (%p637) target = $region99
                $region96: #{stnkd_forward.2} parent=84 // loop_body
                  %v644 = vld [vmem:[%s642] sm:$0xff]
                  %645 = vst [vmem:[%s643] sm:$0xff] %v644
                  %v646 = vld [vmem:[%s642 + $0x50] sm:$0xff]
                  %647 = vst [vmem:[%s643 + $0x20] sm:$0xff] %v646
                  %s648 = sadd.s32 1, %s641
                  %p649 = scmp.ge.s32.totalorder %s648, %s625
                  %s650 = scalar_select %p649, 0, %s648
                  %s651 = smul.u32 %s650, 8
                  %s652 = smul.u32 %s650, 8
                  %s653 = scalar_lea.vmem %s629, %s651
                  %s654 = scalar_lea.vmem %s632, %s652 [#allocation2]
                $region97: #{stnkd_forward.2} parent=84 // loop_footer
                  %s638 = sadd.s32 %s636, 1
                $region98: #{stnkd_forward.2} parent=84 // loop_footer_branch
                  %635 = sbr.rel target = $region94
                $region99: #{stnkd_forward.2} parent=84 // loop_exit
                  _
                %s655 = sshll.u32 1, %s471
                %s656 = ssub.s32 %s655, 1
                loop: start=0, step=1, limit=1
                $region100: #{stnkd_forward.2} parent=84 // loop_pre_header
                  _
                $region101: #{stnkd_forward.2} parent=84 // loop_header
                  %s658 = sphi 0, %s662
                  %p659 = scmp.ge.s32.totalorder %s658, 1
                  %s663 = sphi %s473, %s473
                  %s664 = sphi %s475, %s475
                $region102: #{stnkd_forward.2} parent=84 // loop_header_branch
                  %661 = sbr.rel (%p659) target = $region106
                $region103: #{stnkd_forward.2} parent=84 // loop_body
                  %v665 = vld [vmem:[%s663] sm:%s656]
                  %666 = vst [vmem:[%s664] sm:%s656] %v665
                  %v667 = vld [vmem:[%s663 + $0x50] sm:%s656]
                  %668 = vst [vmem:[%s664 + $0x20] sm:%s656] %v667
                $region104: #{stnkd_forward.2} parent=84 // loop_footer
                  %s662 = sadd.s32 1, %s658
                $region105: #{stnkd_forward.2} parent=84 // loop_footer_branch
                  %657 = sbr.rel target = $region101
                $region106: #{stnkd_forward.2} parent=84 // loop_exit
                  _
              $region85: #{stnkd_forward.2} parent=51 // pred_fallthru
                _
            $region52: #{stnkd_forward.2} parent=47 // pred_fallthru
              _
            // Predicated region
            $region53: #{stnkd_forward.2} parent=47 // pred_check
              %p267 = pneg %p263
            $region54: #{stnkd_forward.2} parent=47 // pred_check_branch
              %269 = sbr.rel (%p267) target = $region56
            $region55: #{stnkd_forward.2} parent=47 // pred_region
              %s270 = sshll.u32 1, %s259
              %s271 = ssub.s32 %s270, 1
              loop: start=0, step=1, limit=1
              $region57: #{stnkd_forward.2} parent=55 // loop_pre_header
                _
              $region58: #{stnkd_forward.2} parent=55 // loop_header
                %s273 = sphi 0, %s277
                %p274 = scmp.ge.s32.totalorder %s273, 1
                %s278 = sphi %s258, %s258
                %s279 = sphi %s248, %s248
              $region59: #{stnkd_forward.2} parent=55 // loop_header_branch
                %276 = sbr.rel (%p274) target = $region63
              $region60: #{stnkd_forward.2} parent=55 // loop_body
                %v280 = vld [vmem:[%s278] sm:%s271]
                %281 = vst [vmem:[%s279] sm:%s271] %v280
                %v282 = vld [vmem:[%s278 + $0x50] sm:%s271]
                %283 = vst [vmem:[%s279 + $0x20] sm:%s271] %v282
              $region61: #{stnkd_forward.2} parent=55 // loop_footer
                %s277 = sadd.s32 1, %s273
              $region62: #{stnkd_forward.2} parent=55 // loop_footer_branch
                %272 = sbr.rel target = $region58
              $region63: #{stnkd_forward.2} parent=55 // loop_exit
                _
            $region56: #{stnkd_forward.2} parent=47 // pred_fallthru
              _
          $region48: #{stnkd_forward.2} parent=43 // pred_fallthru
            _
          %669 = vnop
        $region44: #{stnkd_forward.2} parent=39 // pred_fallthru
          _
      $region40: #{stnkd_forward.2} parent=5 // pred_fallthru
        _
      %p670 = scmp.le.s32.totalorder 1, %s13
      %p671 = scmp.lt.s32.totalorder %s13, 13
      %p672 = pnand %p670, %p671
      %p673 = pneg %p672
      // Predicated region
      $region107: #{stnkd_forward.2} parent=5 // pred_check
        _
      $region108: #{stnkd_forward.2} parent=5 // pred_check_branch
        %675 = sbr.rel (%p672) target = $region110
      $region109: #{stnkd_forward.2} parent=5 // pred_region
        %s676 = ssub.s32 %s13, 1
        %s677 = sand.u32 %s40, 1
        %s678 = sand.u32 %s40, 1
        %s679 = smul.addr %s678, 64
        %s680 = scalar_lea.vmem [#allocation2], %s679
        // Predicated region
        $region111: #{stnkd_forward.2} parent=109 // pred_check
          %p681 = pneg %p53
        $region112: #{stnkd_forward.2} parent=109 // pred_check_branch
          %683 = sbr.rel (%p681) target = $region114
        $region113: #{stnkd_forward.2} parent=109 // pred_region
          _
        $region114: #{stnkd_forward.2} parent=109 // pred_fallthru
          _
        %s684 = sand.u32 %s40, 1
        %s685 = sand.u32 %s40, 1
        %s686 = smul.addr %s685, 64
        %s687 = scalar_lea.vmem [#allocation2], %s686
        %p688 = pneg %p53
        %p689 = pneg %p50
        %p690 = pneg %p74
        %p691 = pneg %p71
        %p692 = pneg %p95
        %p693 = pneg %p92
        %p694 = pneg %p116
        %p695 = pneg %p113
        %p696 = pneg %p137
        %p697 = pneg %p134
        %p698 = pneg %p158
        %p699 = pneg %p155
        %p700 = pneg %p179
        %p701 = pneg %p176
        %p702 = pneg %p205
        %p703 = pneg %p202
        %p704 = scmp.lt.s32.totalorder %s22, 3
        %s705 = scalar_select %p704, %s22, 3
        %s706 = smul.addr %s705, 4
        %s707 = scalar_lea.vmem %s7, %s706
        %s708 = smul.u32 4, %s23
        %s709 = ssub.s32 10, %s708
        %p710 = scmp.lt.s32.totalorder %s709, 4
        %s711 = scalar_select %p710, %s709, 4
        %s712 = smul.u32 256, %s711
        %p713 = scmp.lt.s32.totalorder %s22, 3
        %s714 = scalar_select %p713, %s22, 3
        %s715 = smul.addr %s714, 4
        %s716 = scalar_lea.vmem %s7, %s715
        %v720 = vld [vmem:[%s680] sm:$0xff]
        %v721 = vld [vmem:[%s680 + $0x8] sm:$0xff]
        %v722 = vld [vmem:[%s680 + $0x10] sm:$0xff]
        %v723 = vld [vmem:[%s680 + $0x18] sm:$0xff]
        %v724 = vld [vmem:[%s680 + $0x20] sm:$0xff]
        %v725 = vld [vmem:[%s680 + $0x28] sm:$0xff]
        %v726 = vld [vmem:[%s680 + $0x30] sm:$0xff]
        %v727 = vld [vmem:[%s680 + $0x38] sm:$0xff]
        %v728 = vpack.c.bf16 %v724, %v720
        %v729 = vpack.c.bf16 %v725, %v721
        %v730 = vpack.c.bf16 %v726, %v722
        %v731 = vpack.c.bf16 %v727, %v723
        %v732 = vld [vmem:[%s1] sm:$0xf]
        %v733 = vld [vmem:[%s1 + $0x4] sm:$0xf]
        %v734 = vld [vmem:[%s2] sm:$0x1]
        %v736 = vlaneseq
        %v737 = vshrl.u32 %v736, 7
        %v738 = vsub.s32 0, %v737
        %v739 = vrot.slane %v734, %v738
        %741 = vxpose.xlu0.c.b16.start [1/8] %v728, 128
        %742 = vxpose.xlu0.c.b16.cont [2/8] 0, 128
        %743 = vxpose.xlu0.c.b16.cont [3/8] 0, 128
        %744 = vxpose.xlu0.c.b16.cont [4/8] 0, 128
        %745 = vxpose.xlu0.c.b16.cont [5/8] 0, 128
        %746 = vxpose.xlu0.c.b16.cont [6/8] 0, 128
        %747 = vxpose.xlu0.c.b16.cont [7/8] 0, 128
        %748 = vxpose.xlu0.c.b16.end [8/8] 0, 128
        %v749 = vpop.trf.xlu0
        %v750 = vpop.trf.xlu0
        %v751 = vpop.trf.xlu0
        %v752 = vpop.trf.xlu0
        %v753 = vpop.trf.xlu0
        %v754 = vpop.trf.xlu0
        %v755 = vpop.trf.xlu0
        %v756 = vpop.trf.xlu0
        %757 = vxpose.xlu0.c.b16.start [1/8] %v729, 128
        %758 = vxpose.xlu0.c.b16.cont [2/8] 0, 128
        %759 = vxpose.xlu0.c.b16.cont [3/8] 0, 128
        %760 = vxpose.xlu0.c.b16.cont [4/8] 0, 128
        %761 = vxpose.xlu0.c.b16.cont [5/8] 0, 128
        %762 = vxpose.xlu0.c.b16.cont [6/8] 0, 128
        %763 = vxpose.xlu0.c.b16.cont [7/8] 0, 128
        %764 = vxpose.xlu0.c.b16.end [8/8] 0, 128
        %v765 = vpop.trf.xlu0
        %v766 = vpop.trf.xlu0
        %v767 = vpop.trf.xlu0
        %v768 = vpop.trf.xlu0
        %v769 = vpop.trf.xlu0
        %v770 = vpop.trf.xlu0
        %v771 = vpop.trf.xlu0
        %v772 = vpop.trf.xlu0
        %773 = vxpose.xlu0.c.b16.start [1/8] %v730, 128
        %774 = vxpose.xlu0.c.b16.cont [2/8] 0, 128
        %775 = vxpose.xlu0.c.b16.cont [3/8] 0, 128
        %776 = vxpose.xlu0.c.b16.cont [4/8] 0, 128
        %777 = vxpose.xlu0.c.b16.cont [5/8] 0, 128
        %778 = vxpose.xlu0.c.b16.cont [6/8] 0, 128
        %779 = vxpose.xlu0.c.b16.cont [7/8] 0, 128
        %780 = vxpose.xlu0.c.b16.end [8/8] 0, 128
        %v781 = vpop.trf.xlu0
        %v782 = vpop.trf.xlu0
        %v783 = vpop.trf.xlu0
        %v784 = vpop.trf.xlu0
        %v785 = vpop.trf.xlu0
        %v786 = vpop.trf.xlu0
        %v787 = vpop.trf.xlu0
        %v788 = vpop.trf.xlu0
        %789 = vxpose.xlu0.c.b16.start [1/8] %v731, 128
        %790 = vxpose.xlu0.c.b16.cont [2/8] 0, 128
        %791 = vxpose.xlu0.c.b16.cont [3/8] 0, 128
        %792 = vxpose.xlu0.c.b16.cont [4/8] 0, 128
        %793 = vxpose.xlu0.c.b16.cont [5/8] 0, 128
        %794 = vxpose.xlu0.c.b16.cont [6/8] 0, 128
        %795 = vxpose.xlu0.c.b16.cont [7/8] 0, 128
        %796 = vxpose.xlu0.c.b16.end [8/8] 0, 128
        %v797 = vpop.trf.xlu0
        %v798 = vpop.trf.xlu0
        %v799 = vpop.trf.xlu0
        %v800 = vpop.trf.xlu0
        %v801 = vpop.trf.xlu0
        %v802 = vpop.trf.xlu0
        %v803 = vpop.trf.xlu0
        %v804 = vpop.trf.xlu0
        %v807 = vunpack.c.l.b16 %v732
        %v808 = vunpack.c.l.b16 %v733
        %v809 = vpack.c.b16 %v808, %v807
        %vm811 = vcmask 130048
        %v813 = vsel %vm811, %v749, 0
        %v816 = vsel %vm811, %v750, 0
        %v819 = vsel %vm811, %v751, 0
        %v822 = vsel %vm811, %v752, 0
        %v825 = vsel %vm811, %v753, 0
        %v828 = vsel %vm811, %v754, 0
        %v831 = vsel %vm811, %v755, 0
        %v834 = vsel %vm811, %v756, 0
        %v837 = vsel %vm811, %v765, 0
        %v840 = vsel %vm811, %v766, 0
        %v843 = vsel %vm811, %v767, 0
        %v846 = vsel %vm811, %v768, 0
        %v849 = vsel %vm811, %v769, 0
        %v852 = vsel %vm811, %v770, 0
        %v855 = vsel %vm811, %v771, 0
        %v858 = vsel %vm811, %v772, 0
        %v861 = vsel %vm811, %v781, 0
        %v864 = vsel %vm811, %v782, 0
        %v867 = vsel %vm811, %v783, 0
        %v870 = vsel %vm811, %v784, 0
        %v873 = vsel %vm811, %v785, 0
        %v876 = vsel %vm811, %v786, 0
        %v879 = vsel %vm811, %v787, 0
        %v882 = vsel %vm811, %v788, 0
        %v885 = vsel %vm811, %v797, 0
        %v888 = vsel %vm811, %v798, 0
        %v891 = vsel %vm811, %v799, 0
        %v894 = vsel %vm811, %v800, 0
        %v897 = vsel %vm811, %v801, 0
        %v900 = vsel %vm811, %v802, 0
        %v903 = vsel %vm811, %v803, 0
        %v906 = vsel %vm811, %v804, 0
        %908 = vmatprep.subr.bf16.mxu0 0
        %909 = vmatpush1.bf16.msra.mxu0 0
        %910 = vmatprep.subr.bf16.mxu0 0
        %911 = vmatpush1.bf16.msra.mxu0 0
        %912 = vmatprep.subr.bf16.mxu0 0
        %913 = vmatpush1.bf16.msra.mxu0 0
        %914 = vmatprep.subr.bf16.mxu0 0
        %915 = vmatpush1.bf16.msra.mxu0 0
        %916 = vmatprep.subr.bf16.mxu0 0
        %917 = vmatpush1.bf16.msra.mxu0 0
        %918 = vmatprep.subr.bf16.mxu0 0
        %919 = vmatpush1.bf16.msra.mxu0 0
        %920 = vmatprep.subr.bf16.mxu0 0
        %921 = vmatpush1.bf16.msra.mxu0 0
        %922 = vmatprep.subr.bf16.mxu0 0
        %923 = vmatpush1.bf16.msra.mxu0 %v809
        %924 = vmatprep.subr.bf16.mxu0 0
        %925 = vmatpush2.bf16.msra.mxu0 0
        %926 = vmatprep.subr.bf16.mxu0 0
        %927 = vmatpush2.bf16.msra.mxu0 0
        %928 = vmatprep.subr.bf16.mxu0 0
        %929 = vmatpush2.bf16.msra.mxu0 0
        %930 = vmatprep.subr.bf16.mxu0 0
        %931 = vmatpush2.bf16.msra.mxu0 0
        %932 = vmatprep.subr.bf16.mxu0 0
        %933 = vmatpush2.bf16.msra.mxu0 0
        %934 = vmatprep.subr.bf16.mxu0 0
        %935 = vmatpush2.bf16.msra.mxu0 0
        %936 = vmatprep.subr.bf16.mxu0 0
        %937 = vmatpush2.bf16.msra.mxu0 0
        %938 = vmatprep.subr.bf16.mxu0 0
        %939 = vmatpush2.bf16.msra.mxu0 0
        %940 = vmatprep.mubr.bf16.mxu0 0
        %941 = vmatmul.mubr.bf16.gmra.mxu0 %v813
        %v942 = vpop.f32.mrf.mxu0
        %v943 = vadd.f32 %v739, %v942
        %v944 = vpop.f32.mrf.mxu0
        %v945 = vpop.f32.mrf.mxu0
        %v946 = vadd.f32 %v739, %v945
        %v947 = vpop.f32.mrf.mxu0
        %948 = vmatprep.mubr.bf16.mxu0 0
        %949 = vmatmul.mubr.bf16.gmra.mxu0 %v816
        %v950 = vpop.f32.mrf.mxu0
        %v951 = vadd.f32 %v739, %v950
        %v952 = vpop.f32.mrf.mxu0
        %v953 = vpop.f32.mrf.mxu0
        %v954 = vadd.f32 %v739, %v953
        %v955 = vpop.f32.mrf.mxu0
        %956 = vmatprep.mubr.bf16.mxu0 0
        %957 = vmatmul.mubr.bf16.gmra.mxu0 %v819
        %v958 = vpop.f32.mrf.mxu0
        %v959 = vadd.f32 %v739, %v958
        %v960 = vpop.f32.mrf.mxu0
        %v961 = vpop.f32.mrf.mxu0
        %v962 = vadd.f32 %v739, %v961
        %v963 = vpop.f32.mrf.mxu0
        %964 = vmatprep.mubr.bf16.mxu0 0
        %965 = vmatmul.mubr.bf16.gmra.mxu0 %v822
        %v966 = vpop.f32.mrf.mxu0
        %v967 = vadd.f32 %v739, %v966
        %v968 = vpop.f32.mrf.mxu0
        %v969 = vpop.f32.mrf.mxu0
        %v970 = vadd.f32 %v739, %v969
        %v971 = vpop.f32.mrf.mxu0
        %972 = vmatprep.mubr.bf16.mxu0 0
        %973 = vmatmul.mubr.bf16.gmra.mxu0 %v825
        %v974 = vpop.f32.mrf.mxu0
        %v975 = vadd.f32 %v739, %v974
        %v976 = vpop.f32.mrf.mxu0
        %v977 = vpop.f32.mrf.mxu0
        %v978 = vadd.f32 %v739, %v977
        %v979 = vpop.f32.mrf.mxu0
        %980 = vmatprep.mubr.bf16.mxu0 0
        %981 = vmatmul.mubr.bf16.gmra.mxu0 %v828
        %v982 = vpop.f32.mrf.mxu0
        %v983 = vadd.f32 %v739, %v982
        %v984 = vpop.f32.mrf.mxu0
        %v985 = vpop.f32.mrf.mxu0
        %v986 = vadd.f32 %v739, %v985
        %v987 = vpop.f32.mrf.mxu0
        %988 = vmatprep.mubr.bf16.mxu0 0
        %989 = vmatmul.mubr.bf16.gmra.mxu0 %v831
        %v990 = vpop.f32.mrf.mxu0
        %v991 = vadd.f32 %v739, %v990
        %v992 = vpop.f32.mrf.mxu0
        %v993 = vpop.f32.mrf.mxu0
        %v994 = vadd.f32 %v739, %v993
        %v995 = vpop.f32.mrf.mxu0
        %996 = vmatprep.mubr.bf16.mxu0 0
        %997 = vmatmul.mubr.bf16.gmra.mxu0 %v834
        %v998 = vpop.f32.mrf.mxu0
        %v999 = vadd.f32 %v739, %v998
        %v1000 = vpop.f32.mrf.mxu0
        %v1001 = vpop.f32.mrf.mxu0
        %v1002 = vadd.f32 %v739, %v1001
        %v1003 = vpop.f32.mrf.mxu0
        %1004 = vmatprep.mubr.bf16.mxu0 0
        %1005 = vmatmul.mubr.bf16.gmra.mxu0 %v837
        %v1006 = vpop.f32.mrf.mxu0
        %v1007 = vadd.f32 %v739, %v1006
        %v1008 = vpop.f32.mrf.mxu0
        %v1009 = vpop.f32.mrf.mxu0
        %v1010 = vadd.f32 %v739, %v1009
        %v1011 = vpop.f32.mrf.mxu0
        %1012 = vmatprep.mubr.bf16.mxu0 0
        %1013 = vmatmul.mubr.bf16.gmra.mxu0 %v840
        %v1014 = vpop.f32.mrf.mxu0
        %v1015 = vadd.f32 %v739, %v1014
        %v1016 = vpop.f32.mrf.mxu0
        %v1017 = vpop.f32.mrf.mxu0
        %v1018 = vadd.f32 %v739, %v1017
        %v1019 = vpop.f32.mrf.mxu0
        %1020 = vmatprep.mubr.bf16.mxu0 0
        %1021 = vmatmul.mubr.bf16.gmra.mxu0 %v843
        %v1022 = vpop.f32.mrf.mxu0
        %v1023 = vadd.f32 %v739, %v1022
        %v1024 = vpop.f32.mrf.mxu0
        %v1025 = vpop.f32.mrf.mxu0
        %v1026 = vadd.f32 %v739, %v1025
        %v1027 = vpop.f32.mrf.mxu0
        %1028 = vmatprep.mubr.bf16.mxu0 0
        %1029 = vmatmul.mubr.bf16.gmra.mxu0 %v846
        %v1030 = vpop.f32.mrf.mxu0
        %v1031 = vadd.f32 %v739, %v1030
        %v1032 = vpop.f32.mrf.mxu0
        %v1033 = vpop.f32.mrf.mxu0
        %v1034 = vadd.f32 %v739, %v1033
        %v1035 = vpop.f32.mrf.mxu0
        %1036 = vmatprep.mubr.bf16.mxu0 0
        %1037 = vmatmul.mubr.bf16.gmra.mxu0 %v849
        %v1038 = vpop.f32.mrf.mxu0
        %v1039 = vadd.f32 %v739, %v1038
        %v1040 = vpop.f32.mrf.mxu0
        %v1041 = vpop.f32.mrf.mxu0
        %v1042 = vadd.f32 %v739, %v1041
        %v1043 = vpop.f32.mrf.mxu0
        %1044 = vmatprep.mubr.bf16.mxu0 0
        %1045 = vmatmul.mubr.bf16.gmra.mxu0 %v852
        %v1046 = vpop.f32.mrf.mxu0
        %v1047 = vadd.f32 %v739, %v1046
        %v1048 = vpop.f32.mrf.mxu0
        %v1049 = vpop.f32.mrf.mxu0
        %v1050 = vadd.f32 %v739, %v1049
        %v1051 = vpop.f32.mrf.mxu0
        %1052 = vmatprep.mubr.bf16.mxu0 0
        %1053 = vmatmul.mubr.bf16.gmra.mxu0 %v855
        %v1054 = vpop.f32.mrf.mxu0
        %v1055 = vadd.f32 %v739, %v1054
        %v1056 = vpop.f32.mrf.mxu0
        %v1057 = vpop.f32.mrf.mxu0
        %v1058 = vadd.f32 %v739, %v1057
        %v1059 = vpop.f32.mrf.mxu0
        %1060 = vmatprep.mubr.bf16.mxu0 0
        %1061 = vmatmul.mubr.bf16.gmra.mxu0 %v858
        %v1062 = vpop.f32.mrf.mxu0
        %v1063 = vadd.f32 %v739, %v1062
        %v1064 = vpop.f32.mrf.mxu0
        %v1065 = vpop.f32.mrf.mxu0
        %v1066 = vadd.f32 %v739, %v1065
        %v1067 = vpop.f32.mrf.mxu0
        %1068 = vmatprep.mubr.bf16.mxu0 0
        %1069 = vmatmul.mubr.bf16.gmra.mxu0 %v861
        %v1070 = vpop.f32.mrf.mxu0
        %v1071 = vadd.f32 %v739, %v1070
        %v1072 = vpop.f32.mrf.mxu0
        %v1073 = vpop.f32.mrf.mxu0
        %v1074 = vadd.f32 %v739, %v1073
        %v1075 = vpop.f32.mrf.mxu0
        %1076 = vmatprep.mubr.bf16.mxu0 0
        %1077 = vmatmul.mubr.bf16.gmra.mxu0 %v864
        %v1078 = vpop.f32.mrf.mxu0
        %v1079 = vadd.f32 %v739, %v1078
        %v1080 = vpop.f32.mrf.mxu0
        %v1081 = vpop.f32.mrf.mxu0
        %v1082 = vadd.f32 %v739, %v1081
        %v1083 = vpop.f32.mrf.mxu0
        %1084 = vmatprep.mubr.bf16.mxu0 0
        %1085 = vmatmul.mubr.bf16.gmra.mxu0 %v867
        %v1086 = vpop.f32.mrf.mxu0
        %v1087 = vadd.f32 %v739, %v1086
        %v1088 = vpop.f32.mrf.mxu0
        %v1089 = vpop.f32.mrf.mxu0
        %v1090 = vadd.f32 %v739, %v1089
        %v1091 = vpop.f32.mrf.mxu0
        %1092 = vmatprep.mubr.bf16.mxu0 0
        %1093 = vmatmul.mubr.bf16.gmra.mxu0 %v870
        %v1094 = vpop.f32.mrf.mxu0
        %v1095 = vadd.f32 %v739, %v1094
        %v1096 = vpop.f32.mrf.mxu0
        %v1097 = vpop.f32.mrf.mxu0
        %v1098 = vadd.f32 %v739, %v1097
        %v1099 = vpop.f32.mrf.mxu0
        %1100 = vmatprep.mubr.bf16.mxu0 0
        %1101 = vmatmul.mubr.bf16.gmra.mxu0 %v873
        %v1102 = vpop.f32.mrf.mxu0
        %v1103 = vadd.f32 %v739, %v1102
        %v1104 = vpop.f32.mrf.mxu0
        %v1105 = vpop.f32.mrf.mxu0
        %v1106 = vadd.f32 %v739, %v1105
        %v1107 = vpop.f32.mrf.mxu0
        %1108 = vmatprep.mubr.bf16.mxu0 0
        %1109 = vmatmul.mubr.bf16.gmra.mxu0 %v876
        %v1110 = vpop.f32.mrf.mxu0
        %v1111 = vadd.f32 %v739, %v1110
        %v1112 = vpop.f32.mrf.mxu0
        %v1113 = vpop.f32.mrf.mxu0
        %v1114 = vadd.f32 %v739, %v1113
        %v1115 = vpop.f32.mrf.mxu0
        %1116 = vmatprep.mubr.bf16.mxu0 0
        %1117 = vmatmul.mubr.bf16.gmra.mxu0 %v879
        %v1118 = vpop.f32.mrf.mxu0
        %v1119 = vadd.f32 %v739, %v1118
        %v1120 = vpop.f32.mrf.mxu0
        %v1121 = vpop.f32.mrf.mxu0
        %v1122 = vadd.f32 %v739, %v1121
        %v1123 = vpop.f32.mrf.mxu0
        %1124 = vmatprep.mubr.bf16.mxu0 0
        %1125 = vmatmul.mubr.bf16.gmra.mxu0 %v882
        %v1126 = vpop.f32.mrf.mxu0
        %v1127 = vadd.f32 %v739, %v1126
        %v1128 = vpop.f32.mrf.mxu0
        %v1129 = vpop.f32.mrf.mxu0
        %v1130 = vadd.f32 %v739, %v1129
        %v1131 = vpop.f32.mrf.mxu0
        %1132 = vmatprep.mubr.bf16.mxu0 0
        %1133 = vmatmul.mubr.bf16.gmra.mxu0 %v885
        %v1134 = vpop.f32.mrf.mxu0
        %v1135 = vadd.f32 %v739, %v1134
        %v1136 = vpop.f32.mrf.mxu0
        %v1137 = vpop.f32.mrf.mxu0
        %v1138 = vadd.f32 %v739, %v1137
        %v1139 = vpop.f32.mrf.mxu0
        %1140 = vmatprep.mubr.bf16.mxu0 0
        %1141 = vmatmul.mubr.bf16.gmra.mxu0 %v888
        %v1142 = vpop.f32.mrf.mxu0
        %v1143 = vadd.f32 %v739, %v1142
        %v1144 = vpop.f32.mrf.mxu0
        %v1145 = vpop.f32.mrf.mxu0
        %v1146 = vadd.f32 %v739, %v1145
        %v1147 = vpop.f32.mrf.mxu0
        %1148 = vmatprep.mubr.bf16.mxu0 0
        %1149 = vmatmul.mubr.bf16.gmra.mxu0 %v891
        %v1150 = vpop.f32.mrf.mxu0
        %v1151 = vadd.f32 %v739, %v1150
        %v1152 = vpop.f32.mrf.mxu0
        %v1153 = vpop.f32.mrf.mxu0
        %v1154 = vadd.f32 %v739, %v1153
        %v1155 = vpop.f32.mrf.mxu0
        %1156 = vmatprep.mubr.bf16.mxu0 0
        %1157 = vmatmul.mubr.bf16.gmra.mxu0 %v894
        %v1158 = vpop.f32.mrf.mxu0
        %v1159 = vadd.f32 %v739, %v1158
        %v1160 = vpop.f32.mrf.mxu0
        %v1161 = vpop.f32.mrf.mxu0
        %v1162 = vadd.f32 %v739, %v1161
        %v1163 = vpop.f32.mrf.mxu0
        %1164 = vmatprep.mubr.bf16.mxu0 0
        %1165 = vmatmul.mubr.bf16.gmra.mxu0 %v897
        %v1166 = vpop.f32.mrf.mxu0
        %v1167 = vadd.f32 %v739, %v1166
        %v1168 = vpop.f32.mrf.mxu0
        %v1169 = vpop.f32.mrf.mxu0
        %v1170 = vadd.f32 %v739, %v1169
        %v1171 = vpop.f32.mrf.mxu0
        %1172 = vmatprep.mubr.bf16.mxu0 0
        %1173 = vmatmul.mubr.bf16.gmra.mxu0 %v900
        %v1174 = vpop.f32.mrf.mxu0
        %v1175 = vadd.f32 %v739, %v1174
        %v1176 = vpop.f32.mrf.mxu0
        %v1177 = vpop.f32.mrf.mxu0
        %v1178 = vadd.f32 %v739, %v1177
        %v1179 = vpop.f32.mrf.mxu0
        %1180 = vmatprep.mubr.bf16.mxu0 0
        %1181 = vmatmul.mubr.bf16.gmra.mxu0 %v903
        %v1182 = vpop.f32.mrf.mxu0
        %v1183 = vadd.f32 %v739, %v1182
        %v1184 = vpop.f32.mrf.mxu0
        %v1185 = vpop.f32.mrf.mxu0
        %v1186 = vadd.f32 %v739, %v1185
        %v1187 = vpop.f32.mrf.mxu0
        %1188 = vmatprep.mubr.bf16.mxu0 0
        %1189 = vmatmul.mubr.bf16.gmra.mxu0 %v906
        %v1190 = vpop.f32.mrf.mxu0
        %v1191 = vadd.f32 %v739, %v1190
        %v1192 = vpop.f32.mrf.mxu0
        %v1193 = vpop.f32.mrf.mxu0
        %v1194 = vadd.f32 %v739, %v1193
        %v1195 = vpop.f32.mrf.mxu0
        %1196 = vdwg.mxu0
        %v1197 = vmax.f32 %v943, 0.0
        %v1198 = vmax.f32 %v946, 0.0
        %v1199 = vmax.f32 %v951, 0.0
        %v1200 = vmax.f32 %v954, 0.0
        %v1201 = vmax.f32 %v959, 0.0
        %v1202 = vmax.f32 %v962, 0.0
        %v1203 = vmax.f32 %v967, 0.0
        %v1204 = vmax.f32 %v970, 0.0
        %v1205 = vmax.f32 %v975, 0.0
        %v1206 = vmax.f32 %v978, 0.0
        %v1207 = vmax.f32 %v983, 0.0
        %v1208 = vmax.f32 %v986, 0.0
        %v1209 = vmax.f32 %v991, 0.0
        %v1210 = vmax.f32 %v994, 0.0
        %v1211 = vmax.f32 %v999, 0.0
        %v1212 = vmax.f32 %v1002, 0.0
        %v1213 = vmax.f32 %v1007, 0.0
        %v1214 = vmax.f32 %v1010, 0.0
        %v1215 = vmax.f32 %v1015, 0.0
        %v1216 = vmax.f32 %v1018, 0.0
        %v1217 = vmax.f32 %v1023, 0.0
        %v1218 = vmax.f32 %v1026, 0.0
        %v1219 = vmax.f32 %v1031, 0.0
        %v1220 = vmax.f32 %v1034, 0.0
        %v1221 = vmax.f32 %v1039, 0.0
        %v1222 = vmax.f32 %v1042, 0.0
        %v1223 = vmax.f32 %v1047, 0.0
        %v1224 = vmax.f32 %v1050, 0.0
        %v1225 = vmax.f32 %v1055, 0.0
        %v1226 = vmax.f32 %v1058, 0.0
        %v1227 = vmax.f32 %v1063, 0.0
        %v1228 = vmax.f32 %v1066, 0.0
        %v1229 = vmax.f32 %v1071, 0.0
        %v1230 = vmax.f32 %v1074, 0.0
        %v1231 = vmax.f32 %v1079, 0.0
        %v1232 = vmax.f32 %v1082, 0.0
        %v1233 = vmax.f32 %v1087, 0.0
        %v1234 = vmax.f32 %v1090, 0.0
        %v1235 = vmax.f32 %v1095, 0.0
        %v1236 = vmax.f32 %v1098, 0.0
        %v1237 = vmax.f32 %v1103, 0.0
        %v1238 = vmax.f32 %v1106, 0.0
        %v1239 = vmax.f32 %v1111, 0.0
        %v1240 = vmax.f32 %v1114, 0.0
        %v1241 = vmax.f32 %v1119, 0.0
        %v1242 = vmax.f32 %v1122, 0.0
        %v1243 = vmax.f32 %v1127, 0.0
        %v1244 = vmax.f32 %v1130, 0.0
        %v1245 = vmax.f32 %v1135, 0.0
        %v1246 = vmax.f32 %v1138, 0.0
        %v1247 = vmax.f32 %v1143, 0.0
        %v1248 = vmax.f32 %v1146, 0.0
        %v1249 = vmax.f32 %v1151, 0.0
        %v1250 = vmax.f32 %v1154, 0.0
        %v1251 = vmax.f32 %v1159, 0.0
        %v1252 = vmax.f32 %v1162, 0.0
        %v1253 = vmax.f32 %v1167, 0.0
        %v1254 = vmax.f32 %v1170, 0.0
        %v1255 = vmax.f32 %v1175, 0.0
        %v1256 = vmax.f32 %v1178, 0.0
        %v1257 = vmax.f32 %v1183, 0.0
        %v1258 = vmax.f32 %v1186, 0.0
        %v1259 = vmax.f32 %v1191, 0.0
        %v1260 = vmax.f32 %v1194, 0.0
        %v1261 = vpack.c.bf16 %v1198, %v1197
        %v1262 = vpack.c.bf16 %v1200, %v1199
        %v1263 = vpack.c.bf16 %v1202, %v1201
        %v1264 = vpack.c.bf16 %v1204, %v1203
        %v1265 = vpack.c.bf16 %v1206, %v1205
        %v1266 = vpack.c.bf16 %v1208, %v1207
        %v1267 = vpack.c.bf16 %v1210, %v1209
        %v1268 = vpack.c.bf16 %v1212, %v1211
        %v1269 = vpack.c.bf16 %v1214, %v1213
        %v1270 = vpack.c.bf16 %v1216, %v1215
        %v1271 = vpack.c.bf16 %v1218, %v1217
        %v1272 = vpack.c.bf16 %v1220, %v1219
        %v1273 = vpack.c.bf16 %v1222, %v1221
        %v1274 = vpack.c.bf16 %v1224, %v1223
        %v1275 = vpack.c.bf16 %v1226, %v1225
        %v1276 = vpack.c.bf16 %v1228, %v1227
        %v1277 = vpack.c.bf16 %v1230, %v1229
        %v1278 = vpack.c.bf16 %v1232, %v1231
        %v1279 = vpack.c.bf16 %v1234, %v1233
        %v1280 = vpack.c.bf16 %v1236, %v1235
        %v1281 = vpack.c.bf16 %v1238, %v1237
        %v1282 = vpack.c.bf16 %v1240, %v1239
        %v1283 = vpack.c.bf16 %v1242, %v1241
        %v1284 = vpack.c.bf16 %v1244, %v1243
        %v1285 = vpack.c.bf16 %v1246, %v1245
        %v1286 = vpack.c.bf16 %v1248, %v1247
        %v1287 = vpack.c.bf16 %v1250, %v1249
        %v1288 = vpack.c.bf16 %v1252, %v1251
        %v1289 = vpack.c.bf16 %v1254, %v1253
        %v1290 = vpack.c.bf16 %v1256, %v1255
        %v1291 = vpack.c.bf16 %v1258, %v1257
        %v1292 = vpack.c.bf16 %v1260, %v1259
        %v1293 = vld [vmem:[%s3] sm:$0xf]
        %v1294 = vld [vmem:[%s3 + $0x4] sm:$0xf]
        %v1295 = vld [vmem:[%s3 + $0x8] sm:$0xf]
        %v1296 = vld [vmem:[%s3 + $0xc] sm:$0xf]
        %v1297 = vld [vmem:[%s3 + $0x10] sm:$0xf]
        %v1298 = vld [vmem:[%s3 + $0x14] sm:$0xf]
        %v1299 = vld [vmem:[%s3 + $0x18] sm:$0xf]
        %v1300 = vld [vmem:[%s3 + $0x1c] sm:$0xf]
        %v1301 = vld [vmem:[%s3 + $0x20] sm:$0xf]
        %v1302 = vld [vmem:[%s3 + $0x24] sm:$0xf]
        %v1303 = vld [vmem:[%s3 + $0x28] sm:$0xf]
        %v1304 = vld [vmem:[%s3 + $0x2c] sm:$0xf]
        %v1305 = vld [vmem:[%s3 + $0x30] sm:$0xf]
        %v1306 = vld [vmem:[%s3 + $0x34] sm:$0xf]
        %v1307 = vld [vmem:[%s3 + $0x38] sm:$0xf]
        %v1308 = vld [vmem:[%s3 + $0x3c] sm:$0xf]
        %v1309 = vld [vmem:[%s4] sm:$0x1]
        %v1311 = vlaneseq
        %v1312 = vshrl.u32 %v1311, 7
        %v1313 = vsub.s32 0, %v1312
        %v1314 = vrot.slane %v1309, %v1313
        %v1332 = vunpack.c.l.b16 %v1293
        %v1333 = vunpack.c.l.b16 %v1294
        %v1334 = vunpack.c.l.b16 %v1295
        %v1335 = vunpack.c.l.b16 %v1296
        %v1336 = vunpack.c.l.b16 %v1297
        %v1337 = vunpack.c.l.b16 %v1298
        %v1338 = vunpack.c.l.b16 %v1299
        %v1339 = vunpack.c.l.b16 %v1300
        %v1340 = vunpack.c.l.b16 %v1301
        %v1341 = vunpack.c.l.b16 %v1302
        %v1342 = vunpack.c.l.b16 %v1303
        %v1343 = vunpack.c.l.b16 %v1304
        %v1344 = vunpack.c.l.b16 %v1305
        %v1345 = vunpack.c.l.b16 %v1306
        %v1346 = vunpack.c.l.b16 %v1307
        %v1347 = vunpack.c.l.b16 %v1308
        %v1348 = vpack.c.b16 %v1333, %v1332
        %v1349 = vpack.c.b16 %v1335, %v1334
        %v1350 = vpack.c.b16 %v1337, %v1336
        %v1351 = vpack.c.b16 %v1339, %v1338
        %v1352 = vpack.c.b16 %v1341, %v1340
        %v1353 = vpack.c.b16 %v1343, %v1342
        %v1354 = vpack.c.b16 %v1345, %v1344
        %v1355 = vpack.c.b16 %v1347, %v1346
        %1364 = vmatprep.subr.bf16.mxu0 0
        %1365 = vmatpush1.bf16.msra.mxu0 %v1355
        %1366 = vmatprep.subr.bf16.mxu0 0
        %1367 = vmatpush1.bf16.msra.mxu0 %v1354
        %1368 = vmatprep.subr.bf16.mxu0 0
        %1369 = vmatpush1.bf16.msra.mxu0 %v1353
        %1370 = vmatprep.subr.bf16.mxu0 0
        %1371 = vmatpush1.bf16.msra.mxu0 %v1352
        %1372 = vmatprep.subr.bf16.mxu0 0
        %1373 = vmatpush1.bf16.msra.mxu0 %v1351
        %1374 = vmatprep.subr.bf16.mxu0 0
        %1375 = vmatpush1.bf16.msra.mxu0 %v1350
        %1376 = vmatprep.subr.bf16.mxu0 0
        %1377 = vmatpush1.bf16.msra.mxu0 %v1349
        %1378 = vmatprep.subr.bf16.mxu0 0
        %1379 = vmatpush1.bf16.msra.mxu0 %v1348
        %1380 = vmatprep.subr.bf16.mxu0 0
        %1381 = vmatpush2.bf16.msra.mxu0 0
        %1382 = vmatprep.subr.bf16.mxu0 0
        %1383 = vmatpush2.bf16.msra.mxu0 0
        %1384 = vmatprep.subr.bf16.mxu0 0
        %1385 = vmatpush2.bf16.msra.mxu0 0
        %1386 = vmatprep.subr.bf16.mxu0 0
        %1387 = vmatpush2.bf16.msra.mxu0 0
        %1388 = vmatprep.subr.bf16.mxu0 0
        %1389 = vmatpush2.bf16.msra.mxu0 0
        %1390 = vmatprep.subr.bf16.mxu0 0
        %1391 = vmatpush2.bf16.msra.mxu0 0
        %1392 = vmatprep.subr.bf16.mxu0 0
        %1393 = vmatpush2.bf16.msra.mxu0 0
        %1394 = vmatprep.subr.bf16.mxu0 0
        %1395 = vmatpush2.bf16.msra.mxu0 0
        %1396 = vmatprep.mubr.bf16.mxu0 0
        %1397 = vmatmul.mubr.bf16.gmra.mxu0 %v1261
        %v1398 = vpop.f32.mrf.mxu0
        %v1399 = vadd.f32 %v1314, %v1398
        %v1400 = vpop.f32.mrf.mxu0
        %v1401 = vpop.f32.mrf.mxu0
        %v1402 = vadd.f32 %v1314, %v1401
        %v1403 = vpop.f32.mrf.mxu0
        %1404 = vmatprep.mubr.bf16.mxu0 0
        %1405 = vmatmul.mubr.bf16.gmra.mxu0 %v1262
        %v1406 = vpop.f32.mrf.mxu0
        %v1407 = vadd.f32 %v1314, %v1406
        %v1408 = vpop.f32.mrf.mxu0
        %v1409 = vpop.f32.mrf.mxu0
        %v1410 = vadd.f32 %v1314, %v1409
        %v1411 = vpop.f32.mrf.mxu0
        %1412 = vmatprep.mubr.bf16.mxu0 0
        %1413 = vmatmul.mubr.bf16.gmra.mxu0 %v1263
        %v1414 = vpop.f32.mrf.mxu0
        %v1415 = vadd.f32 %v1314, %v1414
        %v1416 = vpop.f32.mrf.mxu0
        %v1417 = vpop.f32.mrf.mxu0
        %v1418 = vadd.f32 %v1314, %v1417
        %v1419 = vpop.f32.mrf.mxu0
        %1420 = vmatprep.mubr.bf16.mxu0 0
        %1421 = vmatmul.mubr.bf16.gmra.mxu0 %v1264
        %v1422 = vpop.f32.mrf.mxu0
        %v1423 = vadd.f32 %v1314, %v1422
        %v1424 = vpop.f32.mrf.mxu0
        %v1425 = vpop.f32.mrf.mxu0
        %v1426 = vadd.f32 %v1314, %v1425
        %v1427 = vpop.f32.mrf.mxu0
        %1428 = vmatprep.mubr.bf16.mxu0 0
        %1429 = vmatmul.mubr.bf16.gmra.mxu0 %v1265
        %v1430 = vpop.f32.mrf.mxu0
        %v1431 = vadd.f32 %v1314, %v1430
        %v1432 = vpop.f32.mrf.mxu0
        %v1433 = vpop.f32.mrf.mxu0
        %v1434 = vadd.f32 %v1314, %v1433
        %v1435 = vpop.f32.mrf.mxu0
        %1436 = vmatprep.mubr.bf16.mxu0 0
        %1437 = vmatmul.mubr.bf16.gmra.mxu0 %v1266
        %v1438 = vpop.f32.mrf.mxu0
        %v1439 = vadd.f32 %v1314, %v1438
        %v1440 = vpop.f32.mrf.mxu0
        %v1441 = vpop.f32.mrf.mxu0
        %v1442 = vadd.f32 %v1314, %v1441
        %v1443 = vpop.f32.mrf.mxu0
        %1444 = vmatprep.mubr.bf16.mxu0 0
        %1445 = vmatmul.mubr.bf16.gmra.mxu0 %v1267
        %v1446 = vpop.f32.mrf.mxu0
        %v1447 = vadd.f32 %v1314, %v1446
        %v1448 = vpop.f32.mrf.mxu0
        %v1449 = vpop.f32.mrf.mxu0
        %v1450 = vadd.f32 %v1314, %v1449
        %v1451 = vpop.f32.mrf.mxu0
        %1452 = vmatprep.mubr.bf16.mxu0 0
        %1453 = vmatmul.mubr.bf16.gmra.mxu0 %v1268
        %v1454 = vpop.f32.mrf.mxu0
        %v1455 = vadd.f32 %v1314, %v1454
        %v1456 = vpop.f32.mrf.mxu0
        %v1457 = vpop.f32.mrf.mxu0
        %v1458 = vadd.f32 %v1314, %v1457
        %v1459 = vpop.f32.mrf.mxu0
        %1460 = vmatprep.mubr.bf16.mxu0 0
        %1461 = vmatmul.mubr.bf16.gmra.mxu0 %v1269
        %v1462 = vpop.f32.mrf.mxu0
        %v1463 = vadd.f32 %v1314, %v1462
        %v1464 = vpop.f32.mrf.mxu0
        %v1465 = vpop.f32.mrf.mxu0
        %v1466 = vadd.f32 %v1314, %v1465
        %v1467 = vpop.f32.mrf.mxu0
        %1468 = vmatprep.mubr.bf16.mxu0 0
        %1469 = vmatmul.mubr.bf16.gmra.mxu0 %v1270
        %v1470 = vpop.f32.mrf.mxu0
        %v1471 = vadd.f32 %v1314, %v1470
        %v1472 = vpop.f32.mrf.mxu0
        %v1473 = vpop.f32.mrf.mxu0
        %v1474 = vadd.f32 %v1314, %v1473
        %v1475 = vpop.f32.mrf.mxu0
        %1476 = vmatprep.mubr.bf16.mxu0 0
        %1477 = vmatmul.mubr.bf16.gmra.mxu0 %v1271
        %v1478 = vpop.f32.mrf.mxu0
        %v1479 = vadd.f32 %v1314, %v1478
        %v1480 = vpop.f32.mrf.mxu0
        %v1481 = vpop.f32.mrf.mxu0
        %v1482 = vadd.f32 %v1314, %v1481
        %v1483 = vpop.f32.mrf.mxu0
        %1484 = vmatprep.mubr.bf16.mxu0 0
        %1485 = vmatmul.mubr.bf16.gmra.mxu0 %v1272
        %v1486 = vpop.f32.mrf.mxu0
        %v1487 = vadd.f32 %v1314, %v1486
        %v1488 = vpop.f32.mrf.mxu0
        %v1489 = vpop.f32.mrf.mxu0
        %v1490 = vadd.f32 %v1314, %v1489
        %v1491 = vpop.f32.mrf.mxu0
        %1492 = vmatprep.mubr.bf16.mxu0 0
        %1493 = vmatmul.mubr.bf16.gmra.mxu0 %v1273
        %v1494 = vpop.f32.mrf.mxu0
        %v1495 = vadd.f32 %v1314, %v1494
        %v1496 = vpop.f32.mrf.mxu0
        %v1497 = vpop.f32.mrf.mxu0
        %v1498 = vadd.f32 %v1314, %v1497
        %v1499 = vpop.f32.mrf.mxu0
        %1500 = vmatprep.mubr.bf16.mxu0 0
        %1501 = vmatmul.mubr.bf16.gmra.mxu0 %v1274
        %v1502 = vpop.f32.mrf.mxu0
        %v1503 = vadd.f32 %v1314, %v1502
        %v1504 = vpop.f32.mrf.mxu0
        %v1505 = vpop.f32.mrf.mxu0
        %v1506 = vadd.f32 %v1314, %v1505
        %v1507 = vpop.f32.mrf.mxu0
        %1508 = vmatprep.mubr.bf16.mxu0 0
        %1509 = vmatmul.mubr.bf16.gmra.mxu0 %v1275
        %v1510 = vpop.f32.mrf.mxu0
        %v1511 = vadd.f32 %v1314, %v1510
        %v1512 = vpop.f32.mrf.mxu0
        %v1513 = vpop.f32.mrf.mxu0
        %v1514 = vadd.f32 %v1314, %v1513
        %v1515 = vpop.f32.mrf.mxu0
        %1516 = vmatprep.mubr.bf16.mxu0 0
        %1517 = vmatmul.mubr.bf16.gmra.mxu0 %v1276
        %v1518 = vpop.f32.mrf.mxu0
        %v1519 = vadd.f32 %v1314, %v1518
        %v1520 = vpop.f32.mrf.mxu0
        %v1521 = vpop.f32.mrf.mxu0
        %v1522 = vadd.f32 %v1314, %v1521
        %v1523 = vpop.f32.mrf.mxu0
        %1524 = vmatprep.mubr.bf16.mxu0 0
        %1525 = vmatmul.mubr.bf16.gmra.mxu0 %v1277
        %v1526 = vpop.f32.mrf.mxu0
        %v1527 = vadd.f32 %v1314, %v1526
        %v1528 = vpop.f32.mrf.mxu0
        %v1529 = vpop.f32.mrf.mxu0
        %v1530 = vadd.f32 %v1314, %v1529
        %v1531 = vpop.f32.mrf.mxu0
        %1532 = vmatprep.mubr.bf16.mxu0 0
        %1533 = vmatmul.mubr.bf16.gmra.mxu0 %v1278
        %v1534 = vpop.f32.mrf.mxu0
        %v1535 = vadd.f32 %v1314, %v1534
        %v1536 = vpop.f32.mrf.mxu0
        %v1537 = vpop.f32.mrf.mxu0
        %v1538 = vadd.f32 %v1314, %v1537
        %v1539 = vpop.f32.mrf.mxu0
        %1540 = vmatprep.mubr.bf16.mxu0 0
        %1541 = vmatmul.mubr.bf16.gmra.mxu0 %v1279
        %v1542 = vpop.f32.mrf.mxu0
        %v1543 = vadd.f32 %v1314, %v1542
        %v1544 = vpop.f32.mrf.mxu0
        %v1545 = vpop.f32.mrf.mxu0
        %v1546 = vadd.f32 %v1314, %v1545
        %v1547 = vpop.f32.mrf.mxu0
        %1548 = vmatprep.mubr.bf16.mxu0 0
        %1549 = vmatmul.mubr.bf16.gmra.mxu0 %v1280
        %v1550 = vpop.f32.mrf.mxu0
        %v1551 = vadd.f32 %v1314, %v1550
        %v1552 = vpop.f32.mrf.mxu0
        %v1553 = vpop.f32.mrf.mxu0
        %v1554 = vadd.f32 %v1314, %v1553
        %v1555 = vpop.f32.mrf.mxu0
        %1556 = vmatprep.mubr.bf16.mxu0 0
        %1557 = vmatmul.mubr.bf16.gmra.mxu0 %v1281
        %v1558 = vpop.f32.mrf.mxu0
        %v1559 = vadd.f32 %v1314, %v1558
        %v1560 = vpop.f32.mrf.mxu0
        %v1561 = vpop.f32.mrf.mxu0
        %v1562 = vadd.f32 %v1314, %v1561
        %v1563 = vpop.f32.mrf.mxu0
        %1564 = vmatprep.mubr.bf16.mxu0 0
        %1565 = vmatmul.mubr.bf16.gmra.mxu0 %v1282
        %v1566 = vpop.f32.mrf.mxu0
        %v1567 = vadd.f32 %v1314, %v1566
        %v1568 = vpop.f32.mrf.mxu0
        %v1569 = vpop.f32.mrf.mxu0
        %v1570 = vadd.f32 %v1314, %v1569
        %v1571 = vpop.f32.mrf.mxu0
        %1572 = vmatprep.mubr.bf16.mxu0 0
        %1573 = vmatmul.mubr.bf16.gmra.mxu0 %v1283
        %v1574 = vpop.f32.mrf.mxu0
        %v1575 = vadd.f32 %v1314, %v1574
        %v1576 = vpop.f32.mrf.mxu0
        %v1577 = vpop.f32.mrf.mxu0
        %v1578 = vadd.f32 %v1314, %v1577
        %v1579 = vpop.f32.mrf.mxu0
        %1580 = vmatprep.mubr.bf16.mxu0 0
        %1581 = vmatmul.mubr.bf16.gmra.mxu0 %v1284
        %v1582 = vpop.f32.mrf.mxu0
        %v1583 = vadd.f32 %v1314, %v1582
        %v1584 = vpop.f32.mrf.mxu0
        %v1585 = vpop.f32.mrf.mxu0
        %v1586 = vadd.f32 %v1314, %v1585
        %v1587 = vpop.f32.mrf.mxu0
        %1588 = vmatprep.mubr.bf16.mxu0 0
        %1589 = vmatmul.mubr.bf16.gmra.mxu0 %v1285
        %v1590 = vpop.f32.mrf.mxu0
        %v1591 = vadd.f32 %v1314, %v1590
        %v1592 = vpop.f32.mrf.mxu0
        %v1593 = vpop.f32.mrf.mxu0
        %v1594 = vadd.f32 %v1314, %v1593
        %v1595 = vpop.f32.mrf.mxu0
        %1596 = vmatprep.mubr.bf16.mxu0 0
        %1597 = vmatmul.mubr.bf16.gmra.mxu0 %v1286
        %v1598 = vpop.f32.mrf.mxu0
        %v1599 = vadd.f32 %v1314, %v1598
        %v1600 = vpop.f32.mrf.mxu0
        %v1601 = vpop.f32.mrf.mxu0
        %v1602 = vadd.f32 %v1314, %v1601
        %v1603 = vpop.f32.mrf.mxu0
        %1604 = vmatprep.mubr.bf16.mxu0 0
        %1605 = vmatmul.mubr.bf16.gmra.mxu0 %v1287
        %v1606 = vpop.f32.mrf.mxu0
        %v1607 = vadd.f32 %v1314, %v1606
        %v1608 = vpop.f32.mrf.mxu0
        %v1609 = vpop.f32.mrf.mxu0
        %v1610 = vadd.f32 %v1314, %v1609
        %v1611 = vpop.f32.mrf.mxu0
        %1612 = vmatprep.mubr.bf16.mxu0 0
        %1613 = vmatmul.mubr.bf16.gmra.mxu0 %v1288
        %v1614 = vpop.f32.mrf.mxu0
        %v1615 = vadd.f32 %v1314, %v1614
        %v1616 = vpop.f32.mrf.mxu0
        %v1617 = vpop.f32.mrf.mxu0
        %v1618 = vadd.f32 %v1314, %v1617
        %v1619 = vpop.f32.mrf.mxu0
        %1620 = vmatprep.mubr.bf16.mxu0 0
        %1621 = vmatmul.mubr.bf16.gmra.mxu0 %v1289
        %v1622 = vpop.f32.mrf.mxu0
        %v1623 = vadd.f32 %v1314, %v1622
        %v1624 = vpop.f32.mrf.mxu0
        %v1625 = vpop.f32.mrf.mxu0
        %v1626 = vadd.f32 %v1314, %v1625
        %v1627 = vpop.f32.mrf.mxu0
        %1628 = vmatprep.mubr.bf16.mxu0 0
        %1629 = vmatmul.mubr.bf16.gmra.mxu0 %v1290
        %v1630 = vpop.f32.mrf.mxu0
        %v1631 = vadd.f32 %v1314, %v1630
        %v1632 = vpop.f32.mrf.mxu0
        %v1633 = vpop.f32.mrf.mxu0
        %v1634 = vadd.f32 %v1314, %v1633
        %v1635 = vpop.f32.mrf.mxu0
        %1636 = vmatprep.mubr.bf16.mxu0 0
        %1637 = vmatmul.mubr.bf16.gmra.mxu0 %v1291
        %v1638 = vpop.f32.mrf.mxu0
        %v1639 = vadd.f32 %v1314, %v1638
        %v1640 = vpop.f32.mrf.mxu0
        %v1641 = vpop.f32.mrf.mxu0
        %v1642 = vadd.f32 %v1314, %v1641
        %v1643 = vpop.f32.mrf.mxu0
        %1644 = vmatprep.mubr.bf16.mxu0 0
        %1645 = vmatmul.mubr.bf16.gmra.mxu0 %v1292
        %v1646 = vpop.f32.mrf.mxu0
        %v1647 = vadd.f32 %v1314, %v1646
        %v1648 = vpop.f32.mrf.mxu0
        %v1649 = vpop.f32.mrf.mxu0
        %v1650 = vadd.f32 %v1314, %v1649
        %v1651 = vpop.f32.mrf.mxu0
        %1652 = vdwg.mxu0
        %v1653 = vmax.f32 %v1399, 0.0
        %v1654 = vmax.f32 %v1402, 0.0
        %v1655 = vmax.f32 %v1407, 0.0
        %v1656 = vmax.f32 %v1410, 0.0
        %v1657 = vmax.f32 %v1415, 0.0
        %v1658 = vmax.f32 %v1418, 0.0
        %v1659 = vmax.f32 %v1423, 0.0
        %v1660 = vmax.f32 %v1426, 0.0
        %v1661 = vmax.f32 %v1431, 0.0
        %v1662 = vmax.f32 %v1434, 0.0
        %v1663 = vmax.f32 %v1439, 0.0
        %v1664 = vmax.f32 %v1442, 0.0
        %v1665 = vmax.f32 %v1447, 0.0
        %v1666 = vmax.f32 %v1450, 0.0
        %v1667 = vmax.f32 %v1455, 0.0
        %v1668 = vmax.f32 %v1458, 0.0
        %v1669 = vmax.f32 %v1463, 0.0
        %v1670 = vmax.f32 %v1466, 0.0
        %v1671 = vmax.f32 %v1471, 0.0
        %v1672 = vmax.f32 %v1474, 0.0
        %v1673 = vmax.f32 %v1479, 0.0
        %v1674 = vmax.f32 %v1482, 0.0
        %v1675 = vmax.f32 %v1487, 0.0
        %v1676 = vmax.f32 %v1490, 0.0
        %v1677 = vmax.f32 %v1495, 0.0
        %v1678 = vmax.f32 %v1498, 0.0
        %v1679 = vmax.f32 %v1503, 0.0
        %v1680 = vmax.f32 %v1506, 0.0
        %v1681 = vmax.f32 %v1511, 0.0
        %v1682 = vmax.f32 %v1514, 0.0
        %v1683 = vmax.f32 %v1519, 0.0
        %v1684 = vmax.f32 %v1522, 0.0
        %v1685 = vmax.f32 %v1527, 0.0
        %v1686 = vmax.f32 %v1530, 0.0
        %v1687 = vmax.f32 %v1535, 0.0
        %v1688 = vmax.f32 %v1538, 0.0
        %v1689 = vmax.f32 %v1543, 0.0
        %v1690 = vmax.f32 %v1546, 0.0
        %v1691 = vmax.f32 %v1551, 0.0
        %v1692 = vmax.f32 %v1554, 0.0
        %v1693 = vmax.f32 %v1559, 0.0
        %v1694 = vmax.f32 %v1562, 0.0
        %v1695 = vmax.f32 %v1567, 0.0
        %v1696 = vmax.f32 %v1570, 0.0
        %v1697 = vmax.f32 %v1575, 0.0
        %v1698 = vmax.f32 %v1578, 0.0
        %v1699 = vmax.f32 %v1583, 0.0
        %v1700 = vmax.f32 %v1586, 0.0
        %v1701 = vmax.f32 %v1591, 0.0
        %v1702 = vmax.f32 %v1594, 0.0
        %v1703 = vmax.f32 %v1599, 0.0
        %v1704 = vmax.f32 %v1602, 0.0
        %v1705 = vmax.f32 %v1607, 0.0
        %v1706 = vmax.f32 %v1610, 0.0
        %v1707 = vmax.f32 %v1615, 0.0
        %v1708 = vmax.f32 %v1618, 0.0
        %v1709 = vmax.f32 %v1623, 0.0
        %v1710 = vmax.f32 %v1626, 0.0
        %v1711 = vmax.f32 %v1631, 0.0
        %v1712 = vmax.f32 %v1634, 0.0
        %v1713 = vmax.f32 %v1639, 0.0
        %v1714 = vmax.f32 %v1642, 0.0
        %v1715 = vmax.f32 %v1647, 0.0
        %v1716 = vmax.f32 %v1650, 0.0
        %v1717 = vpack.c.bf16 %v1654, %v1653
        %v1718 = vpack.c.bf16 %v1656, %v1655
        %v1719 = vpack.c.bf16 %v1658, %v1657
        %v1720 = vpack.c.bf16 %v1660, %v1659
        %v1721 = vpack.c.bf16 %v1662, %v1661
        %v1722 = vpack.c.bf16 %v1664, %v1663
        %v1723 = vpack.c.bf16 %v1666, %v1665
        %v1724 = vpack.c.bf16 %v1668, %v1667
        %v1725 = vpack.c.bf16 %v1670, %v1669
        %v1726 = vpack.c.bf16 %v1672, %v1671
        %v1727 = vpack.c.bf16 %v1674, %v1673
        %v1728 = vpack.c.bf16 %v1676, %v1675
        %v1729 = vpack.c.bf16 %v1678, %v1677
        %v1730 = vpack.c.bf16 %v1680, %v1679
        %v1731 = vpack.c.bf16 %v1682, %v1681
        %v1732 = vpack.c.bf16 %v1684, %v1683
        %v1733 = vpack.c.bf16 %v1686, %v1685
        %v1734 = vpack.c.bf16 %v1688, %v1687
        %v1735 = vpack.c.bf16 %v1690, %v1689
        %v1736 = vpack.c.bf16 %v1692, %v1691
        %v1737 = vpack.c.bf16 %v1694, %v1693
        %v1738 = vpack.c.bf16 %v1696, %v1695
        %v1739 = vpack.c.bf16 %v1698, %v1697
        %v1740 = vpack.c.bf16 %v1700, %v1699
        %v1741 = vpack.c.bf16 %v1702, %v1701
        %v1742 = vpack.c.bf16 %v1704, %v1703
        %v1743 = vpack.c.bf16 %v1706, %v1705
        %v1744 = vpack.c.bf16 %v1708, %v1707
        %v1745 = vpack.c.bf16 %v1710, %v1709
        %v1746 = vpack.c.bf16 %v1712, %v1711
        %v1747 = vpack.c.bf16 %v1714, %v1713
        %v1748 = vpack.c.bf16 %v1716, %v1715
        %v1749 = vld [vmem:[%s5] sm:$0xff]
        %v1750 = vld [vmem:[%s5 + $0x8] sm:$0xff]
        %v1751 = vld [vmem:[%s5 + $0x10] sm:$0xff]
        %v1752 = vld [vmem:[%s5 + $0x18] sm:$0xff]
        %v1753 = vld [vmem:[%s5 + $0x20] sm:$0xff]
        %v1754 = vld [vmem:[%s5 + $0x28] sm:$0xff]
        %v1755 = vld [vmem:[%s5 + $0x30] sm:$0xff]
        %v1756 = vld [vmem:[%s5 + $0x38] sm:$0xff]
        %v1757 = vld [vmem:[%s5 + $0x40] sm:$0xff]
        %v1758 = vld [vmem:[%s5 + $0x48] sm:$0xff]
        %v1759 = vld [vmem:[%s5 + $0x50] sm:$0xff]
        %v1760 = vld [vmem:[%s5 + $0x58] sm:$0xff]
        %v1761 = vld [vmem:[%s5 + $0x60] sm:$0xff]
        %v1762 = vld [vmem:[%s5 + $0x68] sm:$0xff]
        %v1763 = vld [vmem:[%s5 + $0x70] sm:$0xff]
        %v1764 = vld [vmem:[%s5 + $0x78] sm:$0xff]
        %v1765 = vld [vmem:[%s5 + $0x80] sm:$0xff]
        %v1766 = vld [vmem:[%s5 + $0x88] sm:$0xff]
        %v1767 = vld [vmem:[%s5 + $0x90] sm:$0xff]
        %v1768 = vld [vmem:[%s5 + $0x98] sm:$0xff]
        %v1769 = vld [vmem:[%s5 + $0xa0] sm:$0xff]
        %v1770 = vld [vmem:[%s5 + $0xa8] sm:$0xff]
        %v1771 = vld [vmem:[%s5 + $0xb0] sm:$0xff]
        %v1772 = vld [vmem:[%s5 + $0xb8] sm:$0xff]
        %v1773 = vld [vmem:[%s5 + $0xc0] sm:$0xff]
        %v1774 = vld [vmem:[%s5 + $0xc8] sm:$0xff]
        %v1775 = vld [vmem:[%s5 + $0xd0] sm:$0xff]
        %v1776 = vld [vmem:[%s5 + $0xd8] sm:$0xff]
        %v1777 = vld [vmem:[%s5 + $0xe0] sm:$0xff]
        %v1778 = vld [vmem:[%s5 + $0xe8] sm:$0xff]
        %v1779 = vld [vmem:[%s5 + $0xf0] sm:$0xff]
        %v1780 = vld [vmem:[%s5 + $0xf8] sm:$0xff]
        %v1781 = vld [vmem:[%s6] sm:$0xf]
        %v1783 = vlaneseq
        %v1784 = vshrl.u32 %v1783, 7
        %v1785 = vsub.s32 0, %v1784
        %v1786 = vrot.slane %v1781, %v1785
        %v1787 = vlaneseq
        %v1788 = vshrl.u32 %v1787, 7
        %v1789 = vsub.s32 1, %v1788
        %v1790 = vrot.slane %v1781, %v1789
        %v1791 = vlaneseq
        %v1792 = vshrl.u32 %v1791, 7
        %v1793 = vsub.s32 2, %v1792
        %v1794 = vrot.slane %v1781, %v1793
        %v1795 = vlaneseq
        %v1796 = vshrl.u32 %v1795, 7
        %v1797 = vsub.s32 3, %v1796
        %v1798 = vrot.slane %v1781, %v1797
        %v1835 = vunpack.c.l.b16 %v1749
        %v1836 = vunpack.c.h.b16 %v1749
        %v1837 = vunpack.c.l.b16 %v1750
        %v1838 = vunpack.c.h.b16 %v1750
        %v1839 = vunpack.c.l.b16 %v1751
        %v1840 = vunpack.c.h.b16 %v1751
        %v1841 = vunpack.c.l.b16 %v1752
        %v1842 = vunpack.c.h.b16 %v1752
        %v1843 = vunpack.c.l.b16 %v1753
        %v1844 = vunpack.c.h.b16 %v1753
        %v1845 = vunpack.c.l.b16 %v1754
        %v1846 = vunpack.c.h.b16 %v1754
        %v1847 = vunpack.c.l.b16 %v1755
        %v1848 = vunpack.c.h.b16 %v1755
        %v1849 = vunpack.c.l.b16 %v1756
        %v1850 = vunpack.c.h.b16 %v1756
        %v1851 = vunpack.c.l.b16 %v1757
        %v1852 = vunpack.c.h.b16 %v1757
        %v1853 = vunpack.c.l.b16 %v1758
        %v1854 = vunpack.c.h.b16 %v1758
        %v1855 = vunpack.c.l.b16 %v1759
        %v1856 = vunpack.c.h.b16 %v1759
        %v1857 = vunpack.c.l.b16 %v1760
        %v1858 = vunpack.c.h.b16 %v1760
        %v1859 = vunpack.c.l.b16 %v1761
        %v1860 = vunpack.c.h.b16 %v1761
        %v1861 = vunpack.c.l.b16 %v1762
        %v1862 = vunpack.c.h.b16 %v1762
        %v1863 = vunpack.c.l.b16 %v1763
        %v1864 = vunpack.c.h.b16 %v1763
        %v1865 = vunpack.c.l.b16 %v1764
        %v1866 = vunpack.c.h.b16 %v1764
        %v1867 = vunpack.c.l.b16 %v1765
        %v1868 = vunpack.c.h.b16 %v1765
        %v1869 = vunpack.c.l.b16 %v1766
        %v1870 = vunpack.c.h.b16 %v1766
        %v1871 = vunpack.c.l.b16 %v1767
        %v1872 = vunpack.c.h.b16 %v1767
        %v1873 = vunpack.c.l.b16 %v1768
        %v1874 = vunpack.c.h.b16 %v1768
        %v1875 = vunpack.c.l.b16 %v1769
        %v1876 = vunpack.c.h.b16 %v1769
        %v1877 = vunpack.c.l.b16 %v1770
        %v1878 = vunpack.c.h.b16 %v1770
        %v1879 = vunpack.c.l.b16 %v1771
        %v1880 = vunpack.c.h.b16 %v1771
        %v1881 = vunpack.c.l.b16 %v1772
        %v1882 = vunpack.c.h.b16 %v1772
        %v1883 = vunpack.c.l.b16 %v1773
        %v1884 = vunpack.c.h.b16 %v1773
        %v1885 = vunpack.c.l.b16 %v1774
        %v1886 = vunpack.c.h.b16 %v1774
        %v1887 = vunpack.c.l.b16 %v1775
        %v1888 = vunpack.c.h.b16 %v1775
        %v1889 = vunpack.c.l.b16 %v1776
        %v1890 = vunpack.c.h.b16 %v1776
        %v1891 = vunpack.c.l.b16 %v1777
        %v1892 = vunpack.c.h.b16 %v1777
        %v1893 = vunpack.c.l.b16 %v1778
        %v1894 = vunpack.c.h.b16 %v1778
        %v1895 = vunpack.c.l.b16 %v1779
        %v1896 = vunpack.c.h.b16 %v1779
        %v1897 = vunpack.c.l.b16 %v1780
        %v1898 = vunpack.c.h.b16 %v1780
        %v1899 = vpack.c.b16 %v1839, %v1835
        %v1900 = vpack.c.b16 %v1840, %v1836
        %v1901 = vpack.c.b16 %v1841, %v1837
        %v1902 = vpack.c.b16 %v1842, %v1838
        %v1903 = vpack.c.b16 %v1847, %v1843
        %v1904 = vpack.c.b16 %v1848, %v1844
        %v1905 = vpack.c.b16 %v1849, %v1845
        %v1906 = vpack.c.b16 %v1850, %v1846
        %v1907 = vpack.c.b16 %v1855, %v1851
        %v1908 = vpack.c.b16 %v1856, %v1852
        %v1909 = vpack.c.b16 %v1857, %v1853
        %v1910 = vpack.c.b16 %v1858, %v1854
        %v1911 = vpack.c.b16 %v1863, %v1859
        %v1912 = vpack.c.b16 %v1864, %v1860
        %v1913 = vpack.c.b16 %v1865, %v1861
        %v1914 = vpack.c.b16 %v1866, %v1862
        %v1915 = vpack.c.b16 %v1871, %v1867
        %v1916 = vpack.c.b16 %v1872, %v1868
        %v1917 = vpack.c.b16 %v1873, %v1869
        %v1918 = vpack.c.b16 %v1874, %v1870
        %v1919 = vpack.c.b16 %v1879, %v1875
        %v1920 = vpack.c.b16 %v1880, %v1876
        %v1921 = vpack.c.b16 %v1881, %v1877
        %v1922 = vpack.c.b16 %v1882, %v1878
        %v1923 = vpack.c.b16 %v1887, %v1883
        %v1924 = vpack.c.b16 %v1888, %v1884
        %v1925 = vpack.c.b16 %v1889, %v1885
        %v1926 = vpack.c.b16 %v1890, %v1886
        %v1927 = vpack.c.b16 %v1895, %v1891
        %v1928 = vpack.c.b16 %v1896, %v1892
        %v1929 = vpack.c.b16 %v1897, %v1893
        %v1930 = vpack.c.b16 %v1898, %v1894
        %1963 = vmatprep.subr.bf16.mxu0 %v1928
        %1964 = vmatpush1.bf16.msra.mxu0 %v1927
        %1965 = vmatprep.subr.bf16.mxu0 %v1924
        %1966 = vmatpush1.bf16.msra.mxu0 %v1923
        %1967 = vmatprep.subr.bf16.mxu0 %v1920
        %1968 = vmatpush1.bf16.msra.mxu0 %v1919
        %1969 = vmatprep.subr.bf16.mxu0 %v1916
        %1970 = vmatpush1.bf16.msra.mxu0 %v1915
        %1971 = vmatprep.subr.bf16.mxu0 %v1912
        %1972 = vmatpush1.bf16.msra.mxu0 %v1911
        %1973 = vmatprep.subr.bf16.mxu0 %v1908
        %1974 = vmatpush1.bf16.msra.mxu0 %v1907
        %1975 = vmatprep.subr.bf16.mxu0 %v1904
        %1976 = vmatpush1.bf16.msra.mxu0 %v1903
        %1977 = vmatprep.subr.bf16.mxu0 %v1900
        %1978 = vmatpush1.bf16.msra.mxu0 %v1899
        %1979 = vmatprep.subr.bf16.mxu0 0
        %1980 = vmatpush2.bf16.msra.mxu0 0
        %1981 = vmatprep.subr.bf16.mxu0 0
        %1982 = vmatpush2.bf16.msra.mxu0 0
        %1983 = vmatprep.subr.bf16.mxu0 0
        %1984 = vmatpush2.bf16.msra.mxu0 0
        %1985 = vmatprep.subr.bf16.mxu0 0
        %1986 = vmatpush2.bf16.msra.mxu0 0
        %1987 = vmatprep.subr.bf16.mxu0 0
        %1988 = vmatpush2.bf16.msra.mxu0 0
        %1989 = vmatprep.subr.bf16.mxu0 0
        %1990 = vmatpush2.bf16.msra.mxu0 0
        %1991 = vmatprep.subr.bf16.mxu0 0
        %1992 = vmatpush2.bf16.msra.mxu0 0
        %1993 = vmatprep.subr.bf16.mxu0 0
        %1994 = vmatpush2.bf16.msra.mxu0 0
        %1995 = vmatprep.mubr.bf16.mxu0 0
        %1996 = vmatmul.mubr.bf16.gmra.mxu0 %v1717
        %v1997 = vpop.f32.mrf.mxu0
        %v1998 = vadd.f32 %v1786, %v1997
        %v1999 = vpop.f32.mrf.mxu0
        %v2000 = vadd.f32 %v1790, %v1999
        %v2001 = vpop.f32.mrf.mxu0
        %v2002 = vadd.f32 %v1786, %v2001
        %v2003 = vpop.f32.mrf.mxu0
        %v2004 = vadd.f32 %v1790, %v2003
        %2005 = vmatprep.mubr.bf16.mxu0 0
        %2006 = vmatmul.mubr.bf16.gmra.mxu0 %v1718
        %v2007 = vpop.f32.mrf.mxu0
        %v2008 = vadd.f32 %v1786, %v2007
        %v2009 = vpop.f32.mrf.mxu0
        %v2010 = vadd.f32 %v1790, %v2009
        %v2011 = vpop.f32.mrf.mxu0
        %v2012 = vadd.f32 %v1786, %v2011
        %v2013 = vpop.f32.mrf.mxu0
        %v2014 = vadd.f32 %v1790, %v2013
        %2015 = vmatprep.mubr.bf16.mxu0 0
        %2016 = vmatmul.mubr.bf16.gmra.mxu0 %v1719
        %v2017 = vpop.f32.mrf.mxu0
        %v2018 = vadd.f32 %v1786, %v2017
        %v2019 = vpop.f32.mrf.mxu0
        %v2020 = vadd.f32 %v1790, %v2019
        %v2021 = vpop.f32.mrf.mxu0
        %v2022 = vadd.f32 %v1786, %v2021
        %v2023 = vpop.f32.mrf.mxu0
        %v2024 = vadd.f32 %v1790, %v2023
        %2025 = vmatprep.mubr.bf16.mxu0 0
        %2026 = vmatmul.mubr.bf16.gmra.mxu0 %v1720
        %v2027 = vpop.f32.mrf.mxu0
        %v2028 = vadd.f32 %v1786, %v2027
        %v2029 = vpop.f32.mrf.mxu0
        %v2030 = vadd.f32 %v1790, %v2029
        %v2031 = vpop.f32.mrf.mxu0
        %v2032 = vadd.f32 %v1786, %v2031
        %v2033 = vpop.f32.mrf.mxu0
        %v2034 = vadd.f32 %v1790, %v2033
        %2035 = vmatprep.mubr.bf16.mxu0 0
        %2036 = vmatmul.mubr.bf16.gmra.mxu0 %v1721
        %v2037 = vpop.f32.mrf.mxu0
        %v2038 = vadd.f32 %v1786, %v2037
        %v2039 = vpop.f32.mrf.mxu0
        %v2040 = vadd.f32 %v1790, %v2039
        %v2041 = vpop.f32.mrf.mxu0
        %v2042 = vadd.f32 %v1786, %v2041
        %v2043 = vpop.f32.mrf.mxu0
        %v2044 = vadd.f32 %v1790, %v2043
        %2045 = vmatprep.mubr.bf16.mxu0 0
        %2046 = vmatmul.mubr.bf16.gmra.mxu0 %v1722
        %v2047 = vpop.f32.mrf.mxu0
        %v2048 = vadd.f32 %v1786, %v2047
        %v2049 = vpop.f32.mrf.mxu0
        %v2050 = vadd.f32 %v1790, %v2049
        %v2051 = vpop.f32.mrf.mxu0
        %v2052 = vadd.f32 %v1786, %v2051
        %v2053 = vpop.f32.mrf.mxu0
        %v2054 = vadd.f32 %v1790, %v2053
        %2055 = vmatprep.mubr.bf16.mxu0 0
        %2056 = vmatmul.mubr.bf16.gmra.mxu0 %v1723
        %v2057 = vpop.f32.mrf.mxu0
        %v2058 = vadd.f32 %v1786, %v2057
        %v2059 = vpop.f32.mrf.mxu0
        %v2060 = vadd.f32 %v1790, %v2059
        %v2061 = vpop.f32.mrf.mxu0
        %v2062 = vadd.f32 %v1786, %v2061
        %v2063 = vpop.f32.mrf.mxu0
        %v2064 = vadd.f32 %v1790, %v2063
        %2065 = vmatprep.mubr.bf16.mxu0 0
        %2066 = vmatmul.mubr.bf16.gmra.mxu0 %v1724
        %v2067 = vpop.f32.mrf.mxu0
        %v2068 = vadd.f32 %v1786, %v2067
        %v2069 = vpop.f32.mrf.mxu0
        %v2070 = vadd.f32 %v1790, %v2069
        %v2071 = vpop.f32.mrf.mxu0
        %v2072 = vadd.f32 %v1786, %v2071
        %v2073 = vpop.f32.mrf.mxu0
        %v2074 = vadd.f32 %v1790, %v2073
        %2075 = vmatprep.mubr.bf16.mxu0 0
        %2076 = vmatmul.mubr.bf16.gmra.mxu0 %v1725
        %v2077 = vpop.f32.mrf.mxu0
        %v2078 = vadd.f32 %v1786, %v2077
        %v2079 = vpop.f32.mrf.mxu0
        %v2080 = vadd.f32 %v1790, %v2079
        %v2081 = vpop.f32.mrf.mxu0
        %v2082 = vadd.f32 %v1786, %v2081
        %v2083 = vpop.f32.mrf.mxu0
        %v2084 = vadd.f32 %v1790, %v2083
        %2085 = vmatprep.mubr.bf16.mxu0 0
        %2086 = vmatmul.mubr.bf16.gmra.mxu0 %v1726
        %v2087 = vpop.f32.mrf.mxu0
        %v2088 = vadd.f32 %v1786, %v2087
        %v2089 = vpop.f32.mrf.mxu0
        %v2090 = vadd.f32 %v1790, %v2089
        %v2091 = vpop.f32.mrf.mxu0
        %v2092 = vadd.f32 %v1786, %v2091
        %v2093 = vpop.f32.mrf.mxu0
        %v2094 = vadd.f32 %v1790, %v2093
        %2095 = vmatprep.mubr.bf16.mxu0 0
        %2096 = vmatmul.mubr.bf16.gmra.mxu0 %v1727
        %v2097 = vpop.f32.mrf.mxu0
        %v2098 = vadd.f32 %v1786, %v2097
        %v2099 = vpop.f32.mrf.mxu0
        %v2100 = vadd.f32 %v1790, %v2099
        %v2101 = vpop.f32.mrf.mxu0
        %v2102 = vadd.f32 %v1786, %v2101
        %v2103 = vpop.f32.mrf.mxu0
        %v2104 = vadd.f32 %v1790, %v2103
        %2105 = vmatprep.mubr.bf16.mxu0 0
        %2106 = vmatmul.mubr.bf16.gmra.mxu0 %v1728
        %v2107 = vpop.f32.mrf.mxu0
        %v2108 = vadd.f32 %v1786, %v2107
        %v2109 = vpop.f32.mrf.mxu0
        %v2110 = vadd.f32 %v1790, %v2109
        %v2111 = vpop.f32.mrf.mxu0
        %v2112 = vadd.f32 %v1786, %v2111
        %v2113 = vpop.f32.mrf.mxu0
        %v2114 = vadd.f32 %v1790, %v2113
        %2115 = vmatprep.mubr.bf16.mxu0 0
        %2116 = vmatmul.mubr.bf16.gmra.mxu0 %v1729
        %v2117 = vpop.f32.mrf.mxu0
        %v2118 = vadd.f32 %v1786, %v2117
        %v2119 = vpop.f32.mrf.mxu0
        %v2120 = vadd.f32 %v1790, %v2119
        %v2121 = vpop.f32.mrf.mxu0
        %v2122 = vadd.f32 %v1786, %v2121
        %v2123 = vpop.f32.mrf.mxu0
        %v2124 = vadd.f32 %v1790, %v2123
        %2125 = vmatprep.mubr.bf16.mxu0 0
        %2126 = vmatmul.mubr.bf16.gmra.mxu0 %v1730
        %v2127 = vpop.f32.mrf.mxu0
        %v2128 = vadd.f32 %v1786, %v2127
        %v2129 = vpop.f32.mrf.mxu0
        %v2130 = vadd.f32 %v1790, %v2129
        %v2131 = vpop.f32.mrf.mxu0
        %v2132 = vadd.f32 %v1786, %v2131
        %v2133 = vpop.f32.mrf.mxu0
        %v2134 = vadd.f32 %v1790, %v2133
        %2135 = vmatprep.mubr.bf16.mxu0 0
        %2136 = vmatmul.mubr.bf16.gmra.mxu0 %v1731
        %v2137 = vpop.f32.mrf.mxu0
        %v2138 = vadd.f32 %v1786, %v2137
        %v2139 = vpop.f32.mrf.mxu0
        %v2140 = vadd.f32 %v1790, %v2139
        %v2141 = vpop.f32.mrf.mxu0
        %v2142 = vadd.f32 %v1786, %v2141
        %v2143 = vpop.f32.mrf.mxu0
        %v2144 = vadd.f32 %v1790, %v2143
        %2145 = vmatprep.mubr.bf16.mxu0 0
        %2146 = vmatmul.mubr.bf16.gmra.mxu0 %v1732
        %v2147 = vpop.f32.mrf.mxu0
        %v2148 = vadd.f32 %v1786, %v2147
        %v2149 = vpop.f32.mrf.mxu0
        %v2150 = vadd.f32 %v1790, %v2149
        %v2151 = vpop.f32.mrf.mxu0
        %v2152 = vadd.f32 %v1786, %v2151
        %v2153 = vpop.f32.mrf.mxu0
        %v2154 = vadd.f32 %v1790, %v2153
        %2155 = vmatprep.mubr.bf16.mxu0 0
        %2156 = vmatmul.mubr.bf16.gmra.mxu0 %v1733
        %v2157 = vpop.f32.mrf.mxu0
        %v2158 = vadd.f32 %v1786, %v2157
        %v2159 = vpop.f32.mrf.mxu0
        %v2160 = vadd.f32 %v1790, %v2159
        %v2161 = vpop.f32.mrf.mxu0
        %v2162 = vadd.f32 %v1786, %v2161
        %v2163 = vpop.f32.mrf.mxu0
        %v2164 = vadd.f32 %v1790, %v2163
        %2165 = vmatprep.mubr.bf16.mxu0 0
        %2166 = vmatmul.mubr.bf16.gmra.mxu0 %v1734
        %v2167 = vpop.f32.mrf.mxu0
        %v2168 = vadd.f32 %v1786, %v2167
        %v2169 = vpop.f32.mrf.mxu0
        %v2170 = vadd.f32 %v1790, %v2169
        %v2171 = vpop.f32.mrf.mxu0
        %v2172 = vadd.f32 %v1786, %v2171
        %v2173 = vpop.f32.mrf.mxu0
        %v2174 = vadd.f32 %v1790, %v2173
        %2175 = vmatprep.mubr.bf16.mxu0 0
        %2176 = vmatmul.mubr.bf16.gmra.mxu0 %v1735
        %v2177 = vpop.f32.mrf.mxu0
        %v2178 = vadd.f32 %v1786, %v2177
        %v2179 = vpop.f32.mrf.mxu0
        %v2180 = vadd.f32 %v1790, %v2179
        %v2181 = vpop.f32.mrf.mxu0
        %v2182 = vadd.f32 %v1786, %v2181
        %v2183 = vpop.f32.mrf.mxu0
        %v2184 = vadd.f32 %v1790, %v2183
        %2185 = vmatprep.mubr.bf16.mxu0 0
        %2186 = vmatmul.mubr.bf16.gmra.mxu0 %v1736
        %v2187 = vpop.f32.mrf.mxu0
        %v2188 = vadd.f32 %v1786, %v2187
        %v2189 = vpop.f32.mrf.mxu0
        %v2190 = vadd.f32 %v1790, %v2189
        %v2191 = vpop.f32.mrf.mxu0
        %v2192 = vadd.f32 %v1786, %v2191
        %v2193 = vpop.f32.mrf.mxu0
        %v2194 = vadd.f32 %v1790, %v2193
        %2195 = vmatprep.mubr.bf16.mxu0 0
        %2196 = vmatmul.mubr.bf16.gmra.mxu0 %v1737
        %v2197 = vpop.f32.mrf.mxu0
        %v2198 = vadd.f32 %v1786, %v2197
        %v2199 = vpop.f32.mrf.mxu0
        %v2200 = vadd.f32 %v1790, %v2199
        %v2201 = vpop.f32.mrf.mxu0
        %v2202 = vadd.f32 %v1786, %v2201
        %v2203 = vpop.f32.mrf.mxu0
        %v2204 = vadd.f32 %v1790, %v2203
        %2205 = vmatprep.mubr.bf16.mxu0 0
        %2206 = vmatmul.mubr.bf16.gmra.mxu0 %v1738
        %v2207 = vpop.f32.mrf.mxu0
        %v2208 = vadd.f32 %v1786, %v2207
        %v2209 = vpop.f32.mrf.mxu0
        %v2210 = vadd.f32 %v1790, %v2209
        %v2211 = vpop.f32.mrf.mxu0
        %v2212 = vadd.f32 %v1786, %v2211
        %v2213 = vpop.f32.mrf.mxu0
        %v2214 = vadd.f32 %v1790, %v2213
        %2215 = vmatprep.mubr.bf16.mxu0 0
        %2216 = vmatmul.mubr.bf16.gmra.mxu0 %v1739
        %v2217 = vpop.f32.mrf.mxu0
        %v2218 = vadd.f32 %v1786, %v2217
        %v2219 = vpop.f32.mrf.mxu0
        %v2220 = vadd.f32 %v1790, %v2219
        %v2221 = vpop.f32.mrf.mxu0
        %v2222 = vadd.f32 %v1786, %v2221
        %v2223 = vpop.f32.mrf.mxu0
        %v2224 = vadd.f32 %v1790, %v2223
        %2225 = vmatprep.mubr.bf16.mxu0 0
        %2226 = vmatmul.mubr.bf16.gmra.mxu0 %v1740
        %v2227 = vpop.f32.mrf.mxu0
        %v2228 = vadd.f32 %v1786, %v2227
        %v2229 = vpop.f32.mrf.mxu0
        %v2230 = vadd.f32 %v1790, %v2229
        %v2231 = vpop.f32.mrf.mxu0
        %v2232 = vadd.f32 %v1786, %v2231
        %v2233 = vpop.f32.mrf.mxu0
        %v2234 = vadd.f32 %v1790, %v2233
        %2235 = vmatprep.mubr.bf16.mxu0 0
        %2236 = vmatmul.mubr.bf16.gmra.mxu0 %v1741
        %v2237 = vpop.f32.mrf.mxu0
        %v2238 = vadd.f32 %v1786, %v2237
        %v2239 = vpop.f32.mrf.mxu0
        %v2240 = vadd.f32 %v1790, %v2239
        %v2241 = vpop.f32.mrf.mxu0
        %v2242 = vadd.f32 %v1786, %v2241
        %v2243 = vpop.f32.mrf.mxu0
        %v2244 = vadd.f32 %v1790, %v2243
        %2245 = vmatprep.mubr.bf16.mxu0 0
        %2246 = vmatmul.mubr.bf16.gmra.mxu0 %v1742
        %v2247 = vpop.f32.mrf.mxu0
        %v2248 = vadd.f32 %v1786, %v2247
        %v2249 = vpop.f32.mrf.mxu0
        %v2250 = vadd.f32 %v1790, %v2249
        %v2251 = vpop.f32.mrf.mxu0
        %v2252 = vadd.f32 %v1786, %v2251
        %v2253 = vpop.f32.mrf.mxu0
        %v2254 = vadd.f32 %v1790, %v2253
        %2255 = vmatprep.mubr.bf16.mxu0 0
        %2256 = vmatmul.mubr.bf16.gmra.mxu0 %v1743
        %v2257 = vpop.f32.mrf.mxu0
        %v2258 = vadd.f32 %v1786, %v2257
        %v2259 = vpop.f32.mrf.mxu0
        %v2260 = vadd.f32 %v1790, %v2259
        %v2261 = vpop.f32.mrf.mxu0
        %v2262 = vadd.f32 %v1786, %v2261
        %v2263 = vpop.f32.mrf.mxu0
        %v2264 = vadd.f32 %v1790, %v2263
        %2265 = vmatprep.mubr.bf16.mxu0 0
        %2266 = vmatmul.mubr.bf16.gmra.mxu0 %v1744
        %v2267 = vpop.f32.mrf.mxu0
        %v2268 = vadd.f32 %v1786, %v2267
        %v2269 = vpop.f32.mrf.mxu0
        %v2270 = vadd.f32 %v1790, %v2269
        %v2271 = vpop.f32.mrf.mxu0
        %v2272 = vadd.f32 %v1786, %v2271
        %v2273 = vpop.f32.mrf.mxu0
        %v2274 = vadd.f32 %v1790, %v2273
        %2275 = vmatprep.mubr.bf16.mxu0 0
        %2276 = vmatmul.mubr.bf16.gmra.mxu0 %v1745
        %v2277 = vpop.f32.mrf.mxu0
        %v2278 = vadd.f32 %v1786, %v2277
        %v2279 = vpop.f32.mrf.mxu0
        %v2280 = vadd.f32 %v1790, %v2279
        %v2281 = vpop.f32.mrf.mxu0
        %v2282 = vadd.f32 %v1786, %v2281
        %v2283 = vpop.f32.mrf.mxu0
        %v2284 = vadd.f32 %v1790, %v2283
        %2285 = vmatprep.mubr.bf16.mxu0 0
        %2286 = vmatmul.mubr.bf16.gmra.mxu0 %v1746
        %v2287 = vpop.f32.mrf.mxu0
        %v2288 = vadd.f32 %v1786, %v2287
        %v2289 = vpop.f32.mrf.mxu0
        %v2290 = vadd.f32 %v1790, %v2289
        %v2291 = vpop.f32.mrf.mxu0
        %v2292 = vadd.f32 %v1786, %v2291
        %v2293 = vpop.f32.mrf.mxu0
        %v2294 = vadd.f32 %v1790, %v2293
        %2295 = vmatprep.mubr.bf16.mxu0 0
        %2296 = vmatmul.mubr.bf16.gmra.mxu0 %v1747
        %v2297 = vpop.f32.mrf.mxu0
        %v2298 = vadd.f32 %v1786, %v2297
        %v2299 = vpop.f32.mrf.mxu0
        %v2300 = vadd.f32 %v1790, %v2299
        %v2301 = vpop.f32.mrf.mxu0
        %v2302 = vadd.f32 %v1786, %v2301
        %v2303 = vpop.f32.mrf.mxu0
        %v2304 = vadd.f32 %v1790, %v2303
        %2305 = vmatprep.mubr.bf16.mxu0 0
        %2306 = vmatmul.mubr.bf16.gmra.mxu0 %v1748
        %v2307 = vpop.f32.mrf.mxu0
        %v2308 = vadd.f32 %v1786, %v2307
        %v2309 = vpop.f32.mrf.mxu0
        %v2310 = vadd.f32 %v1790, %v2309
        %v2311 = vpop.f32.mrf.mxu0
        %v2312 = vadd.f32 %v1786, %v2311
        %v2313 = vpop.f32.mrf.mxu0
        %v2314 = vadd.f32 %v1790, %v2313
        %2315 = vdwg.mxu0
        %2316 = vmatprep.subr.bf16.mxu0 %v1930
        %2317 = vmatpush1.bf16.msra.mxu0 %v1929
        %2318 = vmatprep.subr.bf16.mxu0 %v1926
        %2319 = vmatpush1.bf16.msra.mxu0 %v1925
        %2320 = vmatprep.subr.bf16.mxu0 %v1922
        %2321 = vmatpush1.bf16.msra.mxu0 %v1921
        %2322 = vmatprep.subr.bf16.mxu0 %v1918
        %2323 = vmatpush1.bf16.msra.mxu0 %v1917
        %2324 = vmatprep.subr.bf16.mxu0 %v1914
        %2325 = vmatpush1.bf16.msra.mxu0 %v1913
        %2326 = vmatprep.subr.bf16.mxu0 %v1910
        %2327 = vmatpush1.bf16.msra.mxu0 %v1909
        %2328 = vmatprep.subr.bf16.mxu0 %v1906
        %2329 = vmatpush1.bf16.msra.mxu0 %v1905
        %2330 = vmatprep.subr.bf16.mxu0 %v1902
        %2331 = vmatpush1.bf16.msra.mxu0 %v1901
        %2332 = vmatprep.subr.bf16.mxu0 0
        %2333 = vmatpush2.bf16.msra.mxu0 0
        %2334 = vmatprep.subr.bf16.mxu0 0
        %2335 = vmatpush2.bf16.msra.mxu0 0
        %2336 = vmatprep.subr.bf16.mxu0 0
        %2337 = vmatpush2.bf16.msra.mxu0 0
        %2338 = vmatprep.subr.bf16.mxu0 0
        %2339 = vmatpush2.bf16.msra.mxu0 0
        %2340 = vmatprep.subr.bf16.mxu0 0
        %2341 = vmatpush2.bf16.msra.mxu0 0
        %2342 = vmatprep.subr.bf16.mxu0 0
        %2343 = vmatpush2.bf16.msra.mxu0 0
        %2344 = vmatprep.subr.bf16.mxu0 0
        %2345 = vmatpush2.bf16.msra.mxu0 0
        %2346 = vmatprep.subr.bf16.mxu0 0
        %2347 = vmatpush2.bf16.msra.mxu0 0
        %2348 = vmatprep.mubr.bf16.mxu0 0
        %2349 = vmatmul.mubr.bf16.gmra.mxu0 %v1717
        %v2350 = vpop.f32.mrf.mxu0
        %v2351 = vadd.f32 %v1794, %v2350
        %v2352 = vpop.f32.mrf.mxu0
        %v2353 = vadd.f32 %v1798, %v2352
        %v2354 = vpop.f32.mrf.mxu0
        %v2355 = vadd.f32 %v1794, %v2354
        %v2356 = vpop.f32.mrf.mxu0
        %v2357 = vadd.f32 %v1798, %v2356
        %2358 = vmatprep.mubr.bf16.mxu0 0
        %2359 = vmatmul.mubr.bf16.gmra.mxu0 %v1718
        %v2360 = vpop.f32.mrf.mxu0
        %v2361 = vadd.f32 %v1794, %v2360
        %v2362 = vpop.f32.mrf.mxu0
        %v2363 = vadd.f32 %v1798, %v2362
        %v2364 = vpop.f32.mrf.mxu0
        %v2365 = vadd.f32 %v1794, %v2364
        %v2366 = vpop.f32.mrf.mxu0
        %v2367 = vadd.f32 %v1798, %v2366
        %2368 = vmatprep.mubr.bf16.mxu0 0
        %2369 = vmatmul.mubr.bf16.gmra.mxu0 %v1719
        %v2370 = vpop.f32.mrf.mxu0
        %v2371 = vadd.f32 %v1794, %v2370
        %v2372 = vpop.f32.mrf.mxu0
        %v2373 = vadd.f32 %v1798, %v2372
        %v2374 = vpop.f32.mrf.mxu0
        %v2375 = vadd.f32 %v1794, %v2374
        %v2376 = vpop.f32.mrf.mxu0
        %v2377 = vadd.f32 %v1798, %v2376
        %2378 = vmatprep.mubr.bf16.mxu0 0
        %2379 = vmatmul.mubr.bf16.gmra.mxu0 %v1720
        %v2380 = vpop.f32.mrf.mxu0
        %v2381 = vadd.f32 %v1794, %v2380
        %v2382 = vpop.f32.mrf.mxu0
        %v2383 = vadd.f32 %v1798, %v2382
        %v2384 = vpop.f32.mrf.mxu0
        %v2385 = vadd.f32 %v1794, %v2384
        %v2386 = vpop.f32.mrf.mxu0
        %v2387 = vadd.f32 %v1798, %v2386
        %2388 = vmatprep.mubr.bf16.mxu0 0
        %2389 = vmatmul.mubr.bf16.gmra.mxu0 %v1721
        %v2390 = vpop.f32.mrf.mxu0
        %v2391 = vadd.f32 %v1794, %v2390
        %v2392 = vpop.f32.mrf.mxu0
        %v2393 = vadd.f32 %v1798, %v2392
        %v2394 = vpop.f32.mrf.mxu0
        %v2395 = vadd.f32 %v1794, %v2394
        %v2396 = vpop.f32.mrf.mxu0
        %v2397 = vadd.f32 %v1798, %v2396
        %2398 = vmatprep.mubr.bf16.mxu0 0
        %2399 = vmatmul.mubr.bf16.gmra.mxu0 %v1722
        %v2400 = vpop.f32.mrf.mxu0
        %v2401 = vadd.f32 %v1794, %v2400
        %v2402 = vpop.f32.mrf.mxu0
        %v2403 = vadd.f32 %v1798, %v2402
        %v2404 = vpop.f32.mrf.mxu0
        %v2405 = vadd.f32 %v1794, %v2404
        %v2406 = vpop.f32.mrf.mxu0
        %v2407 = vadd.f32 %v1798, %v2406
        %2408 = vmatprep.mubr.bf16.mxu0 0
        %2409 = vmatmul.mubr.bf16.gmra.mxu0 %v1723
        %v2410 = vpop.f32.mrf.mxu0
        %v2411 = vadd.f32 %v1794, %v2410
        %v2412 = vpop.f32.mrf.mxu0
        %v2413 = vadd.f32 %v1798, %v2412
        %v2414 = vpop.f32.mrf.mxu0
        %v2415 = vadd.f32 %v1794, %v2414
        %v2416 = vpop.f32.mrf.mxu0
        %v2417 = vadd.f32 %v1798, %v2416
        %2418 = vmatprep.mubr.bf16.mxu0 0
        %2419 = vmatmul.mubr.bf16.gmra.mxu0 %v1724
        %v2420 = vpop.f32.mrf.mxu0
        %v2421 = vadd.f32 %v1794, %v2420
        %v2422 = vpop.f32.mrf.mxu0
        %v2423 = vadd.f32 %v1798, %v2422
        %v2424 = vpop.f32.mrf.mxu0
        %v2425 = vadd.f32 %v1794, %v2424
        %v2426 = vpop.f32.mrf.mxu0
        %v2427 = vadd.f32 %v1798, %v2426
        %2428 = vmatprep.mubr.bf16.mxu0 0
        %2429 = vmatmul.mubr.bf16.gmra.mxu0 %v1725
        %v2430 = vpop.f32.mrf.mxu0
        %v2431 = vadd.f32 %v1794, %v2430
        %v2432 = vpop.f32.mrf.mxu0
        %v2433 = vadd.f32 %v1798, %v2432
        %v2434 = vpop.f32.mrf.mxu0
        %v2435 = vadd.f32 %v1794, %v2434
        %v2436 = vpop.f32.mrf.mxu0
        %v2437 = vadd.f32 %v1798, %v2436
        %2438 = vmatprep.mubr.bf16.mxu0 0
        %2439 = vmatmul.mubr.bf16.gmra.mxu0 %v1726
        %v2440 = vpop.f32.mrf.mxu0
        %v2441 = vadd.f32 %v1794, %v2440
        %v2442 = vpop.f32.mrf.mxu0
        %v2443 = vadd.f32 %v1798, %v2442
        %v2444 = vpop.f32.mrf.mxu0
        %v2445 = vadd.f32 %v1794, %v2444
        %v2446 = vpop.f32.mrf.mxu0
        %v2447 = vadd.f32 %v1798, %v2446
        %2448 = vmatprep.mubr.bf16.mxu0 0
        %2449 = vmatmul.mubr.bf16.gmra.mxu0 %v1727
        %v2450 = vpop.f32.mrf.mxu0
        %v2451 = vadd.f32 %v1794, %v2450
        %v2452 = vpop.f32.mrf.mxu0
        %v2453 = vadd.f32 %v1798, %v2452
        %v2454 = vpop.f32.mrf.mxu0
        %v2455 = vadd.f32 %v1794, %v2454
        %v2456 = vpop.f32.mrf.mxu0
        %v2457 = vadd.f32 %v1798, %v2456
        %2458 = vmatprep.mubr.bf16.mxu0 0
        %2459 = vmatmul.mubr.bf16.gmra.mxu0 %v1728
        %v2460 = vpop.f32.mrf.mxu0
        %v2461 = vadd.f32 %v1794, %v2460
        %v2462 = vpop.f32.mrf.mxu0
        %v2463 = vadd.f32 %v1798, %v2462
        %v2464 = vpop.f32.mrf.mxu0
        %v2465 = vadd.f32 %v1794, %v2464
        %v2466 = vpop.f32.mrf.mxu0
        %v2467 = vadd.f32 %v1798, %v2466
        %2468 = vmatprep.mubr.bf16.mxu0 0
        %2469 = vmatmul.mubr.bf16.gmra.mxu0 %v1729
        %v2470 = vpop.f32.mrf.mxu0
        %v2471 = vadd.f32 %v1794, %v2470
        %v2472 = vpop.f32.mrf.mxu0
        %v2473 = vadd.f32 %v1798, %v2472
        %v2474 = vpop.f32.mrf.mxu0
        %v2475 = vadd.f32 %v1794, %v2474
        %v2476 = vpop.f32.mrf.mxu0
        %v2477 = vadd.f32 %v1798, %v2476
        %2478 = vmatprep.mubr.bf16.mxu0 0
        %2479 = vmatmul.mubr.bf16.gmra.mxu0 %v1730
        %v2480 = vpop.f32.mrf.mxu0
        %v2481 = vadd.f32 %v1794, %v2480
        %v2482 = vpop.f32.mrf.mxu0
        %v2483 = vadd.f32 %v1798, %v2482
        %v2484 = vpop.f32.mrf.mxu0
        %v2485 = vadd.f32 %v1794, %v2484
        %v2486 = vpop.f32.mrf.mxu0
        %v2487 = vadd.f32 %v1798, %v2486
        %2488 = vmatprep.mubr.bf16.mxu0 0
        %2489 = vmatmul.mubr.bf16.gmra.mxu0 %v1731
        %v2490 = vpop.f32.mrf.mxu0
        %v2491 = vadd.f32 %v1794, %v2490
        %v2492 = vpop.f32.mrf.mxu0
        %v2493 = vadd.f32 %v1798, %v2492
        %v2494 = vpop.f32.mrf.mxu0
        %v2495 = vadd.f32 %v1794, %v2494
        %v2496 = vpop.f32.mrf.mxu0
        %v2497 = vadd.f32 %v1798, %v2496
        %2498 = vmatprep.mubr.bf16.mxu0 0
        %2499 = vmatmul.mubr.bf16.gmra.mxu0 %v1732
        %v2500 = vpop.f32.mrf.mxu0
        %v2501 = vadd.f32 %v1794, %v2500
        %v2502 = vpop.f32.mrf.mxu0
        %v2503 = vadd.f32 %v1798, %v2502
        %v2504 = vpop.f32.mrf.mxu0
        %v2505 = vadd.f32 %v1794, %v2504
        %v2506 = vpop.f32.mrf.mxu0
        %v2507 = vadd.f32 %v1798, %v2506
        %2508 = vmatprep.mubr.bf16.mxu0 0
        %2509 = vmatmul.mubr.bf16.gmra.mxu0 %v1733
        %v2510 = vpop.f32.mrf.mxu0
        %v2511 = vadd.f32 %v1794, %v2510
        %v2512 = vpop.f32.mrf.mxu0
        %v2513 = vadd.f32 %v1798, %v2512
        %v2514 = vpop.f32.mrf.mxu0
        %v2515 = vadd.f32 %v1794, %v2514
        %v2516 = vpop.f32.mrf.mxu0
        %v2517 = vadd.f32 %v1798, %v2516
        %2518 = vmatprep.mubr.bf16.mxu0 0
        %2519 = vmatmul.mubr.bf16.gmra.mxu0 %v1734
        %v2520 = vpop.f32.mrf.mxu0
        %v2521 = vadd.f32 %v1794, %v2520
        %v2522 = vpop.f32.mrf.mxu0
        %v2523 = vadd.f32 %v1798, %v2522
        %v2524 = vpop.f32.mrf.mxu0
        %v2525 = vadd.f32 %v1794, %v2524
        %v2526 = vpop.f32.mrf.mxu0
        %v2527 = vadd.f32 %v1798, %v2526
        %2528 = vmatprep.mubr.bf16.mxu0 0
        %2529 = vmatmul.mubr.bf16.gmra.mxu0 %v1735
        %v2530 = vpop.f32.mrf.mxu0
        %v2531 = vadd.f32 %v1794, %v2530
        %v2532 = vpop.f32.mrf.mxu0
        %v2533 = vadd.f32 %v1798, %v2532
        %v2534 = vpop.f32.mrf.mxu0
        %v2535 = vadd.f32 %v1794, %v2534
        %v2536 = vpop.f32.mrf.mxu0
        %v2537 = vadd.f32 %v1798, %v2536
        %2538 = vmatprep.mubr.bf16.mxu0 0
        %2539 = vmatmul.mubr.bf16.gmra.mxu0 %v1736
        %v2540 = vpop.f32.mrf.mxu0
        %v2541 = vadd.f32 %v1794, %v2540
        %v2542 = vpop.f32.mrf.mxu0
        %v2543 = vadd.f32 %v1798, %v2542
        %v2544 = vpop.f32.mrf.mxu0
        %v2545 = vadd.f32 %v1794, %v2544
        %v2546 = vpop.f32.mrf.mxu0
        %v2547 = vadd.f32 %v1798, %v2546
        %2548 = vmatprep.mubr.bf16.mxu0 0
        %2549 = vmatmul.mubr.bf16.gmra.mxu0 %v1737
        %v2550 = vpop.f32.mrf.mxu0
        %v2551 = vadd.f32 %v1794, %v2550
        %v2552 = vpop.f32.mrf.mxu0
        %v2553 = vadd.f32 %v1798, %v2552
        %v2554 = vpop.f32.mrf.mxu0
        %v2555 = vadd.f32 %v1794, %v2554
        %v2556 = vpop.f32.mrf.mxu0
        %v2557 = vadd.f32 %v1798, %v2556
        %2558 = vmatprep.mubr.bf16.mxu0 0
        %2559 = vmatmul.mubr.bf16.gmra.mxu0 %v1738
        %v2560 = vpop.f32.mrf.mxu0
        %v2561 = vadd.f32 %v1794, %v2560
        %v2562 = vpop.f32.mrf.mxu0
        %v2563 = vadd.f32 %v1798, %v2562
        %v2564 = vpop.f32.mrf.mxu0
        %v2565 = vadd.f32 %v1794, %v2564
        %v2566 = vpop.f32.mrf.mxu0
        %v2567 = vadd.f32 %v1798, %v2566
        %2568 = vmatprep.mubr.bf16.mxu0 0
        %2569 = vmatmul.mubr.bf16.gmra.mxu0 %v1739
        %v2570 = vpop.f32.mrf.mxu0
        %v2571 = vadd.f32 %v1794, %v2570
        %v2572 = vpop.f32.mrf.mxu0
        %v2573 = vadd.f32 %v1798, %v2572
        %v2574 = vpop.f32.mrf.mxu0
        %v2575 = vadd.f32 %v1794, %v2574
        %v2576 = vpop.f32.mrf.mxu0
        %v2577 = vadd.f32 %v1798, %v2576
        %2578 = vmatprep.mubr.bf16.mxu0 0
        %2579 = vmatmul.mubr.bf16.gmra.mxu0 %v1740
        %v2580 = vpop.f32.mrf.mxu0
        %v2581 = vadd.f32 %v1794, %v2580
        %v2582 = vpop.f32.mrf.mxu0
        %v2583 = vadd.f32 %v1798, %v2582
        %v2584 = vpop.f32.mrf.mxu0
        %v2585 = vadd.f32 %v1794, %v2584
        %v2586 = vpop.f32.mrf.mxu0
        %v2587 = vadd.f32 %v1798, %v2586
        %2588 = vmatprep.mubr.bf16.mxu0 0
        %2589 = vmatmul.mubr.bf16.gmra.mxu0 %v1741
        %v2590 = vpop.f32.mrf.mxu0
        %v2591 = vadd.f32 %v1794, %v2590
        %v2592 = vpop.f32.mrf.mxu0
        %v2593 = vadd.f32 %v1798, %v2592
        %v2594 = vpop.f32.mrf.mxu0
        %v2595 = vadd.f32 %v1794, %v2594
        %v2596 = vpop.f32.mrf.mxu0
        %v2597 = vadd.f32 %v1798, %v2596
        %2598 = vmatprep.mubr.bf16.mxu0 0
        %2599 = vmatmul.mubr.bf16.gmra.mxu0 %v1742
        %v2600 = vpop.f32.mrf.mxu0
        %v2601 = vadd.f32 %v1794, %v2600
        %v2602 = vpop.f32.mrf.mxu0
        %v2603 = vadd.f32 %v1798, %v2602
        %v2604 = vpop.f32.mrf.mxu0
        %v2605 = vadd.f32 %v1794, %v2604
        %v2606 = vpop.f32.mrf.mxu0
        %v2607 = vadd.f32 %v1798, %v2606
        %2608 = vmatprep.mubr.bf16.mxu0 0
        %2609 = vmatmul.mubr.bf16.gmra.mxu0 %v1743
        %v2610 = vpop.f32.mrf.mxu0
        %v2611 = vadd.f32 %v1794, %v2610
        %v2612 = vpop.f32.mrf.mxu0
        %v2613 = vadd.f32 %v1798, %v2612
        %v2614 = vpop.f32.mrf.mxu0
        %v2615 = vadd.f32 %v1794, %v2614
        %v2616 = vpop.f32.mrf.mxu0
        %v2617 = vadd.f32 %v1798, %v2616
        %2618 = vmatprep.mubr.bf16.mxu0 0
        %2619 = vmatmul.mubr.bf16.gmra.mxu0 %v1744
        %v2620 = vpop.f32.mrf.mxu0
        %v2621 = vadd.f32 %v1794, %v2620
        %v2622 = vpop.f32.mrf.mxu0
        %v2623 = vadd.f32 %v1798, %v2622
        %v2624 = vpop.f32.mrf.mxu0
        %v2625 = vadd.f32 %v1794, %v2624
        %v2626 = vpop.f32.mrf.mxu0
        %v2627 = vadd.f32 %v1798, %v2626
        %2628 = vmatprep.mubr.bf16.mxu0 0
        %2629 = vmatmul.mubr.bf16.gmra.mxu0 %v1745
        %v2630 = vpop.f32.mrf.mxu0
        %v2631 = vadd.f32 %v1794, %v2630
        %v2632 = vpop.f32.mrf.mxu0
        %v2633 = vadd.f32 %v1798, %v2632
        %v2634 = vpop.f32.mrf.mxu0
        %v2635 = vadd.f32 %v1794, %v2634
        %v2636 = vpop.f32.mrf.mxu0
        %v2637 = vadd.f32 %v1798, %v2636
        %2638 = vmatprep.mubr.bf16.mxu0 0
        %2639 = vmatmul.mubr.bf16.gmra.mxu0 %v1746
        %v2640 = vpop.f32.mrf.mxu0
        %v2641 = vadd.f32 %v1794, %v2640
        %v2642 = vpop.f32.mrf.mxu0
        %v2643 = vadd.f32 %v1798, %v2642
        %v2644 = vpop.f32.mrf.mxu0
        %v2645 = vadd.f32 %v1794, %v2644
        %v2646 = vpop.f32.mrf.mxu0
        %v2647 = vadd.f32 %v1798, %v2646
        %2648 = vmatprep.mubr.bf16.mxu0 0
        %2649 = vmatmul.mubr.bf16.gmra.mxu0 %v1747
        %v2650 = vpop.f32.mrf.mxu0
        %v2651 = vadd.f32 %v1794, %v2650
        %v2652 = vpop.f32.mrf.mxu0
        %v2653 = vadd.f32 %v1798, %v2652
        %v2654 = vpop.f32.mrf.mxu0
        %v2655 = vadd.f32 %v1794, %v2654
        %v2656 = vpop.f32.mrf.mxu0
        %v2657 = vadd.f32 %v1798, %v2656
        %2658 = vmatprep.mubr.bf16.mxu0 0
        %2659 = vmatmul.mubr.bf16.gmra.mxu0 %v1748
        %v2660 = vpop.f32.mrf.mxu0
        %v2661 = vadd.f32 %v1794, %v2660
        %v2662 = vpop.f32.mrf.mxu0
        %v2663 = vadd.f32 %v1798, %v2662
        %v2664 = vpop.f32.mrf.mxu0
        %v2665 = vadd.f32 %v1794, %v2664
        %v2666 = vpop.f32.mrf.mxu0
        %v2667 = vadd.f32 %v1798, %v2666
        %2668 = vdwg.mxu0
        %v2669 = vmax.f32 %v1998, 0.0
        %v2670 = vmax.f32 %v2000, 0.0
        %v2671 = vmax.f32 %v2351, 0.0
        %v2672 = vmax.f32 %v2353, 0.0
        %v2673 = vmax.f32 %v2002, 0.0
        %v2674 = vmax.f32 %v2004, 0.0
        %v2675 = vmax.f32 %v2355, 0.0
        %v2676 = vmax.f32 %v2357, 0.0
        %v2677 = vmax.f32 %v2008, 0.0
        %v2678 = vmax.f32 %v2010, 0.0
        %v2679 = vmax.f32 %v2361, 0.0
        %v2680 = vmax.f32 %v2363, 0.0
        %v2681 = vmax.f32 %v2012, 0.0
        %v2682 = vmax.f32 %v2014, 0.0
        %v2683 = vmax.f32 %v2365, 0.0
        %v2684 = vmax.f32 %v2367, 0.0
        %v2685 = vmax.f32 %v2018, 0.0
        %v2686 = vmax.f32 %v2020, 0.0
        %v2687 = vmax.f32 %v2371, 0.0
        %v2688 = vmax.f32 %v2373, 0.0
        %v2689 = vmax.f32 %v2022, 0.0
        %v2690 = vmax.f32 %v2024, 0.0
        %v2691 = vmax.f32 %v2375, 0.0
        %v2692 = vmax.f32 %v2377, 0.0
        %v2693 = vmax.f32 %v2028, 0.0
        %v2694 = vmax.f32 %v2030, 0.0
        %v2695 = vmax.f32 %v2381, 0.0
        %v2696 = vmax.f32 %v2383, 0.0
        %v2697 = vmax.f32 %v2032, 0.0
        %v2698 = vmax.f32 %v2034, 0.0
        %v2699 = vmax.f32 %v2385, 0.0
        %v2700 = vmax.f32 %v2387, 0.0
        %v2701 = vmax.f32 %v2038, 0.0
        %v2702 = vmax.f32 %v2040, 0.0
        %v2703 = vmax.f32 %v2391, 0.0
        %v2704 = vmax.f32 %v2393, 0.0
        %v2705 = vmax.f32 %v2042, 0.0
        %v2706 = vmax.f32 %v2044, 0.0
        %v2707 = vmax.f32 %v2395, 0.0
        %v2708 = vmax.f32 %v2397, 0.0
        %v2709 = vmax.f32 %v2048, 0.0
        %v2710 = vmax.f32 %v2050, 0.0
        %v2711 = vmax.f32 %v2401, 0.0
        %v2712 = vmax.f32 %v2403, 0.0
        %v2713 = vmax.f32 %v2052, 0.0
        %v2714 = vmax.f32 %v2054, 0.0
        %v2715 = vmax.f32 %v2405, 0.0
        %v2716 = vmax.f32 %v2407, 0.0
        %v2717 = vmax.f32 %v2058, 0.0
        %v2718 = vmax.f32 %v2060, 0.0
        %v2719 = vmax.f32 %v2411, 0.0
        %v2720 = vmax.f32 %v2413, 0.0
        %v2721 = vmax.f32 %v2062, 0.0
        %v2722 = vmax.f32 %v2064, 0.0
        %v2723 = vmax.f32 %v2415, 0.0
        %v2724 = vmax.f32 %v2417, 0.0
        %v2725 = vmax.f32 %v2068, 0.0
        %v2726 = vmax.f32 %v2070, 0.0
        %v2727 = vmax.f32 %v2421, 0.0
        %v2728 = vmax.f32 %v2423, 0.0
        %v2729 = vmax.f32 %v2072, 0.0
        %v2730 = vmax.f32 %v2074, 0.0
        %v2731 = vmax.f32 %v2425, 0.0
        %v2732 = vmax.f32 %v2427, 0.0
        %v2733 = vmax.f32 %v2078, 0.0
        %v2734 = vmax.f32 %v2080, 0.0
        %v2735 = vmax.f32 %v2431, 0.0
        %v2736 = vmax.f32 %v2433, 0.0
        %v2737 = vmax.f32 %v2082, 0.0
        %v2738 = vmax.f32 %v2084, 0.0
        %v2739 = vmax.f32 %v2435, 0.0
        %v2740 = vmax.f32 %v2437, 0.0
        %v2741 = vmax.f32 %v2088, 0.0
        %v2742 = vmax.f32 %v2090, 0.0
        %v2743 = vmax.f32 %v2441, 0.0
        %v2744 = vmax.f32 %v2443, 0.0
        %v2745 = vmax.f32 %v2092, 0.0
        %v2746 = vmax.f32 %v2094, 0.0
        %v2747 = vmax.f32 %v2445, 0.0
        %v2748 = vmax.f32 %v2447, 0.0
        %v2749 = vmax.f32 %v2098, 0.0
        %v2750 = vmax.f32 %v2100, 0.0
        %v2751 = vmax.f32 %v2451, 0.0
        %v2752 = vmax.f32 %v2453, 0.0
        %v2753 = vmax.f32 %v2102, 0.0
        %v2754 = vmax.f32 %v2104, 0.0
        %v2755 = vmax.f32 %v2455, 0.0
        %v2756 = vmax.f32 %v2457, 0.0
        %v2757 = vmax.f32 %v2108, 0.0
        %v2758 = vmax.f32 %v2110, 0.0
        %v2759 = vmax.f32 %v2461, 0.0
        %v2760 = vmax.f32 %v2463, 0.0
        %v2761 = vmax.f32 %v2112, 0.0
        %v2762 = vmax.f32 %v2114, 0.0
        %v2763 = vmax.f32 %v2465, 0.0
        %v2764 = vmax.f32 %v2467, 0.0
        %v2765 = vmax.f32 %v2118, 0.0
        %v2766 = vmax.f32 %v2120, 0.0
        %v2767 = vmax.f32 %v2471, 0.0
        %v2768 = vmax.f32 %v2473, 0.0
        %v2769 = vmax.f32 %v2122, 0.0
        %v2770 = vmax.f32 %v2124, 0.0
        %v2771 = vmax.f32 %v2475, 0.0
        %v2772 = vmax.f32 %v2477, 0.0
        %v2773 = vmax.f32 %v2128, 0.0
        %v2774 = vmax.f32 %v2130, 0.0
        %v2775 = vmax.f32 %v2481, 0.0
        %v2776 = vmax.f32 %v2483, 0.0
        %v2777 = vmax.f32 %v2132, 0.0
        %v2778 = vmax.f32 %v2134, 0.0
        %v2779 = vmax.f32 %v2485, 0.0
        %v2780 = vmax.f32 %v2487, 0.0
        %v2781 = vmax.f32 %v2138, 0.0
        %v2782 = vmax.f32 %v2140, 0.0
        %v2783 = vmax.f32 %v2491, 0.0
        %v2784 = vmax.f32 %v2493, 0.0
        %v2785 = vmax.f32 %v2142, 0.0
        %v2786 = vmax.f32 %v2144, 0.0
        %v2787 = vmax.f32 %v2495, 0.0
        %v2788 = vmax.f32 %v2497, 0.0
        %v2789 = vmax.f32 %v2148, 0.0
        %v2790 = vmax.f32 %v2150, 0.0
        %v2791 = vmax.f32 %v2501, 0.0
        %v2792 = vmax.f32 %v2503, 0.0
        %v2793 = vmax.f32 %v2152, 0.0
        %v2794 = vmax.f32 %v2154, 0.0
        %v2795 = vmax.f32 %v2505, 0.0
        %v2796 = vmax.f32 %v2507, 0.0
        %v2797 = vmax.f32 %v2158, 0.0
        %v2798 = vmax.f32 %v2160, 0.0
        %v2799 = vmax.f32 %v2511, 0.0
        %v2800 = vmax.f32 %v2513, 0.0
        %v2801 = vmax.f32 %v2162, 0.0
        %v2802 = vmax.f32 %v2164, 0.0
        %v2803 = vmax.f32 %v2515, 0.0
        %v2804 = vmax.f32 %v2517, 0.0
        %v2805 = vmax.f32 %v2168, 0.0
        %v2806 = vmax.f32 %v2170, 0.0
        %v2807 = vmax.f32 %v2521, 0.0
        %v2808 = vmax.f32 %v2523, 0.0
        %v2809 = vmax.f32 %v2172, 0.0
        %v2810 = vmax.f32 %v2174, 0.0
        %v2811 = vmax.f32 %v2525, 0.0
        %v2812 = vmax.f32 %v2527, 0.0
        %v2813 = vmax.f32 %v2178, 0.0
        %v2814 = vmax.f32 %v2180, 0.0
        %v2815 = vmax.f32 %v2531, 0.0
        %v2816 = vmax.f32 %v2533, 0.0
        %v2817 = vmax.f32 %v2182, 0.0
        %v2818 = vmax.f32 %v2184, 0.0
        %v2819 = vmax.f32 %v2535, 0.0
        %v2820 = vmax.f32 %v2537, 0.0
        %v2821 = vmax.f32 %v2188, 0.0
        %v2822 = vmax.f32 %v2190, 0.0
        %v2823 = vmax.f32 %v2541, 0.0
        %v2824 = vmax.f32 %v2543, 0.0
        %v2825 = vmax.f32 %v2192, 0.0
        %v2826 = vmax.f32 %v2194, 0.0
        %v2827 = vmax.f32 %v2545, 0.0
        %v2828 = vmax.f32 %v2547, 0.0
        %v2829 = vmax.f32 %v2198, 0.0
        %v2830 = vmax.f32 %v2200, 0.0
        %v2831 = vmax.f32 %v2551, 0.0
        %v2832 = vmax.f32 %v2553, 0.0
        %v2833 = vmax.f32 %v2202, 0.0
        %v2834 = vmax.f32 %v2204, 0.0
        %v2835 = vmax.f32 %v2555, 0.0
        %v2836 = vmax.f32 %v2557, 0.0
        %v2837 = vmax.f32 %v2208, 0.0
        %v2838 = vmax.f32 %v2210, 0.0
        %v2839 = vmax.f32 %v2561, 0.0
        %v2840 = vmax.f32 %v2563, 0.0
        %v2841 = vmax.f32 %v2212, 0.0
        %v2842 = vmax.f32 %v2214, 0.0
        %v2843 = vmax.f32 %v2565, 0.0
        %v2844 = vmax.f32 %v2567, 0.0
        %v2845 = vmax.f32 %v2218, 0.0
        %v2846 = vmax.f32 %v2220, 0.0
        %v2847 = vmax.f32 %v2571, 0.0
        %v2848 = vmax.f32 %v2573, 0.0
        %v2849 = vmax.f32 %v2222, 0.0
        %v2850 = vmax.f32 %v2224, 0.0
        %v2851 = vmax.f32 %v2575, 0.0
        %v2852 = vmax.f32 %v2577, 0.0
        %v2853 = vmax.f32 %v2228, 0.0
        %v2854 = vmax.f32 %v2230, 0.0
        %v2855 = vmax.f32 %v2581, 0.0
        %v2856 = vmax.f32 %v2583, 0.0
        %v2857 = vmax.f32 %v2232, 0.0
        %v2858 = vmax.f32 %v2234, 0.0
        %v2859 = vmax.f32 %v2585, 0.0
        %v2860 = vmax.f32 %v2587, 0.0
        %v2861 = vmax.f32 %v2238, 0.0
        %v2862 = vmax.f32 %v2240, 0.0
        %v2863 = vmax.f32 %v2591, 0.0
        %v2864 = vmax.f32 %v2593, 0.0
        %v2865 = vmax.f32 %v2242, 0.0
        %v2866 = vmax.f32 %v2244, 0.0
        %v2867 = vmax.f32 %v2595, 0.0
        %v2868 = vmax.f32 %v2597, 0.0
        %v2869 = vmax.f32 %v2248, 0.0
        %v2870 = vmax.f32 %v2250, 0.0
        %v2871 = vmax.f32 %v2601, 0.0
        %v2872 = vmax.f32 %v2603, 0.0
        %v2873 = vmax.f32 %v2252, 0.0
        %v2874 = vmax.f32 %v2254, 0.0
        %v2875 = vmax.f32 %v2605, 0.0
        %v2876 = vmax.f32 %v2607, 0.0
        %v2877 = vmax.f32 %v2258, 0.0
        %v2878 = vmax.f32 %v2260, 0.0
        %v2879 = vmax.f32 %v2611, 0.0
        %v2880 = vmax.f32 %v2613, 0.0
        %v2881 = vmax.f32 %v2262, 0.0
        %v2882 = vmax.f32 %v2264, 0.0
        %v2883 = vmax.f32 %v2615, 0.0
        %v2884 = vmax.f32 %v2617, 0.0
        %v2885 = vmax.f32 %v2268, 0.0
        %v2886 = vmax.f32 %v2270, 0.0
        %v2887 = vmax.f32 %v2621, 0.0
        %v2888 = vmax.f32 %v2623, 0.0
        %v2889 = vmax.f32 %v2272, 0.0
        %v2890 = vmax.f32 %v2274, 0.0
        %v2891 = vmax.f32 %v2625, 0.0
        %v2892 = vmax.f32 %v2627, 0.0
        %v2893 = vmax.f32 %v2278, 0.0
        %v2894 = vmax.f32 %v2280, 0.0
        %v2895 = vmax.f32 %v2631, 0.0
        %v2896 = vmax.f32 %v2633, 0.0
        %v2897 = vmax.f32 %v2282, 0.0
        %v2898 = vmax.f32 %v2284, 0.0
        %v2899 = vmax.f32 %v2635, 0.0
        %v2900 = vmax.f32 %v2637, 0.0
        %v2901 = vmax.f32 %v2288, 0.0
        %v2902 = vmax.f32 %v2290, 0.0
        %v2903 = vmax.f32 %v2641, 0.0
        %v2904 = vmax.f32 %v2643, 0.0
        %v2905 = vmax.f32 %v2292, 0.0
        %v2906 = vmax.f32 %v2294, 0.0
        %v2907 = vmax.f32 %v2645, 0.0
        %v2908 = vmax.f32 %v2647, 0.0
        %v2909 = vmax.f32 %v2298, 0.0
        %v2910 = vmax.f32 %v2300, 0.0
        %v2911 = vmax.f32 %v2651, 0.0
        %v2912 = vmax.f32 %v2653, 0.0
        %v2913 = vmax.f32 %v2302, 0.0
        %v2914 = vmax.f32 %v2304, 0.0
        %v2915 = vmax.f32 %v2655, 0.0
        %v2916 = vmax.f32 %v2657, 0.0
        %v2917 = vmax.f32 %v2308, 0.0
        %v2918 = vmax.f32 %v2310, 0.0
        %v2919 = vmax.f32 %v2661, 0.0
        %v2920 = vmax.f32 %v2663, 0.0
        %v2921 = vmax.f32 %v2312, 0.0
        %v2922 = vmax.f32 %v2314, 0.0
        %v2923 = vmax.f32 %v2665, 0.0
        %v2924 = vmax.f32 %v2667, 0.0
        %v2925 = vpack.c.bf16 %v2673, %v2669
        %v2926 = vpack.c.bf16 %v2674, %v2670
        %v2927 = vpack.c.bf16 %v2675, %v2671
        %v2928 = vpack.c.bf16 %v2676, %v2672
        %v2929 = vpack.c.bf16 %v2681, %v2677
        %v2930 = vpack.c.bf16 %v2682, %v2678
        %v2931 = vpack.c.bf16 %v2683, %v2679
        %v2932 = vpack.c.bf16 %v2684, %v2680
        %v2933 = vpack.c.bf16 %v2689, %v2685
        %v2934 = vpack.c.bf16 %v2690, %v2686
        %v2935 = vpack.c.bf16 %v2691, %v2687
        %v2936 = vpack.c.bf16 %v2692, %v2688
        %v2937 = vpack.c.bf16 %v2697, %v2693
        %v2938 = vpack.c.bf16 %v2698, %v2694
        %v2939 = vpack.c.bf16 %v2699, %v2695
        %v2940 = vpack.c.bf16 %v2700, %v2696
        %v2941 = vpack.c.bf16 %v2705, %v2701
        %v2942 = vpack.c.bf16 %v2706, %v2702
        %v2943 = vpack.c.bf16 %v2707, %v2703
        %v2944 = vpack.c.bf16 %v2708, %v2704
        %v2945 = vpack.c.bf16 %v2713, %v2709
        %v2946 = vpack.c.bf16 %v2714, %v2710
        %v2947 = vpack.c.bf16 %v2715, %v2711
        %v2948 = vpack.c.bf16 %v2716, %v2712
        %v2949 = vpack.c.bf16 %v2721, %v2717
        %v2950 = vpack.c.bf16 %v2722, %v2718
        %v2951 = vpack.c.bf16 %v2723, %v2719
        %v2952 = vpack.c.bf16 %v2724, %v2720
        %v2953 = vpack.c.bf16 %v2729, %v2725
        %v2954 = vpack.c.bf16 %v2730, %v2726
        %v2955 = vpack.c.bf16 %v2731, %v2727
        %v2956 = vpack.c.bf16 %v2732, %v2728
        %v2957 = vpack.c.bf16 %v2737, %v2733
        %v2958 = vpack.c.bf16 %v2738, %v2734
        %v2959 = vpack.c.bf16 %v2739, %v2735
        %v2960 = vpack.c.bf16 %v2740, %v2736
        %v2961 = vpack.c.bf16 %v2745, %v2741
        %v2962 = vpack.c.bf16 %v2746, %v2742
        %v2963 = vpack.c.bf16 %v2747, %v2743
        %v2964 = vpack.c.bf16 %v2748, %v2744
        %v2965 = vpack.c.bf16 %v2753, %v2749
        %v2966 = vpack.c.bf16 %v2754, %v2750
        %v2967 = vpack.c.bf16 %v2755, %v2751
        %v2968 = vpack.c.bf16 %v2756, %v2752
        %v2969 = vpack.c.bf16 %v2761, %v2757
        %v2970 = vpack.c.bf16 %v2762, %v2758
        %v2971 = vpack.c.bf16 %v2763, %v2759
        %v2972 = vpack.c.bf16 %v2764, %v2760
        %v2973 = vpack.c.bf16 %v2769, %v2765
        %v2974 = vpack.c.bf16 %v2770, %v2766
        %v2975 = vpack.c.bf16 %v2771, %v2767
        %v2976 = vpack.c.bf16 %v2772, %v2768
        %v2977 = vpack.c.bf16 %v2777, %v2773
        %v2978 = vpack.c.bf16 %v2778, %v2774
        %v2979 = vpack.c.bf16 %v2779, %v2775
        %v2980 = vpack.c.bf16 %v2780, %v2776
        %v2981 = vpack.c.bf16 %v2785, %v2781
        %v2982 = vpack.c.bf16 %v2786, %v2782
        %v2983 = vpack.c.bf16 %v2787, %v2783
        %v2984 = vpack.c.bf16 %v2788, %v2784
        %v2985 = vpack.c.bf16 %v2793, %v2789
        %v2986 = vpack.c.bf16 %v2794, %v2790
        %v2987 = vpack.c.bf16 %v2795, %v2791
        %v2988 = vpack.c.bf16 %v2796, %v2792
        %v2989 = vpack.c.bf16 %v2801, %v2797
        %v2990 = vpack.c.bf16 %v2802, %v2798
        %v2991 = vpack.c.bf16 %v2803, %v2799
        %v2992 = vpack.c.bf16 %v2804, %v2800
        %v2993 = vpack.c.bf16 %v2809, %v2805
        %v2994 = vpack.c.bf16 %v2810, %v2806
        %v2995 = vpack.c.bf16 %v2811, %v2807
        %v2996 = vpack.c.bf16 %v2812, %v2808
        %v2997 = vpack.c.bf16 %v2817, %v2813
        %v2998 = vpack.c.bf16 %v2818, %v2814
        %v2999 = vpack.c.bf16 %v2819, %v2815
        %v3000 = vpack.c.bf16 %v2820, %v2816
        %v3001 = vpack.c.bf16 %v2825, %v2821
        %v3002 = vpack.c.bf16 %v2826, %v2822
        %v3003 = vpack.c.bf16 %v2827, %v2823
        %v3004 = vpack.c.bf16 %v2828, %v2824
        %v3005 = vpack.c.bf16 %v2833, %v2829
        %v3006 = vpack.c.bf16 %v2834, %v2830
        %v3007 = vpack.c.bf16 %v2835, %v2831
        %v3008 = vpack.c.bf16 %v2836, %v2832
        %v3009 = vpack.c.bf16 %v2841, %v2837
        %v3010 = vpack.c.bf16 %v2842, %v2838
        %v3011 = vpack.c.bf16 %v2843, %v2839
        %v3012 = vpack.c.bf16 %v2844, %v2840
        %v3013 = vpack.c.bf16 %v2849, %v2845
        %v3014 = vpack.c.bf16 %v2850, %v2846
        %v3015 = vpack.c.bf16 %v2851, %v2847
        %v3016 = vpack.c.bf16 %v2852, %v2848
        %v3017 = vpack.c.bf16 %v2857, %v2853
        %v3018 = vpack.c.bf16 %v2858, %v2854
        %v3019 = vpack.c.bf16 %v2859, %v2855
        %v3020 = vpack.c.bf16 %v2860, %v2856
        %v3021 = vpack.c.bf16 %v2865, %v2861
        %v3022 = vpack.c.bf16 %v2866, %v2862
        %v3023 = vpack.c.bf16 %v2867, %v2863
        %v3024 = vpack.c.bf16 %v2868, %v2864
        %v3025 = vpack.c.bf16 %v2873, %v2869
        %v3026 = vpack.c.bf16 %v2874, %v2870
        %v3027 = vpack.c.bf16 %v2875, %v2871
        %v3028 = vpack.c.bf16 %v2876, %v2872
        %v3029 = vpack.c.bf16 %v2881, %v2877
        %v3030 = vpack.c.bf16 %v2882, %v2878
        %v3031 = vpack.c.bf16 %v2883, %v2879
        %v3032 = vpack.c.bf16 %v2884, %v2880
        %v3033 = vpack.c.bf16 %v2889, %v2885
        %v3034 = vpack.c.bf16 %v2890, %v2886
        %v3035 = vpack.c.bf16 %v2891, %v2887
        %v3036 = vpack.c.bf16 %v2892, %v2888
        %v3037 = vpack.c.bf16 %v2897, %v2893
        %v3038 = vpack.c.bf16 %v2898, %v2894
        %v3039 = vpack.c.bf16 %v2899, %v2895
        %v3040 = vpack.c.bf16 %v2900, %v2896
        %v3041 = vpack.c.bf16 %v2905, %v2901
        %v3042 = vpack.c.bf16 %v2906, %v2902
        %v3043 = vpack.c.bf16 %v2907, %v2903
        %v3044 = vpack.c.bf16 %v2908, %v2904
        %v3045 = vpack.c.bf16 %v2913, %v2909
        %v3046 = vpack.c.bf16 %v2914, %v2910
        %v3047 = vpack.c.bf16 %v2915, %v2911
        %v3048 = vpack.c.bf16 %v2916, %v2912
        %v3049 = vpack.c.bf16 %v2921, %v2917
        %v3050 = vpack.c.bf16 %v2922, %v2918
        %v3051 = vpack.c.bf16 %v2923, %v2919
        %v3052 = vpack.c.bf16 %v2924, %v2920
        %s3053 = smul.u32 %s23, 512
        %s3054 = ssub.s32 1280, %s3053
        %v3055 = vlaneseq
        %v3056 = vshrl.u32 %v3055, 7
        %v3057 = vadd.s32 %v3056, 8
        %v3058 = vadd.s32 %v3056, 16
        %v3059 = vadd.s32 %v3056, 24
        %v3060 = vadd.s32 %v3056, 32
        %v3061 = vadd.s32 %v3056, 40
        %v3062 = vadd.s32 %v3056, 48
        %v3063 = vadd.s32 %v3056, 56
        %v3064 = vadd.s32 %v3056, 64
        %v3065 = vadd.s32 %v3056, 72
        %v3066 = vadd.s32 %v3056, 80
        %v3067 = vadd.s32 %v3056, 88
        %v3068 = vadd.s32 %v3056, 96
        %v3069 = vadd.s32 %v3056, 104
        %v3070 = vadd.s32 %v3056, 112
        %v3071 = vadd.s32 %v3056, 120
        %v3072 = vadd.s32 %v3056, 128
        %v3073 = vadd.s32 %v3056, 136
        %v3074 = vadd.s32 %v3056, 144
        %v3075 = vadd.s32 %v3056, 152
        %v3076 = vadd.s32 %v3056, 160
        %v3077 = vadd.s32 %v3056, 168
        %v3078 = vadd.s32 %v3056, 176
        %v3079 = vadd.s32 %v3056, 184
        %v3080 = vadd.s32 %v3056, 192
        %v3081 = vadd.s32 %v3056, 200
        %v3082 = vadd.s32 %v3056, 208
        %v3083 = vadd.s32 %v3056, 216
        %v3084 = vadd.s32 %v3056, 224
        %v3085 = vadd.s32 %v3056, 232
        %v3086 = vadd.s32 %v3056, 240
        %v3087 = vadd.s32 %v3056, 248
        %v3088 = vadd.s32 %v3056, 256
        %v3089 = vadd.s32 %v3056, 264
        %v3090 = vadd.s32 %v3056, 272
        %v3091 = vadd.s32 %v3056, 280
        %v3092 = vadd.s32 %v3056, 288
        %v3093 = vadd.s32 %v3056, 296
        %v3094 = vadd.s32 %v3056, 304
        %v3095 = vadd.s32 %v3056, 312
        %v3096 = vadd.s32 %v3056, 320
        %v3097 = vadd.s32 %v3056, 328
        %v3098 = vadd.s32 %v3056, 336
        %v3099 = vadd.s32 %v3056, 344
        %v3100 = vadd.s32 %v3056, 352
        %v3101 = vadd.s32 %v3056, 360
        %v3102 = vadd.s32 %v3056, 368
        %v3103 = vadd.s32 %v3056, 376
        %v3104 = vadd.s32 %v3056, 384
        %v3105 = vadd.s32 %v3056, 392
        %v3106 = vadd.s32 %v3056, 400
        %v3107 = vadd.s32 %v3056, 408
        %v3108 = vadd.s32 %v3056, 416
        %v3109 = vadd.s32 %v3056, 424
        %v3110 = vadd.s32 %v3056, 432
        %v3111 = vadd.s32 %v3056, 440
        %v3112 = vadd.s32 %v3056, 448
        %v3113 = vadd.s32 %v3056, 456
        %v3114 = vadd.s32 %v3056, 464
        %v3115 = vadd.s32 %v3056, 472
        %v3116 = vadd.s32 %v3056, 480
        %v3117 = vadd.s32 %v3056, 488
        %v3118 = vadd.s32 %v3056, 496
        %v3119 = vadd.s32 %v3056, 504
        %v3120 = vstv %s3054
        %vm3121 = vcmp.lt.s32.totalorder %v3056, %v3120
        %vm3122 = vcmp.lt.s32.totalorder %v3057, %v3120
        %vm3123 = vcmp.lt.s32.totalorder %v3058, %v3120
        %vm3124 = vcmp.lt.s32.totalorder %v3059, %v3120
        %vm3125 = vcmp.lt.s32.totalorder %v3060, %v3120
        %vm3126 = vcmp.lt.s32.totalorder %v3061, %v3120
        %vm3127 = vcmp.lt.s32.totalorder %v3062, %v3120
        %vm3128 = vcmp.lt.s32.totalorder %v3063, %v3120
        %vm3129 = vcmp.lt.s32.totalorder %v3064, %v3120
        %vm3130 = vcmp.lt.s32.totalorder %v3065, %v3120
        %vm3131 = vcmp.lt.s32.totalorder %v3066, %v3120
        %vm3132 = vcmp.lt.s32.totalorder %v3067, %v3120
        %vm3133 = vcmp.lt.s32.totalorder %v3068, %v3120
        %vm3134 = vcmp.lt.s32.totalorder %v3069, %v3120
        %vm3135 = vcmp.lt.s32.totalorder %v3070, %v3120
        %vm3136 = vcmp.lt.s32.totalorder %v3071, %v3120
        %vm3137 = vcmp.lt.s32.totalorder %v3072, %v3120
        %vm3138 = vcmp.lt.s32.totalorder %v3073, %v3120
        %vm3139 = vcmp.lt.s32.totalorder %v3074, %v3120
        %vm3140 = vcmp.lt.s32.totalorder %v3075, %v3120
        %vm3141 = vcmp.lt.s32.totalorder %v3076, %v3120
        %vm3142 = vcmp.lt.s32.totalorder %v3077, %v3120
        %vm3143 = vcmp.lt.s32.totalorder %v3078, %v3120
        %vm3144 = vcmp.lt.s32.totalorder %v3079, %v3120
        %vm3145 = vcmp.lt.s32.totalorder %v3080, %v3120
        %vm3146 = vcmp.lt.s32.totalorder %v3081, %v3120
        %vm3147 = vcmp.lt.s32.totalorder %v3082, %v3120
        %vm3148 = vcmp.lt.s32.totalorder %v3083, %v3120
        %vm3149 = vcmp.lt.s32.totalorder %v3084, %v3120
        %vm3150 = vcmp.lt.s32.totalorder %v3085, %v3120
        %vm3151 = vcmp.lt.s32.totalorder %v3086, %v3120
        %vm3152 = vcmp.lt.s32.totalorder %v3087, %v3120
        %vm3153 = vcmp.lt.s32.totalorder %v3088, %v3120
        %vm3154 = vcmp.lt.s32.totalorder %v3089, %v3120
        %vm3155 = vcmp.lt.s32.totalorder %v3090, %v3120
        %vm3156 = vcmp.lt.s32.totalorder %v3091, %v3120
        %vm3157 = vcmp.lt.s32.totalorder %v3092, %v3120
        %vm3158 = vcmp.lt.s32.totalorder %v3093, %v3120
        %vm3159 = vcmp.lt.s32.totalorder %v3094, %v3120
        %vm3160 = vcmp.lt.s32.totalorder %v3095, %v3120
        %vm3161 = vcmp.lt.s32.totalorder %v3096, %v3120
        %vm3162 = vcmp.lt.s32.totalorder %v3097, %v3120
        %vm3163 = vcmp.lt.s32.totalorder %v3098, %v3120
        %vm3164 = vcmp.lt.s32.totalorder %v3099, %v3120
        %vm3165 = vcmp.lt.s32.totalorder %v3100, %v3120
        %vm3166 = vcmp.lt.s32.totalorder %v3101, %v3120
        %vm3167 = vcmp.lt.s32.totalorder %v3102, %v3120
        %vm3168 = vcmp.lt.s32.totalorder %v3103, %v3120
        %vm3169 = vcmp.lt.s32.totalorder %v3104, %v3120
        %vm3170 = vcmp.lt.s32.totalorder %v3105, %v3120
        %vm3171 = vcmp.lt.s32.totalorder %v3106, %v3120
        %vm3172 = vcmp.lt.s32.totalorder %v3107, %v3120
        %vm3173 = vcmp.lt.s32.totalorder %v3108, %v3120
        %vm3174 = vcmp.lt.s32.totalorder %v3109, %v3120
        %vm3175 = vcmp.lt.s32.totalorder %v3110, %v3120
        %vm3176 = vcmp.lt.s32.totalorder %v3111, %v3120
        %vm3177 = vcmp.lt.s32.totalorder %v3112, %v3120
        %vm3178 = vcmp.lt.s32.totalorder %v3113, %v3120
        %vm3179 = vcmp.lt.s32.totalorder %v3114, %v3120
        %vm3180 = vcmp.lt.s32.totalorder %v3115, %v3120
        %vm3181 = vcmp.lt.s32.totalorder %v3116, %v3120
        %vm3182 = vcmp.lt.s32.totalorder %v3117, %v3120
        %vm3183 = vcmp.lt.s32.totalorder %v3118, %v3120
        %vm3184 = vcmp.lt.s32.totalorder %v3119, %v3120
        %vm3185 = vmpackc.low %vm3121, %vm3121
        %vm3186 = vmpackc.low %vm3122, %vm3122
        %vm3187 = vmpackc.low %vm3123, %vm3123
        %vm3188 = vmpackc.low %vm3124, %vm3124
        %vm3189 = vmpackc.low %vm3125, %vm3125
        %vm3190 = vmpackc.low %vm3126, %vm3126
        %vm3191 = vmpackc.low %vm3127, %vm3127
        %vm3192 = vmpackc.low %vm3128, %vm3128
        %vm3193 = vmpackc.low %vm3129, %vm3129
        %vm3194 = vmpackc.low %vm3130, %vm3130
        %vm3195 = vmpackc.low %vm3131, %vm3131
        %vm3196 = vmpackc.low %vm3132, %vm3132
        %vm3197 = vmpackc.low %vm3133, %vm3133
        %vm3198 = vmpackc.low %vm3134, %vm3134
        %vm3199 = vmpackc.low %vm3135, %vm3135
        %vm3200 = vmpackc.low %vm3136, %vm3136
        %vm3201 = vmpackc.low %vm3137, %vm3137
        %vm3202 = vmpackc.low %vm3138, %vm3138
        %vm3203 = vmpackc.low %vm3139, %vm3139
        %vm3204 = vmpackc.low %vm3140, %vm3140
        %vm3205 = vmpackc.low %vm3141, %vm3141
        %vm3206 = vmpackc.low %vm3142, %vm3142
        %vm3207 = vmpackc.low %vm3143, %vm3143
        %vm3208 = vmpackc.low %vm3144, %vm3144
        %vm3209 = vmpackc.low %vm3145, %vm3145
        %vm3210 = vmpackc.low %vm3146, %vm3146
        %vm3211 = vmpackc.low %vm3147, %vm3147
        %vm3212 = vmpackc.low %vm3148, %vm3148
        %vm3213 = vmpackc.low %vm3149, %vm3149
        %vm3214 = vmpackc.low %vm3150, %vm3150
        %vm3215 = vmpackc.low %vm3151, %vm3151
        %vm3216 = vmpackc.low %vm3152, %vm3152
        %vm3217 = vmpackc.low %vm3153, %vm3153
        %vm3218 = vmpackc.low %vm3154, %vm3154
        %vm3219 = vmpackc.low %vm3155, %vm3155
        %vm3220 = vmpackc.low %vm3156, %vm3156
        %vm3221 = vmpackc.low %vm3157, %vm3157
        %vm3222 = vmpackc.low %vm3158, %vm3158
        %vm3223 = vmpackc.low %vm3159, %vm3159
        %vm3224 = vmpackc.low %vm3160, %vm3160
        %vm3225 = vmpackc.low %vm3161, %vm3161
        %vm3226 = vmpackc.low %vm3162, %vm3162
        %vm3227 = vmpackc.low %vm3163, %vm3163
        %vm3228 = vmpackc.low %vm3164, %vm3164
        %vm3229 = vmpackc.low %vm3165, %vm3165
        %vm3230 = vmpackc.low %vm3166, %vm3166
        %vm3231 = vmpackc.low %vm3167, %vm3167
        %vm3232 = vmpackc.low %vm3168, %vm3168
        %vm3233 = vmpackc.low %vm3169, %vm3169
        %vm3234 = vmpackc.low %vm3170, %vm3170
        %vm3235 = vmpackc.low %vm3171, %vm3171
        %vm3236 = vmpackc.low %vm3172, %vm3172
        %vm3237 = vmpackc.low %vm3173, %vm3173
        %vm3238 = vmpackc.low %vm3174, %vm3174
        %vm3239 = vmpackc.low %vm3175, %vm3175
        %vm3240 = vmpackc.low %vm3176, %vm3176
        %vm3241 = vmpackc.low %vm3177, %vm3177
        %vm3242 = vmpackc.low %vm3178, %vm3178
        %vm3243 = vmpackc.low %vm3179, %vm3179
        %vm3244 = vmpackc.low %vm3180, %vm3180
        %vm3245 = vmpackc.low %vm3181, %vm3181
        %vm3246 = vmpackc.low %vm3182, %vm3182
        %vm3247 = vmpackc.low %vm3183, %vm3183
        %vm3248 = vmpackc.low %vm3184, %vm3184
        %v3249 = vsel %vm3185, 65537, 0
        %v3250 = vsel %vm3186, 65537, 0
        %v3251 = vsel %vm3187, 65537, 0
        %v3252 = vsel %vm3188, 65537, 0
        %v3253 = vsel %vm3189, 65537, 0
        %v3254 = vsel %vm3190, 65537, 0
        %v3255 = vsel %vm3191, 65537, 0
        %v3256 = vsel %vm3192, 65537, 0
        %v3257 = vsel %vm3193, 65537, 0
        %v3258 = vsel %vm3194, 65537, 0
        %v3259 = vsel %vm3195, 65537, 0
        %v3260 = vsel %vm3196, 65537, 0
        %v3261 = vsel %vm3197, 65537, 0
        %v3262 = vsel %vm3198, 65537, 0
        %v3263 = vsel %vm3199, 65537, 0
        %v3264 = vsel %vm3200, 65537, 0
        %v3265 = vsel %vm3201, 65537, 0
        %v3266 = vsel %vm3202, 65537, 0
        %v3267 = vsel %vm3203, 65537, 0
        %v3268 = vsel %vm3204, 65537, 0
        %v3269 = vsel %vm3205, 65537, 0
        %v3270 = vsel %vm3206, 65537, 0
        %v3271 = vsel %vm3207, 65537, 0
        %v3272 = vsel %vm3208, 65537, 0
        %v3273 = vsel %vm3209, 65537, 0
        %v3274 = vsel %vm3210, 65537, 0
        %v3275 = vsel %vm3211, 65537, 0
        %v3276 = vsel %vm3212, 65537, 0
        %v3277 = vsel %vm3213, 65537, 0
        %v3278 = vsel %vm3214, 65537, 0
        %v3279 = vsel %vm3215, 65537, 0
        %v3280 = vsel %vm3216, 65537, 0
        %v3281 = vsel %vm3217, 65537, 0
        %v3282 = vsel %vm3218, 65537, 0
        %v3283 = vsel %vm3219, 65537, 0
        %v3284 = vsel %vm3220, 65537, 0
        %v3285 = vsel %vm3221, 65537, 0
        %v3286 = vsel %vm3222, 65537, 0
        %v3287 = vsel %vm3223, 65537, 0
        %v3288 = vsel %vm3224, 65537, 0
        %v3289 = vsel %vm3225, 65537, 0
        %v3290 = vsel %vm3226, 65537, 0
        %v3291 = vsel %vm3227, 65537, 0
        %v3292 = vsel %vm3228, 65537, 0
        %v3293 = vsel %vm3229, 65537, 0
        %v3294 = vsel %vm3230, 65537, 0
        %v3295 = vsel %vm3231, 65537, 0
        %v3296 = vsel %vm3232, 65537, 0
        %v3297 = vsel %vm3233, 65537, 0
        %v3298 = vsel %vm3234, 65537, 0
        %v3299 = vsel %vm3235, 65537, 0
        %v3300 = vsel %vm3236, 65537, 0
        %v3301 = vsel %vm3237, 65537, 0
        %v3302 = vsel %vm3238, 65537, 0
        %v3303 = vsel %vm3239, 65537, 0
        %v3304 = vsel %vm3240, 65537, 0
        %v3305 = vsel %vm3241, 65537, 0
        %v3306 = vsel %vm3242, 65537, 0
        %v3307 = vsel %vm3243, 65537, 0
        %v3308 = vsel %vm3244, 65537, 0
        %v3309 = vsel %vm3245, 65537, 0
        %v3310 = vsel %vm3246, 65537, 0
        %v3311 = vsel %vm3247, 65537, 0
        %v3312 = vsel %vm3248, 65537, 0
        %v3313 = vunpack.c.l.b16 %v3249
        %v3314 = vunpack.c.l.b16 %v3250
        %v3315 = vunpack.c.l.b16 %v3251
        %v3316 = vunpack.c.l.b16 %v3252
        %v3317 = vunpack.c.l.b16 %v3253
        %v3318 = vunpack.c.l.b16 %v3254
        %v3319 = vunpack.c.l.b16 %v3255
        %v3320 = vunpack.c.l.b16 %v3256
        %v3321 = vunpack.c.l.b16 %v3257
        %v3322 = vunpack.c.l.b16 %v3258
        %v3323 = vunpack.c.l.b16 %v3259
        %v3324 = vunpack.c.l.b16 %v3260
        %v3325 = vunpack.c.l.b16 %v3261
        %v3326 = vunpack.c.l.b16 %v3262
        %v3327 = vunpack.c.l.b16 %v3263
        %v3328 = vunpack.c.l.b16 %v3264
        %v3329 = vunpack.c.l.b16 %v3265
        %v3330 = vunpack.c.l.b16 %v3266
        %v3331 = vunpack.c.l.b16 %v3267
        %v3332 = vunpack.c.l.b16 %v3268
        %v3333 = vunpack.c.l.b16 %v3269
        %v3334 = vunpack.c.l.b16 %v3270
        %v3335 = vunpack.c.l.b16 %v3271
        %v3336 = vunpack.c.l.b16 %v3272
        %v3337 = vunpack.c.l.b16 %v3273
        %v3338 = vunpack.c.l.b16 %v3274
        %v3339 = vunpack.c.l.b16 %v3275
        %v3340 = vunpack.c.l.b16 %v3276
        %v3341 = vunpack.c.l.b16 %v3277
        %v3342 = vunpack.c.l.b16 %v3278
        %v3343 = vunpack.c.l.b16 %v3279
        %v3344 = vunpack.c.l.b16 %v3280
        %v3345 = vunpack.c.l.b16 %v3281
        %v3346 = vunpack.c.l.b16 %v3282
        %v3347 = vunpack.c.l.b16 %v3283
        %v3348 = vunpack.c.l.b16 %v3284
        %v3349 = vunpack.c.l.b16 %v3285
        %v3350 = vunpack.c.l.b16 %v3286
        %v3351 = vunpack.c.l.b16 %v3287
        %v3352 = vunpack.c.l.b16 %v3288
        %v3353 = vunpack.c.l.b16 %v3289
        %v3354 = vunpack.c.l.b16 %v3290
        %v3355 = vunpack.c.l.b16 %v3291
        %v3356 = vunpack.c.l.b16 %v3292
        %v3357 = vunpack.c.l.b16 %v3293
        %v3358 = vunpack.c.l.b16 %v3294
        %v3359 = vunpack.c.l.b16 %v3295
        %v3360 = vunpack.c.l.b16 %v3296
        %v3361 = vunpack.c.l.b16 %v3297
        %v3362 = vunpack.c.l.b16 %v3298
        %v3363 = vunpack.c.l.b16 %v3299
        %v3364 = vunpack.c.l.b16 %v3300
        %v3365 = vunpack.c.l.b16 %v3301
        %v3366 = vunpack.c.l.b16 %v3302
        %v3367 = vunpack.c.l.b16 %v3303
        %v3368 = vunpack.c.l.b16 %v3304
        %v3369 = vunpack.c.l.b16 %v3305
        %v3370 = vunpack.c.l.b16 %v3306
        %v3371 = vunpack.c.l.b16 %v3307
        %v3372 = vunpack.c.l.b16 %v3308
        %v3373 = vunpack.c.l.b16 %v3309
        %v3374 = vunpack.c.l.b16 %v3310
        %v3375 = vunpack.c.l.b16 %v3311
        %v3376 = vunpack.c.l.b16 %v3312
        %v3377 = vpack.c.b16 %v3314, %v3313
        %v3378 = vpack.c.b16 %v3316, %v3315
        %v3379 = vpack.c.b16 %v3318, %v3317
        %v3380 = vpack.c.b16 %v3320, %v3319
        %v3381 = vpack.c.b16 %v3322, %v3321
        %v3382 = vpack.c.b16 %v3324, %v3323
        %v3383 = vpack.c.b16 %v3326, %v3325
        %v3384 = vpack.c.b16 %v3328, %v3327
        %v3385 = vpack.c.b16 %v3330, %v3329
        %v3386 = vpack.c.b16 %v3332, %v3331
        %v3387 = vpack.c.b16 %v3334, %v3333
        %v3388 = vpack.c.b16 %v3336, %v3335
        %v3389 = vpack.c.b16 %v3338, %v3337
        %v3390 = vpack.c.b16 %v3340, %v3339
        %v3391 = vpack.c.b16 %v3342, %v3341
        %v3392 = vpack.c.b16 %v3344, %v3343
        %v3393 = vpack.c.b16 %v3346, %v3345
        %v3394 = vpack.c.b16 %v3348, %v3347
        %v3395 = vpack.c.b16 %v3350, %v3349
        %v3396 = vpack.c.b16 %v3352, %v3351
        %v3397 = vpack.c.b16 %v3354, %v3353
        %v3398 = vpack.c.b16 %v3356, %v3355
        %v3399 = vpack.c.b16 %v3358, %v3357
        %v3400 = vpack.c.b16 %v3360, %v3359
        %v3401 = vpack.c.b16 %v3362, %v3361
        %v3402 = vpack.c.b16 %v3364, %v3363
        %v3403 = vpack.c.b16 %v3366, %v3365
        %v3404 = vpack.c.b16 %v3368, %v3367
        %v3405 = vpack.c.b16 %v3370, %v3369
        %v3406 = vpack.c.b16 %v3372, %v3371
        %v3407 = vpack.c.b16 %v3374, %v3373
        %v3408 = vpack.c.b16 %v3376, %v3375
        %vm3409 = vcmp.ne.s16.totalorder %v3377, 0
        %vm3410 = vcmp.ne.s16.totalorder %v3378, 0
        %vm3411 = vcmp.ne.s16.totalorder %v3379, 0
        %vm3412 = vcmp.ne.s16.totalorder %v3380, 0
        %vm3413 = vcmp.ne.s16.totalorder %v3381, 0
        %vm3414 = vcmp.ne.s16.totalorder %v3382, 0
        %vm3415 = vcmp.ne.s16.totalorder %v3383, 0
        %vm3416 = vcmp.ne.s16.totalorder %v3384, 0
        %vm3417 = vcmp.ne.s16.totalorder %v3385, 0
        %vm3418 = vcmp.ne.s16.totalorder %v3386, 0
        %vm3419 = vcmp.ne.s16.totalorder %v3387, 0
        %vm3420 = vcmp.ne.s16.totalorder %v3388, 0
        %vm3421 = vcmp.ne.s16.totalorder %v3389, 0
        %vm3422 = vcmp.ne.s16.totalorder %v3390, 0
        %vm3423 = vcmp.ne.s16.totalorder %v3391, 0
        %vm3424 = vcmp.ne.s16.totalorder %v3392, 0
        %vm3425 = vcmp.ne.s16.totalorder %v3393, 0
        %vm3426 = vcmp.ne.s16.totalorder %v3394, 0
        %vm3427 = vcmp.ne.s16.totalorder %v3395, 0
        %vm3428 = vcmp.ne.s16.totalorder %v3396, 0
        %vm3429 = vcmp.ne.s16.totalorder %v3397, 0
        %vm3430 = vcmp.ne.s16.totalorder %v3398, 0
        %vm3431 = vcmp.ne.s16.totalorder %v3399, 0
        %vm3432 = vcmp.ne.s16.totalorder %v3400, 0
        %vm3433 = vcmp.ne.s16.totalorder %v3401, 0
        %vm3434 = vcmp.ne.s16.totalorder %v3402, 0
        %vm3435 = vcmp.ne.s16.totalorder %v3403, 0
        %vm3436 = vcmp.ne.s16.totalorder %v3404, 0
        %vm3437 = vcmp.ne.s16.totalorder %v3405, 0
        %vm3438 = vcmp.ne.s16.totalorder %v3406, 0
        %vm3439 = vcmp.ne.s16.totalorder %v3407, 0
        %vm3440 = vcmp.ne.s16.totalorder %v3408, 0
        %v3441 = vsel %vm3409, %v2925, 0
        %v3442 = vsel %vm3409, %v2926, 0
        %v3443 = vsel %vm3409, %v2927, 0
        %v3444 = vsel %vm3409, %v2928, 0
        %v3445 = vsel %vm3410, %v2929, 0
        %v3446 = vsel %vm3410, %v2930, 0
        %v3447 = vsel %vm3410, %v2931, 0
        %v3448 = vsel %vm3410, %v2932, 0
        %v3449 = vsel %vm3411, %v2933, 0
        %v3450 = vsel %vm3411, %v2934, 0
        %v3451 = vsel %vm3411, %v2935, 0
        %v3452 = vsel %vm3411, %v2936, 0
        %v3453 = vsel %vm3412, %v2937, 0
        %v3454 = vsel %vm3412, %v2938, 0
        %v3455 = vsel %vm3412, %v2939, 0
        %v3456 = vsel %vm3412, %v2940, 0
        %v3457 = vsel %vm3413, %v2941, 0
        %v3458 = vsel %vm3413, %v2942, 0
        %v3459 = vsel %vm3413, %v2943, 0
        %v3460 = vsel %vm3413, %v2944, 0
        %v3461 = vsel %vm3414, %v2945, 0
        %v3462 = vsel %vm3414, %v2946, 0
        %v3463 = vsel %vm3414, %v2947, 0
        %v3464 = vsel %vm3414, %v2948, 0
        %v3465 = vsel %vm3415, %v2949, 0
        %v3466 = vsel %vm3415, %v2950, 0
        %v3467 = vsel %vm3415, %v2951, 0
        %v3468 = vsel %vm3415, %v2952, 0
        %v3469 = vsel %vm3416, %v2953, 0
        %v3470 = vsel %vm3416, %v2954, 0
        %v3471 = vsel %vm3416, %v2955, 0
        %v3472 = vsel %vm3416, %v2956, 0
        %v3473 = vsel %vm3417, %v2957, 0
        %v3474 = vsel %vm3417, %v2958, 0
        %v3475 = vsel %vm3417, %v2959, 0
        %v3476 = vsel %vm3417, %v2960, 0
        %v3477 = vsel %vm3418, %v2961, 0
        %v3478 = vsel %vm3418, %v2962, 0
        %v3479 = vsel %vm3418, %v2963, 0
        %v3480 = vsel %vm3418, %v2964, 0
        %v3481 = vsel %vm3419, %v2965, 0
        %v3482 = vsel %vm3419, %v2966, 0
        %v3483 = vsel %vm3419, %v2967, 0
        %v3484 = vsel %vm3419, %v2968, 0
        %v3485 = vsel %vm3420, %v2969, 0
        %v3486 = vsel %vm3420, %v2970, 0
        %v3487 = vsel %vm3420, %v2971, 0
        %v3488 = vsel %vm3420, %v2972, 0
        %v3489 = vsel %vm3421, %v2973, 0
        %v3490 = vsel %vm3421, %v2974, 0
        %v3491 = vsel %vm3421, %v2975, 0
        %v3492 = vsel %vm3421, %v2976, 0
        %v3493 = vsel %vm3422, %v2977, 0
        %v3494 = vsel %vm3422, %v2978, 0
        %v3495 = vsel %vm3422, %v2979, 0
        %v3496 = vsel %vm3422, %v2980, 0
        %v3497 = vsel %vm3423, %v2981, 0
        %v3498 = vsel %vm3423, %v2982, 0
        %v3499 = vsel %vm3423, %v2983, 0
        %v3500 = vsel %vm3423, %v2984, 0
        %v3501 = vsel %vm3424, %v2985, 0
        %v3502 = vsel %vm3424, %v2986, 0
        %v3503 = vsel %vm3424, %v2987, 0
        %v3504 = vsel %vm3424, %v2988, 0
        %v3505 = vsel %vm3425, %v2989, 0
        %v3506 = vsel %vm3425, %v2990, 0
        %v3507 = vsel %vm3425, %v2991, 0
        %v3508 = vsel %vm3425, %v2992, 0
        %v3509 = vsel %vm3426, %v2993, 0
        %v3510 = vsel %vm3426, %v2994, 0
        %v3511 = vsel %vm3426, %v2995, 0
        %v3512 = vsel %vm3426, %v2996, 0
        %v3513 = vsel %vm3427, %v2997, 0
        %v3514 = vsel %vm3427, %v2998, 0
        %v3515 = vsel %vm3427, %v2999, 0
        %v3516 = vsel %vm3427, %v3000, 0
        %v3517 = vsel %vm3428, %v3001, 0
        %v3518 = vsel %vm3428, %v3002, 0
        %v3519 = vsel %vm3428, %v3003, 0
        %v3520 = vsel %vm3428, %v3004, 0
        %v3521 = vsel %vm3429, %v3005, 0
        %v3522 = vsel %vm3429, %v3006, 0
        %v3523 = vsel %vm3429, %v3007, 0
        %v3524 = vsel %vm3429, %v3008, 0
        %v3525 = vsel %vm3430, %v3009, 0
        %v3526 = vsel %vm3430, %v3010, 0
        %v3527 = vsel %vm3430, %v3011, 0
        %v3528 = vsel %vm3430, %v3012, 0
        %v3529 = vsel %vm3431, %v3013, 0
        %v3530 = vsel %vm3431, %v3014, 0
        %v3531 = vsel %vm3431, %v3015, 0
        %v3532 = vsel %vm3431, %v3016, 0
        %v3533 = vsel %vm3432, %v3017, 0
        %v3534 = vsel %vm3432, %v3018, 0
        %v3535 = vsel %vm3432, %v3019, 0
        %v3536 = vsel %vm3432, %v3020, 0
        %v3537 = vsel %vm3433, %v3021, 0
        %v3538 = vsel %vm3433, %v3022, 0
        %v3539 = vsel %vm3433, %v3023, 0
        %v3540 = vsel %vm3433, %v3024, 0
        %v3541 = vsel %vm3434, %v3025, 0
        %v3542 = vsel %vm3434, %v3026, 0
        %v3543 = vsel %vm3434, %v3027, 0
        %v3544 = vsel %vm3434, %v3028, 0
        %v3545 = vsel %vm3435, %v3029, 0
        %v3546 = vsel %vm3435, %v3030, 0
        %v3547 = vsel %vm3435, %v3031, 0
        %v3548 = vsel %vm3435, %v3032, 0
        %v3549 = vsel %vm3436, %v3033, 0
        %v3550 = vsel %vm3436, %v3034, 0
        %v3551 = vsel %vm3436, %v3035, 0
        %v3552 = vsel %vm3436, %v3036, 0
        %v3553 = vsel %vm3437, %v3037, 0
        %v3554 = vsel %vm3437, %v3038, 0
        %v3555 = vsel %vm3437, %v3039, 0
        %v3556 = vsel %vm3437, %v3040, 0
        %v3557 = vsel %vm3438, %v3041, 0
        %v3558 = vsel %vm3438, %v3042, 0
        %v3559 = vsel %vm3438, %v3043, 0
        %v3560 = vsel %vm3438, %v3044, 0
        %v3561 = vsel %vm3439, %v3045, 0
        %v3562 = vsel %vm3439, %v3046, 0
        %v3563 = vsel %vm3439, %v3047, 0
        %v3564 = vsel %vm3439, %v3048, 0
        %v3565 = vsel %vm3440, %v3049, 0
        %v3566 = vsel %vm3440, %v3050, 0
        %v3567 = vsel %vm3440, %v3051, 0
        %v3568 = vsel %vm3440, %v3052, 0
        %v3569 = vmax.bf16 %v3441, %v3445
        %v3570 = vmax.bf16 %v3569, %v3449
        %v3571 = vmax.bf16 %v3570, %v3453
        %v3572 = vmax.bf16 %v3571, %v3457
        %v3573 = vmax.bf16 %v3572, %v3461
        %v3574 = vmax.bf16 %v3573, %v3465
        %v3575 = vmax.bf16 %v3574, %v3469
        %v3576 = vmax.bf16 %v3575, %v3473
        %v3577 = vmax.bf16 %v3576, %v3477
        %v3578 = vmax.bf16 %v3577, %v3481
        %v3579 = vmax.bf16 %v3578, %v3485
        %v3580 = vmax.bf16 %v3579, %v3489
        %v3581 = vmax.bf16 %v3580, %v3493
        %v3582 = vmax.bf16 %v3581, %v3497
        %v3583 = vmax.bf16 %v3582, %v3501
        %v3584 = vmax.bf16 %v3583, %v3505
        %v3585 = vmax.bf16 %v3584, %v3509
        %v3586 = vmax.bf16 %v3585, %v3513
        %v3587 = vmax.bf16 %v3586, %v3517
        %v3588 = vmax.bf16 %v3587, %v3521
        %v3589 = vmax.bf16 %v3588, %v3525
        %v3590 = vmax.bf16 %v3589, %v3529
        %v3591 = vmax.bf16 %v3590, %v3533
        %v3592 = vmax.bf16 %v3591, %v3537
        %v3593 = vmax.bf16 %v3592, %v3541
        %v3594 = vmax.bf16 %v3593, %v3545
        %v3595 = vmax.bf16 %v3594, %v3549
        %v3596 = vmax.bf16 %v3595, %v3553
        %v3597 = vmax.bf16 %v3596, %v3557
        %v3598 = vmax.bf16 %v3597, %v3561
        %v3599 = vmax.bf16 %v3598, %v3565
        %v3600 = vunpack.i.l.bf16 %v3599
        %v3601 = vunpack.i.h.bf16 %v3599
        %v3602 = vmax.f32 %v3600, %v3601
        %v3603 = vrot.slane %v3602, 4
        %v3604 = vmax.f32 %v3602, %v3603
        %v3605 = vrot.slane %v3604, 2
        %v3606 = vmax.f32 %v3604, %v3605
        %v3607 = vrot.slane %v3606, 1
        %v3608 = vmax.f32 %v3606, %v3607
        %v3609 = vpack.i.bf16 %v3608, %v3608
        %v3610 = vmax.bf16 %v3442, %v3446
        %v3611 = vmax.bf16 %v3610, %v3450
        %v3612 = vmax.bf16 %v3611, %v3454
        %v3613 = vmax.bf16 %v3612, %v3458
        %v3614 = vmax.bf16 %v3613, %v3462
        %v3615 = vmax.bf16 %v3614, %v3466
        %v3616 = vmax.bf16 %v3615, %v3470
        %v3617 = vmax.bf16 %v3616, %v3474
        %v3618 = vmax.bf16 %v3617, %v3478
        %v3619 = vmax.bf16 %v3618, %v3482
        %v3620 = vmax.bf16 %v3619, %v3486
        %v3621 = vmax.bf16 %v3620, %v3490
        %v3622 = vmax.bf16 %v3621, %v3494
        %v3623 = vmax.bf16 %v3622, %v3498
        %v3624 = vmax.bf16 %v3623, %v3502
        %v3625 = vmax.bf16 %v3624, %v3506
        %v3626 = vmax.bf16 %v3625, %v3510
        %v3627 = vmax.bf16 %v3626, %v3514
        %v3628 = vmax.bf16 %v3627, %v3518
        %v3629 = vmax.bf16 %v3628, %v3522
        %v3630 = vmax.bf16 %v3629, %v3526
        %v3631 = vmax.bf16 %v3630, %v3530
        %v3632 = vmax.bf16 %v3631, %v3534
        %v3633 = vmax.bf16 %v3632, %v3538
        %v3634 = vmax.bf16 %v3633, %v3542
        %v3635 = vmax.bf16 %v3634, %v3546
        %v3636 = vmax.bf16 %v3635, %v3550
        %v3637 = vmax.bf16 %v3636, %v3554
        %v3638 = vmax.bf16 %v3637, %v3558
        %v3639 = vmax.bf16 %v3638, %v3562
        %v3640 = vmax.bf16 %v3639, %v3566
        %v3641 = vunpack.i.l.bf16 %v3640
        %v3642 = vunpack.i.h.bf16 %v3640
        %v3643 = vmax.f32 %v3641, %v3642
        %v3644 = vrot.slane %v3643, 4
        %v3645 = vmax.f32 %v3643, %v3644
        %v3646 = vrot.slane %v3645, 2
        %v3647 = vmax.f32 %v3645, %v3646
        %v3648 = vrot.slane %v3647, 1
        %v3649 = vmax.f32 %v3647, %v3648
        %v3650 = vpack.i.bf16 %v3649, %v3649
        %v3651 = vmax.bf16 %v3443, %v3447
        %v3652 = vmax.bf16 %v3651, %v3451
        %v3653 = vmax.bf16 %v3652, %v3455
        %v3654 = vmax.bf16 %v3653, %v3459
        %v3655 = vmax.bf16 %v3654, %v3463
        %v3656 = vmax.bf16 %v3655, %v3467
        %v3657 = vmax.bf16 %v3656, %v3471
        %v3658 = vmax.bf16 %v3657, %v3475
        %v3659 = vmax.bf16 %v3658, %v3479
        %v3660 = vmax.bf16 %v3659, %v3483
        %v3661 = vmax.bf16 %v3660, %v3487
        %v3662 = vmax.bf16 %v3661, %v3491
        %v3663 = vmax.bf16 %v3662, %v3495
        %v3664 = vmax.bf16 %v3663, %v3499
        %v3665 = vmax.bf16 %v3664, %v3503
        %v3666 = vmax.bf16 %v3665, %v3507
        %v3667 = vmax.bf16 %v3666, %v3511
        %v3668 = vmax.bf16 %v3667, %v3515
        %v3669 = vmax.bf16 %v3668, %v3519
        %v3670 = vmax.bf16 %v3669, %v3523
        %v3671 = vmax.bf16 %v3670, %v3527
        %v3672 = vmax.bf16 %v3671, %v3531
        %v3673 = vmax.bf16 %v3672, %v3535
        %v3674 = vmax.bf16 %v3673, %v3539
        %v3675 = vmax.bf16 %v3674, %v3543
        %v3676 = vmax.bf16 %v3675, %v3547
        %v3677 = vmax.bf16 %v3676, %v3551
        %v3678 = vmax.bf16 %v3677, %v3555
        %v3679 = vmax.bf16 %v3678, %v3559
        %v3680 = vmax.bf16 %v3679, %v3563
        %v3681 = vmax.bf16 %v3680, %v3567
        %v3682 = vunpack.i.l.bf16 %v3681
        %v3683 = vunpack.i.h.bf16 %v3681
        %v3684 = vmax.f32 %v3682, %v3683
        %v3685 = vrot.slane %v3684, 4
        %v3686 = vmax.f32 %v3684, %v3685
        %v3687 = vrot.slane %v3686, 2
        %v3688 = vmax.f32 %v3686, %v3687
        %v3689 = vrot.slane %v3688, 1
        %v3690 = vmax.f32 %v3688, %v3689
        %v3691 = vpack.i.bf16 %v3690, %v3690
        %v3692 = vmax.bf16 %v3444, %v3448
        %v3693 = vmax.bf16 %v3692, %v3452
        %v3694 = vmax.bf16 %v3693, %v3456
        %v3695 = vmax.bf16 %v3694, %v3460
        %v3696 = vmax.bf16 %v3695, %v3464
        %v3697 = vmax.bf16 %v3696, %v3468
        %v3698 = vmax.bf16 %v3697, %v3472
        %v3699 = vmax.bf16 %v3698, %v3476
        %v3700 = vmax.bf16 %v3699, %v3480
        %v3701 = vmax.bf16 %v3700, %v3484
        %v3702 = vmax.bf16 %v3701, %v3488
        %v3703 = vmax.bf16 %v3702, %v3492
        %v3704 = vmax.bf16 %v3703, %v3496
        %v3705 = vmax.bf16 %v3704, %v3500
        %v3706 = vmax.bf16 %v3705, %v3504
        %v3707 = vmax.bf16 %v3706, %v3508
        %v3708 = vmax.bf16 %v3707, %v3512
        %v3709 = vmax.bf16 %v3708, %v3516
        %v3710 = vmax.bf16 %v3709, %v3520
        %v3711 = vmax.bf16 %v3710, %v3524
        %v3712 = vmax.bf16 %v3711, %v3528
        %v3713 = vmax.bf16 %v3712, %v3532
        %v3714 = vmax.bf16 %v3713, %v3536
        %v3715 = vmax.bf16 %v3714, %v3540
        %v3716 = vmax.bf16 %v3715, %v3544
        %v3717 = vmax.bf16 %v3716, %v3548
        %v3718 = vmax.bf16 %v3717, %v3552
        %v3719 = vmax.bf16 %v3718, %v3556
        %v3720 = vmax.bf16 %v3719, %v3560
        %v3721 = vmax.bf16 %v3720, %v3564
        %v3722 = vmax.bf16 %v3721, %v3568
        %v3723 = vunpack.i.l.bf16 %v3722
        %v3724 = vunpack.i.h.bf16 %v3722
        %v3725 = vmax.f32 %v3723, %v3724
        %v3726 = vrot.slane %v3725, 4
        %v3727 = vmax.f32 %v3725, %v3726
        %v3728 = vrot.slane %v3727, 2
        %v3729 = vmax.f32 %v3727, %v3728
        %v3730 = vrot.slane %v3729, 1
        %v3731 = vmax.f32 %v3729, %v3730
        %v3732 = vpack.i.bf16 %v3731, %v3731
        %p3733 = scmp.eq.s32.totalorder %s23, 0
        // Predicated region
        $region115: #{stnkd_forward.2} parent=109 // pred_check
          %p3734 = pneg %p3733
        $region116: #{stnkd_forward.2} parent=109 // pred_check_branch
          %3736 = sbr.rel (%p3734) target = $region118
        $region117: #{stnkd_forward.2} parent=109 // pred_region
          %v3741 = vcombine.low %v3609, %v3650
          %v3742 = vcombine.low %v3691, %v3732
          %v3744 = vunpack.c.l.s4 1966171168
          %v3745 = vunpack.c.0.s8 %v3744
          %v3746 = vlaneseq
          %v3747 = vshrl.u32 %v3746, 7
          %v3748 = vsub.s32 %v3745, %v3747
          %v3749 = vrot.slane %v3741, %v3748
          %v3751 = vunpack.c.l.s4 1966171168
          %v3752 = vunpack.c.0.s8 %v3751
          %v3753 = vlaneseq
          %v3754 = vshrl.u32 %v3753, 7
          %v3755 = vsub.s32 %v3752, %v3754
          %v3756 = vrot.slane %v3742, %v3755
          %v3757 = vcombine.low %v3749, %v3756
          %v3759 = vunpack.c.l.s4 1966171168
          %v3760 = vunpack.c.0.s8 %v3759
          %v3761 = vlaneseq
          %v3762 = vshrl.u32 %v3761, 7
          %v3763 = vsub.s32 %v3760, %v3762
          %v3764 = vrot.slane %v3757, %v3763
          %vm3766 = vcmask 1040384
          %vm3767 = vsmask.f32 256
          %vm3768 = vmand %vm3766, %vm3767
          %vm3769 = vcmask 1041409
          %vm3770 = vsmask.f32 1280
          %vm3771 = vmand %vm3769, %vm3770
          %vm3772 = vmor %vm3771, %vm3768
          %vm3773 = vcmask 1042434
          %vm3774 = vsmask.f32 2304
          %vm3775 = vmand %vm3773, %vm3774
          %vm3776 = vmor %vm3775, %vm3772
          %vm3777 = vcmask 1043459
          %vm3778 = vsmask.f32 3328
          %vm3779 = vmand %vm3777, %vm3778
          %vm3780 = vmor %vm3779, %vm3776
          %v3781 = vld [vmem:[%s716] sm:$0xf]
          %v3782 = vsel %vm3780, %v3764, %v3781
          %3783 = vst [vmem:[%s716] sm:$0xf] %v3782
        $region118: #{stnkd_forward.2} parent=109 // pred_fallthru
          _
        %p3784 = scmp.gt.s32.totalorder %s23, 0
        // Predicated region
        $region119: #{stnkd_forward.2} parent=109 // pred_check
          %p3785 = pneg %p3784
        $region120: #{stnkd_forward.2} parent=109 // pred_check_branch
          %3787 = sbr.rel (%p3785) target = $region122
        $region121: #{stnkd_forward.2} parent=109 // pred_region
          %v3788 = vld [vmem:[%s716] sm:$0xf]
          %v3793 = vcombine.low %v3609, %v3650
          %v3794 = vcombine.low %v3691, %v3732
          %v3796 = vunpack.c.l.s4 1966171168
          %v3797 = vunpack.c.0.s8 %v3796
          %v3798 = vlaneseq
          %v3799 = vshrl.u32 %v3798, 7
          %v3800 = vsub.s32 %v3797, %v3799
          %v3801 = vrot.slane %v3793, %v3800
          %v3803 = vunpack.c.l.s4 1966171168
          %v3804 = vunpack.c.0.s8 %v3803
          %v3805 = vlaneseq
          %v3806 = vshrl.u32 %v3805, 7
          %v3807 = vsub.s32 %v3804, %v3806
          %v3808 = vrot.slane %v3794, %v3807
          %v3809 = vcombine.low %v3801, %v3808
          %v3811 = vunpack.c.l.s4 1966171168
          %v3812 = vunpack.c.0.s8 %v3811
          %v3813 = vlaneseq
          %v3814 = vshrl.u32 %v3813, 7
          %v3815 = vsub.s32 %v3812, %v3814
          %v3816 = vrot.slane %v3809, %v3815
          %v3818 = vmax.bf16 %v3788, %v3816
          %vm3819 = vcmask 1040384
          %vm3820 = vsmask.f32 256
          %vm3821 = vmand %vm3819, %vm3820
          %vm3822 = vcmask 1041409
          %vm3823 = vsmask.f32 1280
          %vm3824 = vmand %vm3822, %vm3823
          %vm3825 = vmor %vm3824, %vm3821
          %vm3826 = vcmask 1042434
          %vm3827 = vsmask.f32 2304
          %vm3828 = vmand %vm3826, %vm3827
          %vm3829 = vmor %vm3828, %vm3825
          %vm3830 = vcmask 1043459
          %vm3831 = vsmask.f32 3328
          %vm3832 = vmand %vm3830, %vm3831
          %vm3833 = vmor %vm3832, %vm3829
          %v3834 = vsel %vm3833, %v3818, %v3788
          %3835 = vst [vmem:[%s716] sm:$0xf] %v3834
        $region122: #{stnkd_forward.2} parent=109 // pred_fallthru
          _
        %p3836 = scmp.lt.s32.totalorder %s22, 3
        %s3837 = scalar_select %p3836, %s22, 3
        %s3838 = smul.addr %s3837, 4
        %s3839 = scalar_lea.vmem %s7, %s3838
        // Predicated region
        $region123: #{stnkd_forward.2} parent=109 // pred_check
          %p3840 = pneg %p202
        $region124: #{stnkd_forward.2} parent=109 // pred_check_branch
          %3842 = sbr.rel (%p3840) target = $region126
        $region125: #{stnkd_forward.2} parent=109 // pred_region
          _
        $region126: #{stnkd_forward.2} parent=109 // pred_fallthru
          _
      $region110: #{stnkd_forward.2} parent=5 // pred_fallthru
        _
      %p3843 = scmp.le.s32.totalorder 2, %s13
      // Predicated region
      $region127: #{stnkd_forward.2} parent=5 // pred_check
        %p3844 = pneg %p3843
      $region128: #{stnkd_forward.2} parent=5 // pred_check_branch
        %3846 = sbr.rel (%p3844) target = $region130
      $region129: #{stnkd_forward.2} parent=5 // pred_region
        %s3847 = ssub.s32 %s13, 2
        // Predicated region
        $region131: #{stnkd_forward.2} parent=129 // pred_check
          %p3848 = pneg %p208
        $region132: #{stnkd_forward.2} parent=129 // pred_check_branch
          %3850 = sbr.rel (%p3848) target = $region134
        $region133: #{stnkd_forward.2} parent=129 // pred_region
          %p3851 = scmp.lt.s32.totalorder %s24, 3
          %s3852 = scalar_select %p3851, %s24, 3
          %s3853 = smul.addr %s3852, 4
          %s3854 = scalar_lea.vmem %s7, %s3853
        $region134: #{stnkd_forward.2} parent=129 // pred_fallthru
          _
      $region130: #{stnkd_forward.2} parent=5 // pred_fallthru
        _
    $region6: #{stnkd_forward.2} parent=1 // loop_footer
      %s17 = sadd.s32 1, %s13
    $region7: #{stnkd_forward.2} parent=1 // loop_footer_branch
      %12 = sbr.rel target = $region3
    $region8: #{stnkd_forward.2} parent=1 // loop_exit
      _

</llo_original>
